<compile_context>
chip_gen: v7x
topology: tpu7x:2x2x1
jax: 0.10.0
libtpu: 0.0.40
codegen_flags: <defaults>
</compile_context>

<pallas_src>
import math
from functools import partial

import jax
import jax.numpy as jnp
from jax import lax
from jax.experimental import pallas as pl
from jax.experimental.pallas import tpu as pltpu


# ----------------------------- shared math -----------------------------------

def _layernorm(x, gamma, beta, eps=1e-5):
    mean = jnp.mean(x, axis=-1, keepdims=True)
    var = jnp.mean((x - mean) ** 2, axis=-1, keepdims=True)
    return (x - mean) * lax.rsqrt(var + eps) * gamma + beta


# ----------------------------- fused kernel ----------------------------------

def transformer_kernel(x_ref, pe_ref, bias_ref, wqkv_ref, wout_ref,
                       g1_ref, b1_ref, w1_ref, fb1_ref, w2_ref, fb2_ref,
                       g2_ref, b2_ref, o_ref, act_ref, *, heads):
    l = pl.program_id(1)
    S, D = act_ref.shape
    dh = D // heads

    # ---- PositionalEncoding, once per batch element (layer step 0) ---------
    # TODO(synk): dropout(p=0.1) layers omitted (eval-mode identity).
    @pl.when(l == 0)
    def _():
        act_ref[...] = x_ref[...] * jnp.float32(math.sqrt(D)) + pe_ref[...]

    x = act_ref[...]                                              # (S, D) f32

    # ---- fused QKV projection: one (S,D)@(D,3D) bf16 matmul, f32 acc -------
    qkv = jnp.dot(x.astype(jnp.bfloat16), wqkv_ref[...],
                  preferred_element_type=jnp.float32)             # (S, 3D)
    qh = qkv[:, 0 * D:1 * D].reshape(S, heads, dh)                # (S, H, dh)
    kh = qkv[:, 1 * D:2 * D].reshape(S, heads, dh)
    vh = qkv[:, 2 * D:3 * D].reshape(S, heads, dh)

    # ---- scores (softmax scale pre-folded into Wq), batched over heads -----
    s = lax.dot_general(qh.astype(jnp.bfloat16), kh.astype(jnp.bfloat16),
                        (((2,), (2,)), ((1,), (1,))),
                        preferred_element_type=jnp.float32)       # (H, S, S)
    s = s + bias_ref[...]                                         # causal bias
    m = jnp.max(s, axis=-1, keepdims=True)
    e = jnp.exp(s - m)                                            # f32
    denom = jnp.sum(e, axis=-1, keepdims=True)                    # (H, S, 1)

    # ---- deferred normalization: P@V first, scale by 1/denom (EUP) ---------
    o = lax.dot_general(e.astype(jnp.bfloat16), vh.astype(jnp.bfloat16),
                        (((2,), (0,)), ((0,), (1,))),
                        preferred_element_type=jnp.float32)       # (H, S, dh)
    o = o * pl.reciprocal(denom, approx=True)

    # ---- output projection: (H,S,dh)->(S,D), one full-width matmul ---------
    o_flat = jnp.transpose(o, (1, 0, 2)).reshape(S, D)
    attn = jnp.dot(o_flat.astype(jnp.bfloat16), wout_ref[...],
                   preferred_element_type=jnp.float32)            # (S, D)

    # ---- residual + LayerNorm 1 (f32 VPU math) ------------------------------
    y = _layernorm(attn + x, g1_ref[...], b1_ref[...])

    # ---- feed-forward: Linear -> ReLU -> Linear (dropouts = identity) -------
    h1 = jnp.dot(y.astype(jnp.bfloat16), w1_ref[...],
                 preferred_element_type=jnp.float32) + fb1_ref[...]
    h1 = jnp.maximum(h1, 0.0)
    h2 = jnp.dot(h1.astype(jnp.bfloat16), w2_ref[...],
                 preferred_element_type=jnp.float32) + fb2_ref[...]

    # ---- residual + LayerNorm 2 ---------------------------------------------
    x_new = _layernorm(h2 + y, g2_ref[...], b2_ref[...])
    act_ref[...] = x_new

    @pl.when(l == pl.num_programs(1) - 1)
    def _():
        o_ref[...] = x_new            # single lane-dense (S, 128) store per batch


# ----------------------------- wrappers --------------------------------------

def positional_encoding_table(max_seq_len, dim):
    position = jnp.arange(max_seq_len, dtype=jnp.float32)[:, None]
    div_term = jnp.exp(jnp.arange(0, dim, 2, dtype=jnp.float32)
                       * (-math.log(10000.0) / dim))
    pe = jnp.zeros((max_seq_len, dim), dtype=jnp.float32)
    pe = pe.at[:, 0::2].set(jnp.sin(position * div_term))
    pe = pe.at[:, 1::2].set(jnp.cos(position * div_term))
    return pe


@partial(jax.jit, static_argnames=("heads",))
def transformer_forward(x, pe_table, layer_params, *, heads):
    B, S, D = x.shape
    L = len(layer_params)
    dh = D // heads
    FF = layer_params[0]["w1"].shape[1]
    scale = dh ** (-0.5)

    # ---- layout plumbing (pure JAX, outside the kernel) ---------------------
    # PositionalEncoding indexes pe by *batch* index and broadcasts over the
    # sequence axis (faithful to the original PyTorch module).
    pe_b = pe_table[:B].reshape(B, 1, D)

    # Causal additive bias, shared by every (batch, layer) step.
    causal = jnp.triu(jnp.ones((S, S), dtype=bool), 1)
    bias = jnp.where(causal, -1e30, 0.0).astype(jnp.float32)

    # Fold the softmax scale (exact power of two) into the Q columns of Wqkv;
    # ship every matmul weight as bf16 (halves weight DMA / VMEM residency).
    col_scale = jnp.concatenate([jnp.full((D,), scale, jnp.float32),
                                 jnp.ones((2 * D,), jnp.float32)])
    wqkv = jnp.stack([p["wqkv"] * col_scale for p in layer_params]).astype(jnp.bfloat16)
    wout = jnp.stack([p["wout"] for p in layer_params]).astype(jnp.bfloat16)
    w1 = jnp.stack([p["w1"] for p in layer_params]).astype(jnp.bfloat16)
    w2 = jnp.stack([p["w2"] for p in layer_params]).astype(jnp.bfloat16)
    g1 = jnp.stack([p["g1"] for p in layer_params]).reshape(L, 1, D)
    b1 = jnp.stack([p["b1"] for p in layer_params]).reshape(L, 1, D)
    fb1 = jnp.stack([p["bb1"] for p in layer_params]).reshape(L, 1, FF)
    fb2 = jnp.stack([p["bb2"] for p in layer_params]).reshape(L, 1, D)
    g2 = jnp.stack([p["g2"] for p in layer_params]).reshape(L, 1, D)
    b2 = jnp.stack([p["b2"] for p in layer_params]).reshape(L, 1, D)

    def batch_spec(shape):      # blocks indexed by the batch grid axis
        return pl.BlockSpec((None,) + shape, lambda b, l: (b,) + (0,) * len(shape))

    def layer_spec(shape):      # weights streamed per layer grid step
        return pl.BlockSpec((None,) + shape, lambda b, l: (l,) + (0,) * len(shape))

    grid_spec = pltpu.PrefetchScalarGridSpec(
        num_scalar_prefetch=0,
        grid=(B, L),
        in_specs=[
            batch_spec((S, D)),                          # x
            batch_spec((1, D)),                          # pe (by batch index)
            pl.BlockSpec((S, S), lambda b, l: (0, 0)),   # causal bias
            layer_spec((D, 3 * D)),                      # wqkv (bf16)
            layer_spec((D, D)),                          # wout (bf16)
            layer_spec((1, D)),                          # gamma1
            layer_spec((1, D)),                          # beta1
            layer_spec((D, FF)),                         # w1 (bf16)
            layer_spec((1, FF)),                         # ff bias1
            layer_spec((FF, D)),                         # w2 (bf16)
            layer_spec((1, D)),                          # ff bias2
            layer_spec((1, D)),                          # gamma2
            layer_spec((1, D)),                          # beta2
        ],
        out_specs=pl.BlockSpec((None, S, D), lambda b, l: (b, 0, 0)),
        scratch_shapes=[pltpu.VMEM((S, D), jnp.float32)],   # resident activation
    )

    args = (x, pe_b, bias, wqkv, wout, g1, b1, w1, fb1, w2, fb2, g2, b2)

    flops = B * L * (2 * S * D * 3 * D              # fused QKV projection
                     + 2 * heads * S * S * dh * 2   # Q.K^T and P@V
                     + 2 * S * D * D                # output projection
                     + 2 * S * D * FF * 2)          # feed-forward
    bytes_accessed = sum(a.size * a.dtype.itemsize for a in args) + B * S * D * 4

    out = pl.pallas_call(
        partial(transformer_kernel, heads=heads),
        out_shape=jax.ShapeDtypeStruct((B, S, D), jnp.float32),
        grid_spec=grid_spec,
        compiler_params=pltpu.CompilerParams(
            dimension_semantics=("parallel", "arbitrary")),
        cost_estimate=pl.CostEstimate(flops=flops,
                                      transcendentals=B * L * heads * S * S,
                                      bytes_accessed=bytes_accessed),
    )(*args)
    return out


# ------------------------ deterministic parameter init ----------------------

def init_params(key, dim, ff_dim, num_layers):
    def uni(k, shape, fan_in):
        bound = 1.0 / math.sqrt(fan_in)
        return jax.random.uniform(k, shape, jnp.float32, -bound, bound)

    layers = []
    for i in range(num_layers):
        ks = jax.random.split(jax.random.fold_in(key, i), 4)
        layers.append(dict(
            wqkv=uni(ks[0], (dim, 3 * dim), dim),
            wout=uni(ks[1], (dim, dim), dim),
            g1=jnp.ones((dim,), jnp.float32),
            b1=jnp.zeros((dim,), jnp.float32),
            w1=uni(ks[2], (dim, ff_dim), dim),
            bb1=jnp.zeros((ff_dim,), jnp.float32),
            w2=uni(ks[3], (ff_dim, dim), ff_dim),
            bb2=jnp.zeros((dim,), jnp.float32),
            g2=jnp.ones((dim,), jnp.float32),
            b2=jnp.zeros((dim,), jnp.float32),
        ))
    return layers


# ----------------------------- pure-JAX reference ----------------------------

def reference_forward(x, pe_table, layer_params, heads):
    B, S, D = x.shape
    dh = D // heads
    x = x * math.sqrt(D) + pe_table[:B][:, None, :]
    mask = jnp.triu(jnp.ones((S, S), bool), 1)
    for p in layer_params:
        qkv = x @ p["wqkv"]
        q, k, v = jnp.split(qkv, 3, axis=-1)
        q = q.reshape(B, S, heads, dh).transpose(0, 2, 1, 3)
        k = k.reshape(B, S, heads, dh).transpose(0, 2, 1, 3)
        v = v.reshape(B, S, heads, dh).transpose(0, 2, 1, 3)
        s = jnp.einsum("bhid,bhjd->bhij", q, k) * (dh ** -0.5)
        s = jnp.where(mask, -jnp.inf, s)
        a = jax.nn.softmax(s, axis=-1)
        o = jnp.einsum("bhij,bhjd->bhid", a, v).transpose(0, 2, 1, 3).reshape(B, S, D)
        o = o @ p["wout"]
        y = _layernorm(o + x, p["g1"], p["b1"])
        h = jax.nn.relu(y @ p["w1"] + p["bb1"])
        h = h @ p["w2"] + p["bb2"]
        x = _layernorm(h + y, p["g2"], p["b2"])
    return x


# --------------------------------- main ---------------------------------------

if __name__ == "__main__":
    B, S, D = 2, 8, 128        # batch, sequence, embedding dim
    HEADS = 8                  # dim_head = int(D / heads) = 16
    NUM_LAYERS = 2
    MAX_SEQ_LEN = 16
    FF_DIM = 1024              # TransformerBlock default dim_linear_block

    key = jax.random.PRNGKey(0)
    kx, kp = jax.random.split(key)
    # Modest-magnitude inputs: the module scales x by sqrt(D)=11.3, so unit-std
    # inputs saturate the softmax and the f32-vs-bf16 comparison degenerates to
    # argmax tie-breaking; 0.1-std keeps the comparison meaningful.
    x = 0.1 * jax.random.normal(kx, (B, S, D), dtype=jnp.float32)

    pe = positional_encoding_table(MAX_SEQ_LEN, D)
    layer_params = init_params(kp, D, FF_DIM, NUM_LAYERS)

    out = jax.block_until_ready(transformer_forward(x, pe, layer_params, heads=HEADS))
    ref = jax.block_until_ready(reference_forward(x, pe, layer_params, HEADS))

    assert out.shape == (B, S, D) and out.dtype == jnp.float32
    max_diff = float(jnp.max(jnp.abs(out - ref)))
    assert jnp.allclose(out, ref, atol=5e-2, rtol=5e-2), f"max abs diff {max_diff}"

    print("KERNEL_OK")
</pallas_src>

<mosaic_0001>
module attributes {stable_mosaic.version = 11 : i64} {
  func.func @transformer_kernel(%arg0: i32, %arg1: i32, %arg2: memref<1x8x128xf32, #tpu.memory_space<vmem>>, %arg3: memref<1x1x128xf32, #tpu.memory_space<vmem>>, %arg4: memref<8x8xf32, #tpu.memory_space<vmem>>, %arg5: memref<1x128x384xbf16, #tpu.memory_space<vmem>>, %arg6: memref<1x128x128xbf16, #tpu.memory_space<vmem>>, %arg7: memref<1x1x128xf32, #tpu.memory_space<vmem>>, %arg8: memref<1x1x128xf32, #tpu.memory_space<vmem>>, %arg9: memref<1x128x1024xbf16, #tpu.memory_space<vmem>>, %arg10: memref<1x1x1024xf32, #tpu.memory_space<vmem>>, %arg11: memref<1x1024x128xbf16, #tpu.memory_space<vmem>>, %arg12: memref<1x1x128xf32, #tpu.memory_space<vmem>>, %arg13: memref<1x1x128xf32, #tpu.memory_space<vmem>>, %arg14: memref<1x1x128xf32, #tpu.memory_space<vmem>>, %arg15: memref<1x8x128xf32, #tpu.memory_space<vmem>>, %arg16: memref<8x128xf32, #tpu.memory_space<vmem>>) attributes {dimension_semantics = [#tpu.dimension_semantics<parallel>, #tpu.dimension_semantics<arbitrary>], iteration_bounds = array<i64: 2, 2>, scalar_prefetch = 0 : i64, scratch_operands = 1 : i64, tpu.core_type = #tpu.core_type<tc>, window_params = [{transform_indices = @transform_0, window_bounds = array<i64: 1, 8, 128>}, {transform_indices = @transform_1, window_bounds = array<i64: 1, 1, 128>}, {pipeline_mode = #tpu.pipeline_mode<synchronous>, transform_indices = @transform_2, window_bounds = array<i64: 8, 8>}, {transform_indices = @transform_3, window_bounds = array<i64: 1, 128, 384>}, {transform_indices = @transform_4, window_bounds = array<i64: 1, 128, 128>}, {transform_indices = @transform_5, window_bounds = array<i64: 1, 1, 128>}, {transform_indices = @transform_6, window_bounds = array<i64: 1, 1, 128>}, {transform_indices = @transform_7, window_bounds = array<i64: 1, 128, 1024>}, {transform_indices = @transform_8, window_bounds = array<i64: 1, 1, 1024>}, {transform_indices = @transform_9, window_bounds = array<i64: 1, 1024, 128>}, {transform_indices = @transform_10, window_bounds = array<i64: 1, 1, 128>}, {transform_indices = @transform_11, window_bounds = array<i64: 1, 1, 128>}, {transform_indices = @transform_12, window_bounds = array<i64: 1, 1, 128>}, {transform_indices = @transform_13, window_bounds = array<i64: 1, 8, 128>}]} {
    %c0_i32 = arith.constant 0 : i32
    %0 = arith.cmpi eq, %arg1, %c0_i32 : i32
    %1 = arith.extui %0 : i1 to i32
    %c0_i32_0 = arith.constant 0 : i32
    %2 = arith.cmpi ne, %1, %c0_i32_0 : i32
    scf.if %2 {
      %c0_55 = arith.constant 0 : index
      %c0_56 = arith.constant 0 : index
      %c0_57 = arith.constant 0 : index
      %116 = vector.load %arg2[%c0_55, %c0_56, %c0_57] : memref<1x8x128xf32, #tpu.memory_space<vmem>>, vector<1x8x128xf32>
      %117 = vector.shape_cast %116 : vector<1x8x128xf32> to vector<8x128xf32>
      %cst_58 = arith.constant 11.3137083 : f32
      %118 = vector.broadcast %cst_58 : f32 to vector<8x128xf32>
      %119 = arith.mulf %117, %118 : vector<8x128xf32>
      %c0_59 = arith.constant 0 : index
      %c0_60 = arith.constant 0 : index
      %c0_61 = arith.constant 0 : index
      %120 = vector.load %arg3[%c0_59, %c0_60, %c0_61] : memref<1x1x128xf32, #tpu.memory_space<vmem>>, vector<1x1x128xf32>
      %121 = vector.shape_cast %120 : vector<1x1x128xf32> to vector<1x128xf32>
      %122 = vector.broadcast %121 : vector<1x128xf32> to vector<8x128xf32>
      %123 = arith.addf %119, %122 : vector<8x128xf32>
      %c0_62 = arith.constant 0 : index
      %c0_63 = arith.constant 0 : index
      %124 = vector.load %arg16[%c0_62, %c0_63] : memref<8x128xf32, #tpu.memory_space<vmem>>, vector<8x128xf32>
      tpu.vector_store %arg16[%c0_62, %c0_63], %123 {strides = array<i32>} : memref<8x128xf32, #tpu.memory_space<vmem>>, vector<8x128xf32>,
    } else {
    }
    %c0 = arith.constant 0 : index
    %c0_1 = arith.constant 0 : index
    %3 = vector.load %arg16[%c0, %c0_1] : memref<8x128xf32, #tpu.memory_space<vmem>>, vector<8x128xf32>
    %4 = arith.truncf %3 : vector<8x128xf32> to vector<8x128xbf16>
    %c0_2 = arith.constant 0 : index
    %c0_3 = arith.constant 0 : index
    %c0_4 = arith.constant 0 : index
    %5 = vector.load %arg5[%c0_2, %c0_3, %c0_4] : memref<1x128x384xbf16, #tpu.memory_space<vmem>>, vector<1x128x384xbf16>
    %6 = vector.shape_cast %5 : vector<1x128x384xbf16> to vector<128x384xbf16>
    %cst = arith.constant dense<0.000000e+00> : vector<8x384xf32>
    %7 = tpu.matmul %4, %6, %cst {dimension_numbers = #tpu.dot_dimension_numbers<[1], [0], [0], [1], [0, 0, 1, 1], [], []>} : vector<8x128xbf16>, vector<128x384xbf16>, vector<8x384xf32> -> vector<8x384xf32>
    %8 = vector.extract_strided_slice %7 {offsets = [0, 0], sizes = [8, 128], strides = [1, 1]} : vector<8x384xf32> to vector<8x128xf32>
    %9 = vector.shape_cast %8 : vector<8x128xf32> to vector<8x8x16xf32>
    %10 = vector.extract_strided_slice %7 {offsets = [0, 128], sizes = [8, 128], strides = [1, 1]} : vector<8x384xf32> to vector<8x128xf32>
    %11 = vector.shape_cast %10 : vector<8x128xf32> to vector<8x8x16xf32>
    %12 = vector.extract_strided_slice %7 {offsets = [0, 256], sizes = [8, 128], strides = [1, 1]} : vector<8x384xf32> to vector<8x128xf32>
    %13 = vector.shape_cast %12 : vector<8x128xf32> to vector<8x8x16xf32>
    %14 = arith.truncf %9 : vector<8x8x16xf32> to vector<8x8x16xbf16>
    %15 = arith.truncf %11 : vector<8x8x16xf32> to vector<8x8x16xbf16>
    %cst_5 = arith.constant dense<0.000000e+00> : vector<8x8x8xf32>
    %16 = tpu.matmul %14, %15, %cst_5 {dimension_numbers = #tpu.dot_dimension_numbers<[2], [2], [0], [0], [0, 1, 0, 0, 1, 0], [1], [1]>} : vector<8x8x16xbf16>, vector<8x8x16xbf16>, vector<8x8x8xf32> -> vector<8x8x8xf32>
    %c0_6 = arith.constant 0 : index
    %c0_7 = arith.constant 0 : index
    %17 = vector.load %arg4[%c0_6, %c0_7] : memref<8x8xf32, #tpu.memory_space<vmem>>, vector<8x8xf32>
    %18 = vector.shape_cast %17 : vector<8x8xf32> to vector<1x8x8xf32>
    %19 = vector.broadcast %18 : vector<1x8x8xf32> to vector<8x8x8xf32>
    %20 = arith.addf %16, %19 : vector<8x8x8xf32>
    %cst_8 = arith.constant dense<0xFF800000> : vector<8x8xf32>
    %21 = vector.multi_reduction <maximumf>, %20, %cst_8 [2] : vector<8x8x8xf32> to vector<8x8xf32>
    %22 = vector.shape_cast %21 : vector<8x8xf32> to vector<8x8x1xf32>
    %23 = vector.broadcast %22 : vector<8x8x1xf32> to vector<8x8x8xf32>
    %24 = arith.subf %20, %23 : vector<8x8x8xf32>
    %25 = math.exp %24 : vector<8x8x8xf32>
    %cst_9 = arith.constant dense<0.000000e+00> : vector<8x8xf32>
    %26 = vector.multi_reduction <add>, %25, %cst_9 [2] : vector<8x8x8xf32> to vector<8x8xf32>
    %27 = vector.shape_cast %26 : vector<8x8xf32> to vector<8x8x1xf32>
    %28 = arith.truncf %25 : vector<8x8x8xf32> to vector<8x8x8xbf16>
    %29 = arith.truncf %13 : vector<8x8x16xf32> to vector<8x8x16xbf16>
    %cst_10 = arith.constant dense<0.000000e+00> : vector<8x8x16xf32>
    %30 = tpu.matmul %28, %29, %cst_10 {dimension_numbers = #tpu.dot_dimension_numbers<[2], [0], [1], [2], [0, 0, 0, 1, 1, 2], [0], [1]>} : vector<8x8x8xbf16>, vector<8x8x16xbf16>, vector<8x8x16xf32> -> vector<8x8x16xf32>
    %31 = tpu.reciprocal %27 {approx = true} : vector<8x8x1xf32> -> vector<8x8x1xf32>
    %32 = vector.broadcast %31 : vector<8x8x1xf32> to vector<8x8x16xf32>
    %33 = arith.mulf %30, %32 : vector<8x8x16xf32>
    %34 = tpu.transpose %33, [1, 0, 2] : vector<8x8x16xf32> -> vector<8x8x16xf32>
    %35 = vector.shape_cast %34 : vector<8x8x16xf32> to vector<8x128xf32>
    %36 = arith.truncf %35 : vector<8x128xf32> to vector<8x128xbf16>
    %c0_11 = arith.constant 0 : index
    %c0_12 = arith.constant 0 : index
    %c0_13 = arith.constant 0 : index
    %37 = vector.load %arg6[%c0_11, %c0_12, %c0_13] : memref<1x128x128xbf16, #tpu.memory_space<vmem>>, vector<1x128x128xbf16>
    %38 = vector.shape_cast %37 : vector<1x128x128xbf16> to vector<128x128xbf16>
    %cst_14 = arith.constant dense<0.000000e+00> : vector<8x128xf32>
    %39 = tpu.matmul %36, %38, %cst_14 {dimension_numbers = #tpu.dot_dimension_numbers<[1], [0], [0], [1], [0, 0, 1, 1], [], []>} : vector<8x128xbf16>, vector<128x128xbf16>, vector<8x128xf32> -> vector<8x128xf32>
    %40 = arith.addf %39, %3 : vector<8x128xf32>
    %c0_15 = arith.constant 0 : index
    %c0_16 = arith.constant 0 : index
    %c0_17 = arith.constant 0 : index
    %41 = vector.load %arg7[%c0_15, %c0_16, %c0_17] : memref<1x1x128xf32, #tpu.memory_space<vmem>>, vector<1x1x128xf32>
    %42 = vector.shape_cast %41 : vector<1x1x128xf32> to vector<1x128xf32>
    %c0_18 = arith.constant 0 : index
    %c0_19 = arith.constant 0 : index
    %c0_20 = arith.constant 0 : index
    %43 = vector.load %arg8[%c0_18, %c0_19, %c0_20] : memref<1x1x128xf32, #tpu.memory_space<vmem>>, vector<1x1x128xf32>
    %44 = vector.shape_cast %43 : vector<1x1x128xf32> to vector<1x128xf32>
    %cst_21 = arith.constant dense<0.000000e+00> : vector<8xf32>
    %45 = vector.multi_reduction <add>, %40, %cst_21 [1] : vector<8x128xf32> to vector<8xf32>
    %46 = vector.shape_cast %45 : vector<8xf32> to vector<8x1xf32>
    %cst_22 = arith.constant 1.280000e+02 : f32
    %47 = vector.broadcast %cst_22 : f32 to vector<8x1xf32>
    %48 = arith.divf %46, %47 : vector<8x1xf32>
    %49 = vector.broadcast %48 : vector<8x1xf32> to vector<8x128xf32>
    %50 = arith.subf %40, %49 : vector<8x128xf32>
    %51 = arith.mulf %50, %50 : vector<8x128xf32>
    %cst_23 = arith.constant dense<0.000000e+00> : vector<8xf32>
    %52 = vector.multi_reduction <add>, %51, %cst_23 [1] : vector<8x128xf32> to vector<8xf32>
    %53 = vector.shape_cast %52 : vector<8xf32> to vector<8x1xf32>
    %cst_24 = arith.constant 1.280000e+02 : f32
    %54 = vector.broadcast %cst_24 : f32 to vector<8x1xf32>
    %55 = arith.divf %53, %54 : vector<8x1xf32>
    %56 = vector.broadcast %48 : vector<8x1xf32> to vector<8x128xf32>
    %57 = arith.subf %40, %56 : vector<8x128xf32>
    %cst_25 = arith.constant 9.99999974E-6 : f32
    %58 = vector.broadcast %cst_25 : f32 to vector<8x1xf32>
    %59 = arith.addf %55, %58 : vector<8x1xf32>
    %60 = math.rsqrt %59 : vector<8x1xf32>
    %61 = vector.broadcast %60 : vector<8x1xf32> to vector<8x128xf32>
    %62 = arith.mulf %57, %61 : vector<8x128xf32>
    %63 = vector.broadcast %42 : vector<1x128xf32> to vector<8x128xf32>
    %64 = arith.mulf %62, %63 : vector<8x128xf32>
    %65 = vector.broadcast %44 : vector<1x128xf32> to vector<8x128xf32>
    %66 = arith.addf %64, %65 : vector<8x128xf32>
    %67 = arith.truncf %66 : vector<8x128xf32> to vector<8x128xbf16>
    %c0_26 = arith.constant 0 : index
    %c0_27 = arith.constant 0 : index
    %c0_28 = arith.constant 0 : index
    %68 = vector.load %arg9[%c0_26, %c0_27, %c0_28] : memref<1x128x1024xbf16, #tpu.memory_space<vmem>>, vector<1x128x1024xbf16>
    %69 = vector.shape_cast %68 : vector<1x128x1024xbf16> to vector<128x1024xbf16>
    %cst_29 = arith.constant dense<0.000000e+00> : vector<8x1024xf32>
    %70 = tpu.matmul %67, %69, %cst_29 {dimension_numbers = #tpu.dot_dimension_numbers<[1], [0], [0], [1], [0, 0, 1, 1], [], []>} : vector<8x128xbf16>, vector<128x1024xbf16>, vector<8x1024xf32> -> vector<8x1024xf32>
    %c0_30 = arith.constant 0 : index
    %c0_31 = arith.constant 0 : index
    %c0_32 = arith.constant 0 : index
    %71 = vector.load %arg10[%c0_30, %c0_31, %c0_32] : memref<1x1x1024xf32, #tpu.memory_space<vmem>>, vector<1x1x1024xf32>
    %72 = vector.shape_cast %71 : vector<1x1x1024xf32> to vector<1x1024xf32>
    %73 = vector.broadcast %72 : vector<1x1024xf32> to vector<8x1024xf32>
    %74 = arith.addf %70, %73 : vector<8x1024xf32>
    %cst_33 = arith.constant 0.000000e+00 : f32
    %75 = vector.broadcast %cst_33 : f32 to vector<8x1024xf32>
    %76 = arith.maximumf %74, %75 : vector<8x1024xf32>
    %77 = arith.truncf %76 : vector<8x1024xf32> to vector<8x1024xbf16>
    %c0_34 = arith.constant 0 : index
    %c0_35 = arith.constant 0 : index
    %c0_36 = arith.constant 0 : index
    %78 = vector.load %arg11[%c0_34, %c0_35, %c0_36] : memref<1x1024x128xbf16, #tpu.memory_space<vmem>>, vector<1x1024x128xbf16>
    %79 = vector.shape_cast %78 : vector<1x1024x128xbf16> to vector<1024x128xbf16>
    %cst_37 = arith.constant dense<0.000000e+00> : vector<8x128xf32>
    %80 = tpu.matmul %77, %79, %cst_37 {dimension_numbers = #tpu.dot_dimension_numbers<[1], [0], [0], [1], [0, 0, 1, 1], [], []>} : vector<8x1024xbf16>, vector<1024x128xbf16>, vector<8x128xf32> -> vector<8x128xf32>
    %c0_38 = arith.constant 0 : index
    %c0_39 = arith.constant 0 : index
    %c0_40 = arith.constant 0 : index
    %81 = vector.load %arg12[%c0_38, %c0_39, %c0_40] : memref<1x1x128xf32, #tpu.memory_space<vmem>>, vector<1x1x128xf32>
    %82 = vector.shape_cast %81 : vector<1x1x128xf32> to vector<1x128xf32>
    %83 = vector.broadcast %82 : vector<1x128xf32> to vector<8x128xf32>
    %84 = arith.addf %80, %83 : vector<8x128xf32>
    %85 = arith.addf %84, %66 : vector<8x128xf32>
    %c0_41 = arith.constant 0 : index
    %c0_42 = arith.constant 0 : index
    %c0_43 = arith.constant 0 : index
    %86 = vector.load %arg13[%c0_41, %c0_42, %c0_43] : memref<1x1x128xf32, #tpu.memory_space<vmem>>, vector<1x1x128xf32>
    %87 = vector.shape_cast %86 : vector<1x1x128xf32> to vector<1x128xf32>
    %c0_44 = arith.constant 0 : index
    %c0_45 = arith.constant 0 : index
    %c0_46 = arith.constant 0 : index
    %88 = vector.load %arg14[%c0_44, %c0_45, %c0_46] : memref<1x1x128xf32, #tpu.memory_space<vmem>>, vector<1x1x128xf32>
    %89 = vector.shape_cast %88 : vector<1x1x128xf32> to vector<1x128xf32>
    %cst_47 = arith.constant dense<0.000000e+00> : vector<8xf32>
    %90 = vector.multi_reduction <add>, %85, %cst_47 [1] : vector<8x128xf32> to vector<8xf32>
    %91 = vector.shape_cast %90 : vector<8xf32> to vector<8x1xf32>
    %cst_48 = arith.constant 1.280000e+02 : f32
    %92 = vector.broadcast %cst_48 : f32 to vector<8x1xf32>
    %93 = arith.divf %91, %92 : vector<8x1xf32>
    %94 = vector.broadcast %93 : vector<8x1xf32> to vector<8x128xf32>
    %95 = arith.subf %85, %94 : vector<8x128xf32>
    %96 = arith.mulf %95, %95 : vector<8x128xf32>
    %cst_49 = arith.constant dense<0.000000e+00> : vector<8xf32>
    %97 = vector.multi_reduction <add>, %96, %cst_49 [1] : vector<8x128xf32> to vector<8xf32>
    %98 = vector.shape_cast %97 : vector<8xf32> to vector<8x1xf32>
    %cst_50 = arith.constant 1.280000e+02 : f32
    %99 = vector.broadcast %cst_50 : f32 to vector<8x1xf32>
    %100 = arith.divf %98, %99 : vector<8x1xf32>
    %101 = vector.broadcast %93 : vector<8x1xf32> to vector<8x128xf32>
    %102 = arith.subf %85, %101 : vector<8x128xf32>
    %cst_51 = arith.constant 9.99999974E-6 : f32
    %103 = vector.broadcast %cst_51 : f32 to vector<8x1xf32>
    %104 = arith.addf %100, %103 : vector<8x1xf32>
    %105 = math.rsqrt %104 : vector<8x1xf32>
    %106 = vector.broadcast %105 : vector<8x1xf32> to vector<8x128xf32>
    %107 = arith.mulf %102, %106 : vector<8x128xf32>
    %108 = vector.broadcast %87 : vector<1x128xf32> to vector<8x128xf32>
    %109 = arith.mulf %107, %108 : vector<8x128xf32>
    %110 = vector.broadcast %89 : vector<1x128xf32> to vector<8x128xf32>
    %111 = arith.addf %109, %110 : vector<8x128xf32>
    %c0_52 = arith.constant 0 : index
    %c0_53 = arith.constant 0 : index
    %112 = vector.load %arg16[%c0_52, %c0_53] : memref<8x128xf32, #tpu.memory_space<vmem>>, vector<8x128xf32>
    tpu.vector_store %arg16[%c0_52, %c0_53], %111 {strides = array<i32>} : memref<8x128xf32, #tpu.memory_space<vmem>>, vector<8x128xf32>,
    %c1_i32 = arith.constant 1 : i32
    %113 = arith.cmpi eq, %arg1, %c1_i32 : i32
    %114 = arith.extui %113 : i1 to i32
    %c0_i32_54 = arith.constant 0 : i32
    %115 = arith.cmpi ne, %114, %c0_i32_54 : i32
    scf.if %115 {
      %c0_55 = arith.constant 0 : index
      %c0_56 = arith.constant 0 : index
      %c0_57 = arith.constant 0 : index
      %116 = vector.load %arg15[%c0_55, %c0_56, %c0_57] : memref<1x8x128xf32, #tpu.memory_space<vmem>>, vector<1x8x128xf32>
      %117 = vector.shape_cast %116 : vector<1x8x128xf32> to vector<8x128xf32>
      %118 = vector.shape_cast %111 : vector<8x128xf32> to vector<1x8x128xf32>
      tpu.vector_store %arg15[%c0_55, %c0_56, %c0_57], %118 {strides = array<i32>} : memref<1x8x128xf32, #tpu.memory_space<vmem>>, vector<1x8x128xf32>,
    } else {
    }
    return
  }
  func.func @transform_0(%arg0: i32, %arg1: i32) -> (i32, i32, i32) {
    %c0_i32 = arith.constant 0 : i32
    %c0_i32_0 = arith.constant 0 : i32
    %c0_i32_1 = arith.constant 0 : i32
    return %arg0, %c0_i32, %c0_i32_0 : i32, i32, i32
  }
  func.func @transform_1(%arg0: i32, %arg1: i32) -> (i32, i32, i32) {
    %c0_i32 = arith.constant 0 : i32
    %c0_i32_0 = arith.constant 0 : i32
    %c0_i32_1 = arith.constant 0 : i32
    return %arg0, %c0_i32, %c0_i32_0 : i32, i32, i32
  }
  func.func @transform_2(%arg0: i32, %arg1: i32) -> (i32, i32) {
    %c0_i32 = arith.constant 0 : i32
    %c0_i32_0 = arith.constant 0 : i32
    %c0_i32_1 = arith.constant 0 : i32
    return %c0_i32, %c0_i32_0 : i32, i32
  }
  func.func @transform_3(%arg0: i32, %arg1: i32) -> (i32, i32, i32) {
    %c0_i32 = arith.constant 0 : i32
    %c0_i32_0 = arith.constant 0 : i32
    %c0_i32_1 = arith.constant 0 : i32
    return %arg1, %c0_i32, %c0_i32_0 : i32, i32, i32
  }
  func.func @transform_4(%arg0: i32, %arg1: i32) -> (i32, i32, i32) {
    %c0_i32 = arith.constant 0 : i32
    %c0_i32_0 = arith.constant 0 : i32
    %c0_i32_1 = arith.constant 0 : i32
    return %arg1, %c0_i32, %c0_i32_0 : i32, i32, i32
  }
  func.func @transform_5(%arg0: i32, %arg1: i32) -> (i32, i32, i32) {
    %c0_i32 = arith.constant 0 : i32
    %c0_i32_0 = arith.constant 0 : i32
    %c0_i32_1 = arith.constant 0 : i32
    return %arg1, %c0_i32, %c0_i32_0 : i32, i32, i32
  }
  func.func @transform_6(%arg0: i32, %arg1: i32) -> (i32, i32, i32) {
    %c0_i32 = arith.constant 0 : i32
    %c0_i32_0 = arith.constant 0 : i32
    %c0_i32_1 = arith.constant 0 : i32
    return %arg1, %c0_i32, %c0_i32_0 : i32, i32, i32
  }
  func.func @transform_7(%arg0: i32, %arg1: i32) -> (i32, i32, i32) {
    %c0_i32 = arith.constant 0 : i32
    %c0_i32_0 = arith.constant 0 : i32
    %c0_i32_1 = arith.constant 0 : i32
    return %arg1, %c0_i32, %c0_i32_0 : i32, i32, i32
  }
  func.func @transform_8(%arg0: i32, %arg1: i32) -> (i32, i32, i32) {
    %c0_i32 = arith.constant 0 : i32
    %c0_i32_0 = arith.constant 0 : i32
    %c0_i32_1 = arith.constant 0 : i32
    return %arg1, %c0_i32, %c0_i32_0 : i32, i32, i32
  }
  func.func @transform_9(%arg0: i32, %arg1: i32) -> (i32, i32, i32) {
    %c0_i32 = arith.constant 0 : i32
    %c0_i32_0 = arith.constant 0 : i32
    %c0_i32_1 = arith.constant 0 : i32
    return %arg1, %c0_i32, %c0_i32_0 : i32, i32, i32
  }
  func.func @transform_10(%arg0: i32, %arg1: i32) -> (i32, i32, i32) {
    %c0_i32 = arith.constant 0 : i32
    %c0_i32_0 = arith.constant 0 : i32
    %c0_i32_1 = arith.constant 0 : i32
    return %arg1, %c0_i32, %c0_i32_0 : i32, i32, i32
  }
  func.func @transform_11(%arg0: i32, %arg1: i32) -> (i32, i32, i32) {
    %c0_i32 = arith.constant 0 : i32
    %c0_i32_0 = arith.constant 0 : i32
    %c0_i32_1 = arith.constant 0 : i32
    return %arg1, %c0_i32, %c0_i32_0 : i32, i32, i32
  }
  func.func @transform_12(%arg0: i32, %arg1: i32) -> (i32, i32, i32) {
    %c0_i32 = arith.constant 0 : i32
    %c0_i32_0 = arith.constant 0 : i32
    %c0_i32_1 = arith.constant 0 : i32
    return %arg1, %c0_i32, %c0_i32_0 : i32, i32, i32
  }
  func.func @transform_13(%arg0: i32, %arg1: i32) -> (i32, i32, i32) {
    %c0_i32 = arith.constant 0 : i32
    %c0_i32_0 = arith.constant 0 : i32
    %c0_i32_1 = arith.constant 0 : i32
    return %arg0, %c0_i32, %c0_i32_0 : i32, i32, i32
  }
}

</mosaic_0001>

<llo_original>
// kernel: transformer_forward.1
$region0: #{transformer_forward.1}
  #allocation0 [shape = 'u32[]', space=smem, size = 0x4, offset = 0x4, fixed_abs, tag = 'smem constant byte address 0x4 - core index']
  #allocation1 [shape = 'u32[144,128]{1,0:T(1,128)}', space=vmem, size = 0x12000, scoped, tag = 'internal scratch']
  #allocation2 [shape = 'f32[8,128]{1,0:T(8,128)}', space=vmem, size = 0x1000, scoped, tag = 'scratch operand']
  %s0 = inlined_call_operand.vmem [shape: f32[2,8,128], index: 0, kind: input, shape index: {}]
  %s1 = inlined_call_operand.vmem [shape: f32[2,1,128], index: 1, kind: input, shape index: {}]
  %s2 = inlined_call_operand.vmem [shape: f32[8,8], index: 2, kind: input, shape index: {}]
  %s3 = inlined_call_operand.vmem [shape: bf16[2,128,384], index: 3, kind: input, shape index: {}]
  %s4 = inlined_call_operand.vmem [shape: bf16[2,128,128], index: 4, kind: input, shape index: {}]
  %s5 = inlined_call_operand.vmem [shape: f32[2,1,128], index: 5, kind: input, shape index: {}]
  %s6 = inlined_call_operand.vmem [shape: f32[2,1,128], index: 6, kind: input, shape index: {}]
  %s7 = inlined_call_operand.vmem [shape: bf16[2,128,1024], index: 7, kind: input, shape index: {}]
  %s8 = inlined_call_operand.vmem [shape: f32[2,1,1024], index: 8, kind: input, shape index: {}]
  %s9 = inlined_call_operand.vmem [shape: bf16[2,1024,128], index: 9, kind: input, shape index: {}]
  %s10 = inlined_call_operand.vmem [shape: f32[2,1,128], index: 10, kind: input, shape index: {}]
  %s11 = inlined_call_operand.vmem [shape: f32[2,1,128], index: 11, kind: input, shape index: {}]
  %s12 = inlined_call_operand.vmem [shape: f32[2,1,128], index: 12, kind: input, shape index: {}]
  %s13 = inlined_call_operand.hbm [shape: f32[2,8,128], index: 13, kind: output, shape index: {}]
  %s14 = sld [smem:[#allocation0]]
  $region93: #{transformer_forward.1} parent=0
    _
  %s16 = ssub.s32 1, %s14
  %s17 = scalar_select 0, %s16, %s14
  $region1: #{transformer_forward.1} parent=0
    #allocation3 [shape = 'u8[8192]{0}', space=vmem, size = 0x2000, scoped, tag = 'output window, operand 0']
    #allocation4 [shape = 's32[2]{0}', space=sflag, size = 0x8, scoped, tag = 'scoped memory for transformer_forward.1']
    %18 = vsyncpa [#allocation4], 0
    %s19 = scalar_lea.sflag [#allocation4], 1
    %20 = vsyncpa %s19, 0
    loop: start=0, step=1, limit=6
    $region2: #{transformer_forward.1} parent=1 // loop_pre_header
      _
    $region3: #{transformer_forward.1} parent=1 // loop_header
      %s22 = sphi 0, %s26
      %p23 = scmp.ge.s32.totalorder %s22, 6
      %s29 = sphi 0, %s41
      %s30 = sphi 0, %s37
      %s31 = sphi 0, %s29
      %s32 = sphi 0, %s30
      %s33 = sphi 0, %s31
      %s34 = sphi 0, %s32
      %s44 = sphi 0, %s46
      %s47 = sphi 0, %s44
      %s48 = sphi 0, %s47
      %s64 = sphi 0, %s48
      %s70 = sphi 0, %s72
      %s73 = sphi 0, %s70
      %s74 = sphi 0, %s73
      %s90 = sphi 0, %s74
      %s94 = sphi 0, %s94
      %s96 = sphi 0, %s94
      %s97 = sphi 0, %s96
      %s111 = sphi 0, %s97
      %s117 = sphi 0, %s119
      %s120 = sphi 0, %s117
      %s121 = sphi 0, %s120
      %s137 = sphi 0, %s121
      %s143 = sphi 0, %s145
      %s146 = sphi 0, %s143
      %s147 = sphi 0, %s146
      %s163 = sphi 0, %s147
      %s169 = sphi 0, %s171
      %s172 = sphi 0, %s169
      %s173 = sphi 0, %s172
      %s189 = sphi 0, %s173
      %s195 = sphi 0, %s197
      %s198 = sphi 0, %s195
      %s199 = sphi 0, %s198
      %s215 = sphi 0, %s199
      %s221 = sphi 0, %s223
      %s224 = sphi 0, %s221
      %s225 = sphi 0, %s224
      %s241 = sphi 0, %s225
      %s247 = sphi 0, %s249
      %s250 = sphi 0, %s247
      %s251 = sphi 0, %s250
      %s267 = sphi 0, %s251
      %s273 = sphi 0, %s275
      %s276 = sphi 0, %s273
      %s277 = sphi 0, %s276
      %s293 = sphi 0, %s277
      %s299 = sphi 0, %s301
      %s302 = sphi 0, %s299
      %s303 = sphi 0, %s302
      %s319 = sphi 0, %s303
      %s325 = sphi 0, %s327
      %s328 = sphi 0, %s325
      %s329 = sphi 0, %s328
      %s345 = sphi 0, %s329
      %s351 = sphi 0, %s353
      %s354 = sphi 0, %s351
      %s355 = sphi 0, %s354
      %s371 = sphi 0, %s355
      %s377 = sphi 0, %s379
      %s380 = sphi 0, %s377
      %s381 = sphi 0, %s380
      %s397 = sphi 0, %s381
    $region4: #{transformer_forward.1} parent=1 // loop_header_branch
      %25 = sbr.rel (%p23) target = $region8
    $region5: #{transformer_forward.1} parent=1 // loop_body
      %s27 = ssub.s32 %s22, 1
      %s28 = ssub.s32 %s22, 2
      %s35 = sadd.s32 1, %s30
      %p36 = scmp.ge.s32.totalorder %s35, 2
      %s37 = scalar_select %p36, 0, %s35
      %s38 = sadd.s32 1, %s29
      %s39 = scalar_select %p36, %s38, %s29
      %p40 = scmp.ge.s32.totalorder %s39, 2
      %s41 = scalar_select %p40, 0, %s39
      %s42 = ssub.s32 %s29, %s41
      %p43 = scmp.eq.s32.totalorder %s42, 0
      %s45 = sadd.s32 %s44, 1
      %s46 = scalar_select %p43, %s44, %s45
      %p49 = pneg %p43
      %p50 = scmp.eq.s32.totalorder %s22, 3
      %p51 = por %p49, %p50
      %p52 = scmp.ne.s32.totalorder %s44, %s47
      %p53 = scmp.eq.s32.totalorder %s22, 0
      %p54 = por %p52, %p53
      %p55 = scmp.ne.s32.totalorder %s44, %s47
      %p56 = scmp.eq.s32.totalorder %s27, 3
      %p57 = por %p55, %p56
      %p58 = scmp.ne.s32.totalorder %s47, %s48
      %p59 = scmp.eq.s32.totalorder %s27, 0
      %p60 = por %p58, %p59
      %p61 = scmp.ne.s32.totalorder %s47, %s48
      %p62 = scmp.eq.s32.totalorder %s28, 3
      %p63 = por %p61, %p62
      %p65 = scmp.ne.s32.totalorder %s48, %s64
      %p66 = scmp.eq.s32.totalorder %s28, 0
      %p67 = por %p65, %p66
      %s68 = ssub.s32 %s29, %s41
      %p69 = scmp.eq.s32.totalorder %s68, 0
      %s71 = sadd.s32 %s70, 1
      %s72 = scalar_select %p69, %s70, %s71
      %p75 = pneg %p69
      %p76 = scmp.eq.s32.totalorder %s22, 3
      %p77 = por %p75, %p76
      %p78 = scmp.ne.s32.totalorder %s70, %s73
      %p79 = scmp.eq.s32.totalorder %s22, 0
      %p80 = por %p78, %p79
      %p81 = scmp.ne.s32.totalorder %s70, %s73
      %p82 = scmp.eq.s32.totalorder %s27, 3
      %p83 = por %p81, %p82
      %p84 = scmp.ne.s32.totalorder %s73, %s74
      %p85 = scmp.eq.s32.totalorder %s27, 0
      %p86 = por %p84, %p85
      %p87 = scmp.ne.s32.totalorder %s73, %s74
      %p88 = scmp.eq.s32.totalorder %s28, 3
      %p89 = por %p87, %p88
      %p91 = scmp.ne.s32.totalorder %s74, %s90
      %p92 = scmp.eq.s32.totalorder %s28, 0
      %p93 = por %p91, %p92
      %s95 = sadd.s32 %s94, 1
      %p98 = scmp.eq.s32.totalorder %s22, 3
      %p99 = scmp.ne.s32.totalorder %s94, %s96
      %p100 = scmp.eq.s32.totalorder %s22, 0
      %p101 = por %p99, %p100
      %p102 = scmp.ne.s32.totalorder %s94, %s96
      %p103 = scmp.eq.s32.totalorder %s27, 3
      %p104 = por %p102, %p103
      %p105 = scmp.ne.s32.totalorder %s96, %s97
      %p106 = scmp.eq.s32.totalorder %s27, 0
      %p107 = por %p105, %p106
      %p108 = scmp.ne.s32.totalorder %s96, %s97
      %p109 = scmp.eq.s32.totalorder %s28, 3
      %p110 = por %p108, %p109
      %p112 = scmp.ne.s32.totalorder %s97, %s111
      %p113 = scmp.eq.s32.totalorder %s28, 0
      %p114 = por %p112, %p113
      %s115 = ssub.s32 %s30, %s37
      %p116 = scmp.eq.s32.totalorder %s115, 0
      %s118 = sadd.s32 %s117, 1
      %s119 = scalar_select %p116, %s117, %s118
      %p122 = pneg %p116
      %p123 = scmp.eq.s32.totalorder %s22, 3
      %p124 = por %p122, %p123
      %p125 = scmp.ne.s32.totalorder %s117, %s120
      %p126 = scmp.eq.s32.totalorder %s22, 0
      %p127 = por %p125, %p126
      %p128 = scmp.ne.s32.totalorder %s117, %s120
      %p129 = scmp.eq.s32.totalorder %s27, 3
      %p130 = por %p128, %p129
      %p131 = scmp.ne.s32.totalorder %s120, %s121
      %p132 = scmp.eq.s32.totalorder %s27, 0
      %p133 = por %p131, %p132
      %p134 = scmp.ne.s32.totalorder %s120, %s121
      %p135 = scmp.eq.s32.totalorder %s28, 3
      %p136 = por %p134, %p135
      %p138 = scmp.ne.s32.totalorder %s121, %s137
      %p139 = scmp.eq.s32.totalorder %s28, 0
      %p140 = por %p138, %p139
      %s141 = ssub.s32 %s30, %s37
      %p142 = scmp.eq.s32.totalorder %s141, 0
      %s144 = sadd.s32 %s143, 1
      %s145 = scalar_select %p142, %s143, %s144
      %p148 = pneg %p142
      %p149 = scmp.eq.s32.totalorder %s22, 3
      %p150 = por %p148, %p149
      %p151 = scmp.ne.s32.totalorder %s143, %s146
      %p152 = scmp.eq.s32.totalorder %s22, 0
      %p153 = por %p151, %p152
      %p154 = scmp.ne.s32.totalorder %s143, %s146
      %p155 = scmp.eq.s32.totalorder %s27, 3
      %p156 = por %p154, %p155
      %p157 = scmp.ne.s32.totalorder %s146, %s147
      %p158 = scmp.eq.s32.totalorder %s27, 0
      %p159 = por %p157, %p158
      %p160 = scmp.ne.s32.totalorder %s146, %s147
      %p161 = scmp.eq.s32.totalorder %s28, 3
      %p162 = por %p160, %p161
      %p164 = scmp.ne.s32.totalorder %s147, %s163
      %p165 = scmp.eq.s32.totalorder %s28, 0
      %p166 = por %p164, %p165
      %s167 = ssub.s32 %s30, %s37
      %p168 = scmp.eq.s32.totalorder %s167, 0
      %s170 = sadd.s32 %s169, 1
      %s171 = scalar_select %p168, %s169, %s170
      %p174 = pneg %p168
      %p175 = scmp.eq.s32.totalorder %s22, 3
      %p176 = por %p174, %p175
      %p177 = scmp.ne.s32.totalorder %s169, %s172
      %p178 = scmp.eq.s32.totalorder %s22, 0
      %p179 = por %p177, %p178
      %p180 = scmp.ne.s32.totalorder %s169, %s172
      %p181 = scmp.eq.s32.totalorder %s27, 3
      %p182 = por %p180, %p181
      %p183 = scmp.ne.s32.totalorder %s172, %s173
      %p184 = scmp.eq.s32.totalorder %s27, 0
      %p185 = por %p183, %p184
      %p186 = scmp.ne.s32.totalorder %s172, %s173
      %p187 = scmp.eq.s32.totalorder %s28, 3
      %p188 = por %p186, %p187
      %p190 = scmp.ne.s32.totalorder %s173, %s189
      %p191 = scmp.eq.s32.totalorder %s28, 0
      %p192 = por %p190, %p191
      %s193 = ssub.s32 %s30, %s37
      %p194 = scmp.eq.s32.totalorder %s193, 0
      %s196 = sadd.s32 %s195, 1
      %s197 = scalar_select %p194, %s195, %s196
      %p200 = pneg %p194
      %p201 = scmp.eq.s32.totalorder %s22, 3
      %p202 = por %p200, %p201
      %p203 = scmp.ne.s32.totalorder %s195, %s198
      %p204 = scmp.eq.s32.totalorder %s22, 0
      %p205 = por %p203, %p204
      %p206 = scmp.ne.s32.totalorder %s195, %s198
      %p207 = scmp.eq.s32.totalorder %s27, 3
      %p208 = por %p206, %p207
      %p209 = scmp.ne.s32.totalorder %s198, %s199
      %p210 = scmp.eq.s32.totalorder %s27, 0
      %p211 = por %p209, %p210
      %p212 = scmp.ne.s32.totalorder %s198, %s199
      %p213 = scmp.eq.s32.totalorder %s28, 3
      %p214 = por %p212, %p213
      %p216 = scmp.ne.s32.totalorder %s199, %s215
      %p217 = scmp.eq.s32.totalorder %s28, 0
      %p218 = por %p216, %p217
      %s219 = ssub.s32 %s30, %s37
      %p220 = scmp.eq.s32.totalorder %s219, 0
      %s222 = sadd.s32 %s221, 1
      %s223 = scalar_select %p220, %s221, %s222
      %p226 = pneg %p220
      %p227 = scmp.eq.s32.totalorder %s22, 3
      %p228 = por %p226, %p227
      %p229 = scmp.ne.s32.totalorder %s221, %s224
      %p230 = scmp.eq.s32.totalorder %s22, 0
      %p231 = por %p229, %p230
      %p232 = scmp.ne.s32.totalorder %s221, %s224
      %p233 = scmp.eq.s32.totalorder %s27, 3
      %p234 = por %p232, %p233
      %p235 = scmp.ne.s32.totalorder %s224, %s225
      %p236 = scmp.eq.s32.totalorder %s27, 0
      %p237 = por %p235, %p236
      %p238 = scmp.ne.s32.totalorder %s224, %s225
      %p239 = scmp.eq.s32.totalorder %s28, 3
      %p240 = por %p238, %p239
      %p242 = scmp.ne.s32.totalorder %s225, %s241
      %p243 = scmp.eq.s32.totalorder %s28, 0
      %p244 = por %p242, %p243
      %s245 = ssub.s32 %s30, %s37
      %p246 = scmp.eq.s32.totalorder %s245, 0
      %s248 = sadd.s32 %s247, 1
      %s249 = scalar_select %p246, %s247, %s248
      %p252 = pneg %p246
      %p253 = scmp.eq.s32.totalorder %s22, 3
      %p254 = por %p252, %p253
      %p255 = scmp.ne.s32.totalorder %s247, %s250
      %p256 = scmp.eq.s32.totalorder %s22, 0
      %p257 = por %p255, %p256
      %p258 = scmp.ne.s32.totalorder %s247, %s250
      %p259 = scmp.eq.s32.totalorder %s27, 3
      %p260 = por %p258, %p259
      %p261 = scmp.ne.s32.totalorder %s250, %s251
      %p262 = scmp.eq.s32.totalorder %s27, 0
      %p263 = por %p261, %p262
      %p264 = scmp.ne.s32.totalorder %s250, %s251
      %p265 = scmp.eq.s32.totalorder %s28, 3
      %p266 = por %p264, %p265
      %p268 = scmp.ne.s32.totalorder %s251, %s267
      %p269 = scmp.eq.s32.totalorder %s28, 0
      %p270 = por %p268, %p269
      %s271 = ssub.s32 %s30, %s37
      %p272 = scmp.eq.s32.totalorder %s271, 0
      %s274 = sadd.s32 %s273, 1
      %s275 = scalar_select %p272, %s273, %s274
      %p278 = pneg %p272
      %p279 = scmp.eq.s32.totalorder %s22, 3
      %p280 = por %p278, %p279
      %p281 = scmp.ne.s32.totalorder %s273, %s276
      %p282 = scmp.eq.s32.totalorder %s22, 0
      %p283 = por %p281, %p282
      %p284 = scmp.ne.s32.totalorder %s273, %s276
      %p285 = scmp.eq.s32.totalorder %s27, 3
      %p286 = por %p284, %p285
      %p287 = scmp.ne.s32.totalorder %s276, %s277
      %p288 = scmp.eq.s32.totalorder %s27, 0
      %p289 = por %p287, %p288
      %p290 = scmp.ne.s32.totalorder %s276, %s277
      %p291 = scmp.eq.s32.totalorder %s28, 3
      %p292 = por %p290, %p291
      %p294 = scmp.ne.s32.totalorder %s277, %s293
      %p295 = scmp.eq.s32.totalorder %s28, 0
      %p296 = por %p294, %p295
      %s297 = ssub.s32 %s30, %s37
      %p298 = scmp.eq.s32.totalorder %s297, 0
      %s300 = sadd.s32 %s299, 1
      %s301 = scalar_select %p298, %s299, %s300
      %p304 = pneg %p298
      %p305 = scmp.eq.s32.totalorder %s22, 3
      %p306 = por %p304, %p305
      %p307 = scmp.ne.s32.totalorder %s299, %s302
      %p308 = scmp.eq.s32.totalorder %s22, 0
      %p309 = por %p307, %p308
      %p310 = scmp.ne.s32.totalorder %s299, %s302
      %p311 = scmp.eq.s32.totalorder %s27, 3
      %p312 = por %p310, %p311
      %p313 = scmp.ne.s32.totalorder %s302, %s303
      %p314 = scmp.eq.s32.totalorder %s27, 0
      %p315 = por %p313, %p314
      %p316 = scmp.ne.s32.totalorder %s302, %s303
      %p317 = scmp.eq.s32.totalorder %s28, 3
      %p318 = por %p316, %p317
      %p320 = scmp.ne.s32.totalorder %s303, %s319
      %p321 = scmp.eq.s32.totalorder %s28, 0
      %p322 = por %p320, %p321
      %s323 = ssub.s32 %s30, %s37
      %p324 = scmp.eq.s32.totalorder %s323, 0
      %s326 = sadd.s32 %s325, 1
      %s327 = scalar_select %p324, %s325, %s326
      %p330 = pneg %p324
      %p331 = scmp.eq.s32.totalorder %s22, 3
      %p332 = por %p330, %p331
      %p333 = scmp.ne.s32.totalorder %s325, %s328
      %p334 = scmp.eq.s32.totalorder %s22, 0
      %p335 = por %p333, %p334
      %p336 = scmp.ne.s32.totalorder %s325, %s328
      %p337 = scmp.eq.s32.totalorder %s27, 3
      %p338 = por %p336, %p337
      %p339 = scmp.ne.s32.totalorder %s328, %s329
      %p340 = scmp.eq.s32.totalorder %s27, 0
      %p341 = por %p339, %p340
      %p342 = scmp.ne.s32.totalorder %s328, %s329
      %p343 = scmp.eq.s32.totalorder %s28, 3
      %p344 = por %p342, %p343
      %p346 = scmp.ne.s32.totalorder %s329, %s345
      %p347 = scmp.eq.s32.totalorder %s28, 0
      %p348 = por %p346, %p347
      %s349 = ssub.s32 %s30, %s37
      %p350 = scmp.eq.s32.totalorder %s349, 0
      %s352 = sadd.s32 %s351, 1
      %s353 = scalar_select %p350, %s351, %s352
      %p356 = pneg %p350
      %p357 = scmp.eq.s32.totalorder %s22, 3
      %p358 = por %p356, %p357
      %p359 = scmp.ne.s32.totalorder %s351, %s354
      %p360 = scmp.eq.s32.totalorder %s22, 0
      %p361 = por %p359, %p360
      %p362 = scmp.ne.s32.totalorder %s351, %s354
      %p363 = scmp.eq.s32.totalorder %s27, 3
      %p364 = por %p362, %p363
      %p365 = scmp.ne.s32.totalorder %s354, %s355
      %p366 = scmp.eq.s32.totalorder %s27, 0
      %p367 = por %p365, %p366
      %p368 = scmp.ne.s32.totalorder %s354, %s355
      %p369 = scmp.eq.s32.totalorder %s28, 3
      %p370 = por %p368, %p369
      %p372 = scmp.ne.s32.totalorder %s355, %s371
      %p373 = scmp.eq.s32.totalorder %s28, 0
      %p374 = por %p372, %p373
      %s375 = ssub.s32 %s29, %s41
      %p376 = scmp.eq.s32.totalorder %s375, 0
      %s378 = sadd.s32 %s377, 1
      %s379 = scalar_select %p376, %s377, %s378
      %p382 = pneg %p376
      %p383 = scmp.eq.s32.totalorder %s22, 3
      %p384 = por %p382, %p383
      %p385 = scmp.ne.s32.totalorder %s377, %s380
      %p386 = scmp.eq.s32.totalorder %s22, 0
      %p387 = por %p385, %p386
      %p388 = scmp.ne.s32.totalorder %s377, %s380
      %p389 = scmp.eq.s32.totalorder %s27, 3
      %p390 = por %p388, %p389
      %p391 = scmp.ne.s32.totalorder %s380, %s381
      %p392 = scmp.eq.s32.totalorder %s27, 0
      %p393 = por %p391, %p392
      %p394 = scmp.ne.s32.totalorder %s380, %s381
      %p395 = scmp.eq.s32.totalorder %s28, 3
      %p396 = por %p394, %p395
      %p398 = scmp.ne.s32.totalorder %s381, %s397
      %p399 = scmp.eq.s32.totalorder %s28, 0
      %p400 = por %p398, %p399
      %p401 = scmp.le.s32.totalorder 1, %s22
      %p402 = scmp.lt.s32.totalorder %s22, 5
      %p403 = pnand %p401, %p402
      %p404 = pneg %p403
      // Predicated region
      $region9: #{transformer_forward.1} parent=5 // pred_check
        _
      $region10: #{transformer_forward.1} parent=5 // pred_check_branch
        %406 = sbr.rel (%p403) target = $region12
      $region11: #{transformer_forward.1} parent=5 // pred_region
        %s407 = ssub.s32 %s22, 1
        // Predicated region
        $region13: #{transformer_forward.1} parent=11 // pred_check
          %p408 = pneg %p107
        $region14: #{transformer_forward.1} parent=11 // pred_check_branch
          %410 = sbr.rel (%p408) target = $region16
        $region15: #{transformer_forward.1} parent=11 // pred_region
          _
        $region16: #{transformer_forward.1} parent=11 // pred_fallthru
          _
      $region12: #{transformer_forward.1} parent=5 // pred_fallthru
        _
      %p411 = scmp.lt.s32.totalorder %s22, 4
      // Predicated region
      $region17: #{transformer_forward.1} parent=5 // pred_check
        %p412 = pneg %p411
      $region18: #{transformer_forward.1} parent=5 // pred_check_branch
        %414 = sbr.rel (%p412) target = $region20
      $region19: #{transformer_forward.1} parent=5 // pred_region
        // Predicated region
        $region21: #{transformer_forward.1} parent=19 // pred_check
          %p415 = pneg %p54
        $region22: #{transformer_forward.1} parent=19 // pred_check_branch
          %417 = sbr.rel (%p415) target = $region24
        $region23: #{transformer_forward.1} parent=19 // pred_region
          %p418 = scmp.lt.s32.totalorder %s29, 1
          %s419 = scalar_select %p418, %s29, 1
          %s420 = smul.addr %s419, 8
          %s421 = scalar_lea.vmem %s0, %s420
        $region24: #{transformer_forward.1} parent=19 // pred_fallthru
          _
        // Predicated region
        $region25: #{transformer_forward.1} parent=19 // pred_check
          %p422 = pneg %p80
        $region26: #{transformer_forward.1} parent=19 // pred_check_branch
          %424 = sbr.rel (%p422) target = $region28
        $region27: #{transformer_forward.1} parent=19 // pred_region
          %p425 = scmp.lt.s32.totalorder %s29, 1
          %s426 = scalar_select %p425, %s29, 1
          %s427 = scalar_lea.vmem %s1, %s426
        $region28: #{transformer_forward.1} parent=19 // pred_fallthru
          _
        // Predicated region
        $region29: #{transformer_forward.1} parent=19 // pred_check
          %p428 = pneg %p127
        $region30: #{transformer_forward.1} parent=19 // pred_check_branch
          %430 = sbr.rel (%p428) target = $region32
        $region31: #{transformer_forward.1} parent=19 // pred_region
          %p431 = scmp.lt.s32.totalorder %s30, 1
          %s432 = scalar_select %p431, %s30, 1
          %s433 = smul.addr %s432, 48
          %s434 = smul.addr %s433, 4
          %s435 = scalar_lea.vmem %s3, %s434
        $region32: #{transformer_forward.1} parent=19 // pred_fallthru
          _
        // Predicated region
        $region33: #{transformer_forward.1} parent=19 // pred_check
          %p436 = pneg %p153
        $region34: #{transformer_forward.1} parent=19 // pred_check_branch
          %438 = sbr.rel (%p436) target = $region36
        $region35: #{transformer_forward.1} parent=19 // pred_region
          %p439 = scmp.lt.s32.totalorder %s30, 1
          %s440 = scalar_select %p439, %s30, 1
          %s441 = smul.addr %s440, 16
          %s442 = smul.addr %s441, 4
          %s443 = scalar_lea.vmem %s4, %s442
        $region36: #{transformer_forward.1} parent=19 // pred_fallthru
          _
        // Predicated region
        $region37: #{transformer_forward.1} parent=19 // pred_check
          %p444 = pneg %p179
        $region38: #{transformer_forward.1} parent=19 // pred_check_branch
          %446 = sbr.rel (%p444) target = $region40
        $region39: #{transformer_forward.1} parent=19 // pred_region
          %p447 = scmp.lt.s32.totalorder %s30, 1
          %s448 = scalar_select %p447, %s30, 1
          %s449 = scalar_lea.vmem %s5, %s448
        $region40: #{transformer_forward.1} parent=19 // pred_fallthru
          _
        // Predicated region
        $region41: #{transformer_forward.1} parent=19 // pred_check
          %p450 = pneg %p205
        $region42: #{transformer_forward.1} parent=19 // pred_check_branch
          %452 = sbr.rel (%p450) target = $region44
        $region43: #{transformer_forward.1} parent=19 // pred_region
          %p453 = scmp.lt.s32.totalorder %s30, 1
          %s454 = scalar_select %p453, %s30, 1
          %s455 = scalar_lea.vmem %s6, %s454
        $region44: #{transformer_forward.1} parent=19 // pred_fallthru
          _
        // Predicated region
        $region45: #{transformer_forward.1} parent=19 // pred_check
          %p456 = pneg %p231
        $region46: #{transformer_forward.1} parent=19 // pred_check_branch
          %458 = sbr.rel (%p456) target = $region48
        $region47: #{transformer_forward.1} parent=19 // pred_region
          %p459 = scmp.lt.s32.totalorder %s30, 1
          %s460 = scalar_select %p459, %s30, 1
          %s461 = smul.addr %s460, 128
          %s462 = smul.addr %s461, 4
          %s463 = scalar_lea.vmem %s7, %s462
        $region48: #{transformer_forward.1} parent=19 // pred_fallthru
          _
        // Predicated region
        $region49: #{transformer_forward.1} parent=19 // pred_check
          %p464 = pneg %p257
        $region50: #{transformer_forward.1} parent=19 // pred_check_branch
          %466 = sbr.rel (%p464) target = $region52
        $region51: #{transformer_forward.1} parent=19 // pred_region
          %p467 = scmp.lt.s32.totalorder %s30, 1
          %s468 = scalar_select %p467, %s30, 1
          %s469 = smul.addr %s468, 8
          %s470 = scalar_lea.vmem %s8, %s469
        $region52: #{transformer_forward.1} parent=19 // pred_fallthru
          _
        // Predicated region
        $region53: #{transformer_forward.1} parent=19 // pred_check
          %p471 = pneg %p283
        $region54: #{transformer_forward.1} parent=19 // pred_check_branch
          %473 = sbr.rel (%p471) target = $region56
        $region55: #{transformer_forward.1} parent=19 // pred_region
          %p474 = scmp.lt.s32.totalorder %s30, 1
          %s475 = scalar_select %p474, %s30, 1
          %s476 = smul.addr %s475, 128
          %s477 = smul.addr %s476, 4
          %s478 = scalar_lea.vmem %s9, %s477
        $region56: #{transformer_forward.1} parent=19 // pred_fallthru
          _
        // Predicated region
        $region57: #{transformer_forward.1} parent=19 // pred_check
          %p479 = pneg %p309
        $region58: #{transformer_forward.1} parent=19 // pred_check_branch
          %481 = sbr.rel (%p479) target = $region60
        $region59: #{transformer_forward.1} parent=19 // pred_region
          %p482 = scmp.lt.s32.totalorder %s30, 1
          %s483 = scalar_select %p482, %s30, 1
          %s484 = scalar_lea.vmem %s10, %s483
        $region60: #{transformer_forward.1} parent=19 // pred_fallthru
          _
        // Predicated region
        $region61: #{transformer_forward.1} parent=19 // pred_check
          %p485 = pneg %p335
        $region62: #{transformer_forward.1} parent=19 // pred_check_branch
          %487 = sbr.rel (%p485) target = $region64
        $region63: #{transformer_forward.1} parent=19 // pred_region
          %p488 = scmp.lt.s32.totalorder %s30, 1
          %s489 = scalar_select %p488, %s30, 1
          %s490 = scalar_lea.vmem %s11, %s489
        $region64: #{transformer_forward.1} parent=19 // pred_fallthru
          _
        // Predicated region
        $region65: #{transformer_forward.1} parent=19 // pred_check
          %p491 = pneg %p361
        $region66: #{transformer_forward.1} parent=19 // pred_check_branch
          %493 = sbr.rel (%p491) target = $region68
        $region67: #{transformer_forward.1} parent=19 // pred_region
          %p494 = scmp.lt.s32.totalorder %s30, 1
          %s495 = scalar_select %p494, %s30, 1
          %s496 = scalar_lea.vmem %s12, %s495
        $region68: #{transformer_forward.1} parent=19 // pred_fallthru
          _
      $region20: #{transformer_forward.1} parent=5 // pred_fallthru
        _
      %p497 = scmp.le.s32.totalorder 1, %s22
      %p498 = scmp.lt.s32.totalorder %s22, 5
      %p499 = pnand %p497, %p498
      %p500 = pneg %p499
      // Predicated region
      $region69: #{transformer_forward.1} parent=5 // pred_check
        _
      $region70: #{transformer_forward.1} parent=5 // pred_check_branch
        %502 = sbr.rel (%p499) target = $region72
      $region71: #{transformer_forward.1} parent=5 // pred_region
        %s503 = ssub.s32 %s22, 1
        %p504 = scmp.lt.s32.totalorder %s31, 1
        %s505 = scalar_select %p504, %s31, 1
        %s506 = smul.addr %s505, 8
        %s507 = scalar_lea.vmem %s0, %s506
        %p508 = pneg %p60
        %p509 = pneg %p57
        %p510 = scmp.lt.s32.totalorder %s31, 1
        %s511 = scalar_select %p510, %s31, 1
        %s512 = scalar_lea.vmem %s1, %s511
        %p513 = pneg %p86
        %p514 = pneg %p83
        %p515 = pneg %p107
        %p516 = pneg %p104
        %p517 = scmp.lt.s32.totalorder %s32, 1
        %s518 = scalar_select %p517, %s32, 1
        %s519 = smul.addr %s518, 48
        %s520 = smul.addr %s519, 4
        %s521 = scalar_lea.vmem %s3, %s520
        %p522 = pneg %p133
        %p523 = pneg %p130
        %p524 = scmp.lt.s32.totalorder %s32, 1
        %s525 = scalar_select %p524, %s32, 1
        %s526 = smul.addr %s525, 16
        %s527 = smul.addr %s526, 4
        %s528 = scalar_lea.vmem %s4, %s527
        %p529 = pneg %p159
        %p530 = pneg %p156
        %p531 = scmp.lt.s32.totalorder %s32, 1
        %s532 = scalar_select %p531, %s32, 1
        %s533 = scalar_lea.vmem %s5, %s532
        %p534 = pneg %p185
        %p535 = pneg %p182
        %p536 = scmp.lt.s32.totalorder %s32, 1
        %s537 = scalar_select %p536, %s32, 1
        %s538 = scalar_lea.vmem %s6, %s537
        %p539 = pneg %p211
        %p540 = pneg %p208
        %p541 = scmp.lt.s32.totalorder %s32, 1
        %s542 = scalar_select %p541, %s32, 1
        %s543 = smul.addr %s542, 128
        %s544 = smul.addr %s543, 4
        %s545 = scalar_lea.vmem %s7, %s544
        %p546 = pneg %p237
        %p547 = pneg %p234
        %p548 = scmp.lt.s32.totalorder %s32, 1
        %s549 = scalar_select %p548, %s32, 1
        %s550 = smul.addr %s549, 8
        %s551 = scalar_lea.vmem %s8, %s550
        %p552 = pneg %p263
        %p553 = pneg %p260
        %p554 = scmp.lt.s32.totalorder %s32, 1
        %s555 = scalar_select %p554, %s32, 1
        %s556 = smul.addr %s555, 128
        %s557 = smul.addr %s556, 4
        %s558 = scalar_lea.vmem %s9, %s557
        %p559 = pneg %p289
        %p560 = pneg %p286
        %p561 = scmp.lt.s32.totalorder %s32, 1
        %s562 = scalar_select %p561, %s32, 1
        %s563 = scalar_lea.vmem %s10, %s562
        %p564 = pneg %p315
        %p565 = pneg %p312
        %p566 = scmp.lt.s32.totalorder %s32, 1
        %s567 = scalar_select %p566, %s32, 1
        %s568 = scalar_lea.vmem %s11, %s567
        %p569 = pneg %p341
        %p570 = pneg %p338
        %p571 = scmp.lt.s32.totalorder %s32, 1
        %s572 = scalar_select %p571, %s32, 1
        %s573 = scalar_lea.vmem %s12, %s572
        %p574 = pneg %p367
        %p575 = pneg %p364
        %p576 = pneg %p393
        %p577 = pneg %p390
        %s578 = sand.u32 %s380, 1
        %s579 = scalar_lea.sflag [#allocation4], %s578
        %s580 = sand.u32 %s380, 1
        %s581 = smul.addr %s580, 8
        %s582 = scalar_lea.vmem [#allocation3], %s581
        %p583 = scmp.lt.s32.totalorder %s31, 1
        %s584 = scalar_select %p583, %s31, 1
        %s585 = smul.addr %s584, 8
        %s586 = scalar_lea.vmem %s0, %s585
        %p587 = scmp.lt.s32.totalorder %s31, 1
        %s588 = scalar_select %p587, %s31, 1
        %s589 = scalar_lea.vmem %s1, %s588
        %p590 = scmp.lt.s32.totalorder %s32, 1
        %s591 = scalar_select %p590, %s32, 1
        %s592 = smul.addr %s591, 48
        %s593 = smul.addr %s592, 4
        %s594 = scalar_lea.vmem %s3, %s593
        %p595 = scmp.lt.s32.totalorder %s32, 1
        %s596 = scalar_select %p595, %s32, 1
        %s597 = smul.addr %s596, 16
        %s598 = smul.addr %s597, 4
        %s599 = scalar_lea.vmem %s4, %s598
        %p600 = scmp.lt.s32.totalorder %s32, 1
        %s601 = scalar_select %p600, %s32, 1
        %s602 = scalar_lea.vmem %s5, %s601
        %p603 = scmp.lt.s32.totalorder %s32, 1
        %s604 = scalar_select %p603, %s32, 1
        %s605 = scalar_lea.vmem %s6, %s604
        %p606 = scmp.lt.s32.totalorder %s32, 1
        %s607 = scalar_select %p606, %s32, 1
        %s608 = smul.addr %s607, 128
        %s609 = smul.addr %s608, 4
        %s610 = scalar_lea.vmem %s7, %s609
        %p611 = scmp.lt.s32.totalorder %s32, 1
        %s612 = scalar_select %p611, %s32, 1
        %s613 = smul.addr %s612, 8
        %s614 = scalar_lea.vmem %s8, %s613
        %p615 = scmp.lt.s32.totalorder %s32, 1
        %s616 = scalar_select %p615, %s32, 1
        %s617 = smul.addr %s616, 128
        %s618 = smul.addr %s617, 4
        %s619 = scalar_lea.vmem %s9, %s618
        %p620 = scmp.lt.s32.totalorder %s32, 1
        %s621 = scalar_select %p620, %s32, 1
        %s622 = scalar_lea.vmem %s10, %s621
        %p623 = scmp.lt.s32.totalorder %s32, 1
        %s624 = scalar_select %p623, %s32, 1
        %s625 = scalar_lea.vmem %s11, %s624
        %p626 = scmp.lt.s32.totalorder %s32, 1
        %s627 = scalar_select %p626, %s32, 1
        %s628 = scalar_lea.vmem %s12, %s627
        %p630 = scmp.eq.s32.totalorder %s32, 0
        // Predicated region
        $region73: #{transformer_forward.1} parent=71 // pred_check
          %p631 = pneg %p630
        $region74: #{transformer_forward.1} parent=71 // pred_check_branch
          %633 = sbr.rel (%p631) target = $region76
        $region75: #{transformer_forward.1} parent=71 // pred_region
          %v634 = vld [vmem:[%s586] sm:$0xff]
          %v635 = vmul.f32 %v634, 11.313708
          %v636 = vld [vmem:[%s589] sm:$0x1]
          %v638 = vlaneseq
          %v639 = vshrl.u32 %v638, 7
          %v640 = vsub.s32 0, %v639
          %v641 = vrot.slane %v636, %v640
          %v643 = vadd.f32 %v635, %v641
          %644 = vst [vmem:[#allocation2] sm:$0xff] %v643
        $region76: #{transformer_forward.1} parent=71 // pred_fallthru
          _
        %v645 = vld [vmem:[#allocation2] sm:$0xff]
        %v646 = vpack.c.bf16 %v645, %v645
        %v647 = vld [vmem:[%s594] sm:$0xff]
        %v648 = vld [vmem:[%s594 + $0x8] sm:$0xf]
        %v649 = vld [vmem:[%s594 + $0xc] sm:$0xff]
        %v650 = vld [vmem:[%s594 + $0x14] sm:$0xf]
        %v651 = vld [vmem:[%s594 + $0x18] sm:$0xff]
        %v652 = vld [vmem:[%s594 + $0x20] sm:$0xf]
        %v653 = vld [vmem:[%s594 + $0x24] sm:$0xff]
        %v654 = vld [vmem:[%s594 + $0x2c] sm:$0xf]
        %v655 = vld [vmem:[%s594 + $0x30] sm:$0xff]
        %v656 = vld [vmem:[%s594 + $0x38] sm:$0xf]
        %v657 = vld [vmem:[%s594 + $0x3c] sm:$0xff]
        %v658 = vld [vmem:[%s594 + $0x44] sm:$0xf]
        %v659 = vld [vmem:[%s594 + $0x48] sm:$0xff]
        %v660 = vld [vmem:[%s594 + $0x50] sm:$0xf]
        %v661 = vld [vmem:[%s594 + $0x54] sm:$0xff]
        %v662 = vld [vmem:[%s594 + $0x5c] sm:$0xf]
        %v663 = vld [vmem:[%s594 + $0x60] sm:$0xff]
        %v664 = vld [vmem:[%s594 + $0x68] sm:$0xf]
        %v665 = vld [vmem:[%s594 + $0x6c] sm:$0xff]
        %v666 = vld [vmem:[%s594 + $0x74] sm:$0xf]
        %v667 = vld [vmem:[%s594 + $0x78] sm:$0xff]
        %v668 = vld [vmem:[%s594 + $0x80] sm:$0xf]
        %v669 = vld [vmem:[%s594 + $0x84] sm:$0xff]
        %v670 = vld [vmem:[%s594 + $0x8c] sm:$0xf]
        %v671 = vld [vmem:[%s594 + $0x90] sm:$0xff]
        %v672 = vld [vmem:[%s594 + $0x98] sm:$0xf]
        %v673 = vld [vmem:[%s594 + $0x9c] sm:$0xff]
        %v674 = vld [vmem:[%s594 + $0xa4] sm:$0xf]
        %v675 = vld [vmem:[%s594 + $0xa8] sm:$0xff]
        %v676 = vld [vmem:[%s594 + $0xb0] sm:$0xf]
        %v677 = vld [vmem:[%s594 + $0xb4] sm:$0xff]
        %v678 = vld [vmem:[%s594 + $0xbc] sm:$0xf]
        %v711 = vunpack.c.l.b16 %v647
        %v712 = vunpack.c.h.b16 %v647
        %v713 = vunpack.c.l.b16 %v648
        %v714 = vunpack.c.l.b16 %v649
        %v715 = vunpack.c.h.b16 %v649
        %v716 = vunpack.c.l.b16 %v650
        %v717 = vunpack.c.l.b16 %v651
        %v718 = vunpack.c.h.b16 %v651
        %v719 = vunpack.c.l.b16 %v652
        %v720 = vunpack.c.l.b16 %v653
        %v721 = vunpack.c.h.b16 %v653
        %v722 = vunpack.c.l.b16 %v654
        %v723 = vunpack.c.l.b16 %v655
        %v724 = vunpack.c.h.b16 %v655
        %v725 = vunpack.c.l.b16 %v656
        %v726 = vunpack.c.l.b16 %v657
        %v727 = vunpack.c.h.b16 %v657
        %v728 = vunpack.c.l.b16 %v658
        %v729 = vunpack.c.l.b16 %v659
        %v730 = vunpack.c.h.b16 %v659
        %v731 = vunpack.c.l.b16 %v660
        %v732 = vunpack.c.l.b16 %v661
        %v733 = vunpack.c.h.b16 %v661
        %v734 = vunpack.c.l.b16 %v662
        %v735 = vunpack.c.l.b16 %v663
        %v736 = vunpack.c.h.b16 %v663
        %v737 = vunpack.c.l.b16 %v664
        %v738 = vunpack.c.l.b16 %v665
        %v739 = vunpack.c.h.b16 %v665
        %v740 = vunpack.c.l.b16 %v666
        %v741 = vunpack.c.l.b16 %v667
        %v742 = vunpack.c.h.b16 %v667
        %v743 = vunpack.c.l.b16 %v668
        %v744 = vunpack.c.l.b16 %v669
        %v745 = vunpack.c.h.b16 %v669
        %v746 = vunpack.c.l.b16 %v670
        %v747 = vunpack.c.l.b16 %v671
        %v748 = vunpack.c.h.b16 %v671
        %v749 = vunpack.c.l.b16 %v672
        %v750 = vunpack.c.l.b16 %v673
        %v751 = vunpack.c.h.b16 %v673
        %v752 = vunpack.c.l.b16 %v674
        %v753 = vunpack.c.l.b16 %v675
        %v754 = vunpack.c.h.b16 %v675
        %v755 = vunpack.c.l.b16 %v676
        %v756 = vunpack.c.l.b16 %v677
        %v757 = vunpack.c.h.b16 %v677
        %v758 = vunpack.c.l.b16 %v678
        %v759 = vpack.c.b16 %v714, %v711
        %v760 = vpack.c.b16 %v715, %v712
        %v761 = vpack.c.b16 %v716, %v713
        %v762 = vpack.c.b16 %v720, %v717
        %v763 = vpack.c.b16 %v721, %v718
        %v764 = vpack.c.b16 %v722, %v719
        %v765 = vpack.c.b16 %v726, %v723
        %v766 = vpack.c.b16 %v727, %v724
        %v767 = vpack.c.b16 %v728, %v725
        %v768 = vpack.c.b16 %v732, %v729
        %v769 = vpack.c.b16 %v733, %v730
        %v770 = vpack.c.b16 %v734, %v731
        %v771 = vpack.c.b16 %v738, %v735
        %v772 = vpack.c.b16 %v739, %v736
        %v773 = vpack.c.b16 %v740, %v737
        %v774 = vpack.c.b16 %v744, %v741
        %v775 = vpack.c.b16 %v745, %v742
        %v776 = vpack.c.b16 %v746, %v743
        %v777 = vpack.c.b16 %v750, %v747
        %v778 = vpack.c.b16 %v751, %v748
        %v779 = vpack.c.b16 %v752, %v749
        %v780 = vpack.c.b16 %v756, %v753
        %v781 = vpack.c.b16 %v757, %v754
        %v782 = vpack.c.b16 %v758, %v755
        %807 = vmatprep.subr.bf16.mxu0 %v760
        %808 = vmatpush1.bf16.msra.mxu0 %v759
        %809 = vmatprep.subr.bf16.mxu0 %v763
        %810 = vmatpush1.bf16.msra.mxu0 %v762
        %811 = vmatprep.subr.bf16.mxu0 %v766
        %812 = vmatpush1.bf16.msra.mxu0 %v765
        %813 = vmatprep.subr.bf16.mxu0 %v769
        %814 = vmatpush1.bf16.msra.mxu0 %v768
        %815 = vmatprep.subr.bf16.mxu0 %v772
        %816 = vmatpush1.bf16.msra.mxu0 %v771
        %817 = vmatprep.subr.bf16.mxu0 %v775
        %818 = vmatpush1.bf16.msra.mxu0 %v774
        %819 = vmatprep.subr.bf16.mxu0 %v778
        %820 = vmatpush1.bf16.msra.mxu0 %v777
        %821 = vmatprep.subr.bf16.mxu0 %v781
        %822 = vmatpush1.bf16.msra.mxu0 %v780
        %823 = vmatprep.subr.bf16.mxu0 0
        %824 = vmatpush1.bf16.msra.mxu0 0
        %825 = vmatprep.subr.bf16.mxu0 0
        %826 = vmatpush1.bf16.msra.mxu0 0
        %827 = vmatprep.subr.bf16.mxu0 0
        %828 = vmatpush1.bf16.msra.mxu0 0
        %829 = vmatprep.subr.bf16.mxu0 0
        %830 = vmatpush1.bf16.msra.mxu0 0
        %831 = vmatprep.subr.bf16.mxu0 0
        %832 = vmatpush1.bf16.msra.mxu0 0
        %833 = vmatprep.subr.bf16.mxu0 0
        %834 = vmatpush1.bf16.msra.mxu0 0
        %835 = vmatprep.subr.bf16.mxu0 0
        %836 = vmatpush1.bf16.msra.mxu0 0
        %837 = vmatprep.subr.bf16.mxu0 0
        %838 = vmatpush1.bf16.msra.mxu0 0
        %839 = vmatprep.mubr.bf16.mxu0 0
        %840 = vmatmul.mubr.bf16.gmra.mrb[0].mxu0 %v646
        %v841 = vpop.f32.mrb[0].mxu0
        %v842 = vadd.f32 0.0, %v841
        %v843 = vpop.f32.mrb[0].mxu0
        %v844 = vadd.f32 0.0, %v843
        %v845 = vpop.f32.mrb[0].mxu0
        %v846 = vpop.f32.mrb[0].mxu0
        %847 = vdwg.mxu0
        %848 = vmatprep.subr.bf16.mxu0 0
        %849 = vmatpush1.bf16.msra.mxu0 %v761
        %850 = vmatprep.subr.bf16.mxu0 0
        %851 = vmatpush1.bf16.msra.mxu0 %v764
        %852 = vmatprep.subr.bf16.mxu0 0
        %853 = vmatpush1.bf16.msra.mxu0 %v767
        %854 = vmatprep.subr.bf16.mxu0 0
        %855 = vmatpush1.bf16.msra.mxu0 %v770
        %856 = vmatprep.subr.bf16.mxu0 0
        %857 = vmatpush1.bf16.msra.mxu0 %v773
        %858 = vmatprep.subr.bf16.mxu0 0
        %859 = vmatpush1.bf16.msra.mxu0 %v776
        %860 = vmatprep.subr.bf16.mxu0 0
        %861 = vmatpush1.bf16.msra.mxu0 %v779
        %862 = vmatprep.subr.bf16.mxu0 0
        %863 = vmatpush1.bf16.msra.mxu0 %v782
        %864 = vmatprep.subr.bf16.mxu0 0
        %865 = vmatpush1.bf16.msra.mxu0 0
        %866 = vmatprep.subr.bf16.mxu0 0
        %867 = vmatpush1.bf16.msra.mxu0 0
        %868 = vmatprep.subr.bf16.mxu0 0
        %869 = vmatpush1.bf16.msra.mxu0 0
        %870 = vmatprep.subr.bf16.mxu0 0
        %871 = vmatpush1.bf16.msra.mxu0 0
        %872 = vmatprep.subr.bf16.mxu0 0
        %873 = vmatpush1.bf16.msra.mxu0 0
        %874 = vmatprep.subr.bf16.mxu0 0
        %875 = vmatpush1.bf16.msra.mxu0 0
        %876 = vmatprep.subr.bf16.mxu0 0
        %877 = vmatpush1.bf16.msra.mxu0 0
        %878 = vmatprep.subr.bf16.mxu0 0
        %879 = vmatpush1.bf16.msra.mxu0 0
        %880 = vmatprep.mubr.bf16.mxu0 0
        %881 = vmatmul.mubr.bf16.gmra.mrb[0].mxu0 %v646
        %v882 = vpop.f32.mrb[0].mxu0
        %v883 = vadd.f32 0.0, %v882
        %v884 = vpop.f32.mrb[0].mxu0
        %v885 = vpop.f32.mrb[0].mxu0
        %v886 = vpop.f32.mrb[0].mxu0
        %887 = vdwg.mxu0
        %889 = vrot.lane.b32.xlu0 %v842, 112
        %v890 = vpop.permute.xlu0 %889
        %892 = vrot.lane.b32.xlu0 %v842, 96
        %v893 = vpop.permute.xlu0 %892
        %895 = vrot.lane.b32.xlu0 %v842, 80
        %v896 = vpop.permute.xlu0 %895
        %898 = vrot.lane.b32.xlu0 %v842, 64
        %v899 = vpop.permute.xlu0 %898
        %901 = vrot.lane.b32.xlu0 %v842, 48
        %v902 = vpop.permute.xlu0 %901
        %904 = vrot.lane.b32.xlu0 %v842, 32
        %v905 = vpop.permute.xlu0 %904
        %907 = vrot.lane.b32.xlu0 %v842, 16
        %v908 = vpop.permute.xlu0 %907
        %v910 = vcombine.low %v842, %v893
        %v911 = vcombine.high %v842, %v893
        %v913 = vunpack.c.l.s4 1983009808
        %v914 = vunpack.c.0.s8 %v913
        %v915 = vlaneseq
        %v916 = vshrl.u32 %v915, 7
        %v917 = vsub.s32 %v914, %v916
        %v918 = vrot.slane %v910, %v917
        %v920 = vunpack.c.l.s4 1983009808
        %v921 = vunpack.c.0.s8 %v920
        %v922 = vlaneseq
        %v923 = vshrl.u32 %v922, 7
        %v924 = vsub.s32 %v921, %v923
        %v925 = vrot.slane %v911, %v924
        %v926 = vcombine.low %v890, %v896
        %v927 = vcombine.high %v890, %v896
        %v929 = vunpack.c.l.s4 1983009808
        %v930 = vunpack.c.0.s8 %v929
        %v931 = vlaneseq
        %v932 = vshrl.u32 %v931, 7
        %v933 = vsub.s32 %v930, %v932
        %v934 = vrot.slane %v926, %v933
        %v936 = vunpack.c.l.s4 1983009808
        %v937 = vunpack.c.0.s8 %v936
        %v938 = vlaneseq
        %v939 = vshrl.u32 %v938, 7
        %v940 = vsub.s32 %v937, %v939
        %v941 = vrot.slane %v927, %v940
        %v942 = vcombine.low %v899, %v905
        %v943 = vcombine.high %v899, %v905
        %v945 = vunpack.c.l.s4 1983009808
        %v946 = vunpack.c.0.s8 %v945
        %v947 = vlaneseq
        %v948 = vshrl.u32 %v947, 7
        %v949 = vsub.s32 %v946, %v948
        %v950 = vrot.slane %v942, %v949
        %v952 = vunpack.c.l.s4 1983009808
        %v953 = vunpack.c.0.s8 %v952
        %v954 = vlaneseq
        %v955 = vshrl.u32 %v954, 7
        %v956 = vsub.s32 %v953, %v955
        %v957 = vrot.slane %v943, %v956
        %v958 = vcombine.low %v902, %v908
        %v959 = vcombine.high %v902, %v908
        %v961 = vunpack.c.l.s4 1983009808
        %v962 = vunpack.c.0.s8 %v961
        %v963 = vlaneseq
        %v964 = vshrl.u32 %v963, 7
        %v965 = vsub.s32 %v962, %v964
        %v966 = vrot.slane %v958, %v965
        %v968 = vunpack.c.l.s4 1983009808
        %v969 = vunpack.c.0.s8 %v968
        %v970 = vlaneseq
        %v971 = vshrl.u32 %v970, 7
        %v972 = vsub.s32 %v969, %v971
        %v973 = vrot.slane %v959, %v972
        %v974 = vcombine.low %v918, %v934
        %v975 = vcombine.high %v918, %v934
        %v977 = vunpack.c.l.s4 1934713408
        %v978 = vunpack.c.0.s8 %v977
        %v979 = vlaneseq
        %v980 = vshrl.u32 %v979, 7
        %v981 = vsub.s32 %v978, %v980
        %v982 = vrot.slane %v974, %v981
        %v984 = vunpack.c.l.s4 1934713408
        %v985 = vunpack.c.0.s8 %v984
        %v986 = vlaneseq
        %v987 = vshrl.u32 %v986, 7
        %v988 = vsub.s32 %v985, %v987
        %v989 = vrot.slane %v975, %v988
        %v990 = vcombine.low %v925, %v941
        %v991 = vcombine.high %v925, %v941
        %v993 = vunpack.c.l.s4 1934713408
        %v994 = vunpack.c.0.s8 %v993
        %v995 = vlaneseq
        %v996 = vshrl.u32 %v995, 7
        %v997 = vsub.s32 %v994, %v996
        %v998 = vrot.slane %v990, %v997
        %v1000 = vunpack.c.l.s4 1934713408
        %v1001 = vunpack.c.0.s8 %v1000
        %v1002 = vlaneseq
        %v1003 = vshrl.u32 %v1002, 7
        %v1004 = vsub.s32 %v1001, %v1003
        %v1005 = vrot.slane %v991, %v1004
        %v1006 = vcombine.low %v950, %v966
        %v1007 = vcombine.high %v950, %v966
        %v1009 = vunpack.c.l.s4 1934713408
        %v1010 = vunpack.c.0.s8 %v1009
        %v1011 = vlaneseq
        %v1012 = vshrl.u32 %v1011, 7
        %v1013 = vsub.s32 %v1010, %v1012
        %v1014 = vrot.slane %v1006, %v1013
        %v1016 = vunpack.c.l.s4 1934713408
        %v1017 = vunpack.c.0.s8 %v1016
        %v1018 = vlaneseq
        %v1019 = vshrl.u32 %v1018, 7
        %v1020 = vsub.s32 %v1017, %v1019
        %v1021 = vrot.slane %v1007, %v1020
        %v1022 = vcombine.low %v957, %v973
        %v1023 = vcombine.high %v957, %v973
        %v1025 = vunpack.c.l.s4 1934713408
        %v1026 = vunpack.c.0.s8 %v1025
        %v1027 = vlaneseq
        %v1028 = vshrl.u32 %v1027, 7
        %v1029 = vsub.s32 %v1026, %v1028
        %v1030 = vrot.slane %v1022, %v1029
        %v1032 = vunpack.c.l.s4 1934713408
        %v1033 = vunpack.c.0.s8 %v1032
        %v1034 = vlaneseq
        %v1035 = vshrl.u32 %v1034, 7
        %v1036 = vsub.s32 %v1033, %v1035
        %v1037 = vrot.slane %v1023, %v1036
        %v1038 = vcombine.low %v982, %v1014
        %v1039 = vcombine.high %v982, %v1014
        %v1040 = vcombine.low %v989, %v1021
        %v1041 = vcombine.high %v989, %v1021
        %v1042 = vcombine.low %v998, %v1030
        %v1043 = vcombine.high %v998, %v1030
        %v1044 = vcombine.low %v1005, %v1037
        %v1045 = vcombine.high %v1005, %v1037
        %1047 = vrot.lane.b32.xlu0 %v844, 112
        %v1048 = vpop.permute.xlu0 %1047
        %1050 = vrot.lane.b32.xlu0 %v844, 96
        %v1051 = vpop.permute.xlu0 %1050
        %1053 = vrot.lane.b32.xlu0 %v844, 80
        %v1054 = vpop.permute.xlu0 %1053
        %1056 = vrot.lane.b32.xlu0 %v844, 64
        %v1057 = vpop.permute.xlu0 %1056
        %1059 = vrot.lane.b32.xlu0 %v844, 48
        %v1060 = vpop.permute.xlu0 %1059
        %1062 = vrot.lane.b32.xlu0 %v844, 32
        %v1063 = vpop.permute.xlu0 %1062
        %1065 = vrot.lane.b32.xlu0 %v844, 16
        %v1066 = vpop.permute.xlu0 %1065
        %v1068 = vcombine.low %v844, %v1051
        %v1069 = vcombine.high %v844, %v1051
        %v1071 = vunpack.c.l.s4 1983009808
        %v1072 = vunpack.c.0.s8 %v1071
        %v1073 = vlaneseq
        %v1074 = vshrl.u32 %v1073, 7
        %v1075 = vsub.s32 %v1072, %v1074
        %v1076 = vrot.slane %v1068, %v1075
        %v1078 = vunpack.c.l.s4 1983009808
        %v1079 = vunpack.c.0.s8 %v1078
        %v1080 = vlaneseq
        %v1081 = vshrl.u32 %v1080, 7
        %v1082 = vsub.s32 %v1079, %v1081
        %v1083 = vrot.slane %v1069, %v1082
        %v1084 = vcombine.low %v1048, %v1054
        %v1085 = vcombine.high %v1048, %v1054
        %v1087 = vunpack.c.l.s4 1983009808
        %v1088 = vunpack.c.0.s8 %v1087
        %v1089 = vlaneseq
        %v1090 = vshrl.u32 %v1089, 7
        %v1091 = vsub.s32 %v1088, %v1090
        %v1092 = vrot.slane %v1084, %v1091
        %v1094 = vunpack.c.l.s4 1983009808
        %v1095 = vunpack.c.0.s8 %v1094
        %v1096 = vlaneseq
        %v1097 = vshrl.u32 %v1096, 7
        %v1098 = vsub.s32 %v1095, %v1097
        %v1099 = vrot.slane %v1085, %v1098
        %v1100 = vcombine.low %v1057, %v1063
        %v1101 = vcombine.high %v1057, %v1063
        %v1103 = vunpack.c.l.s4 1983009808
        %v1104 = vunpack.c.0.s8 %v1103
        %v1105 = vlaneseq
        %v1106 = vshrl.u32 %v1105, 7
        %v1107 = vsub.s32 %v1104, %v1106
        %v1108 = vrot.slane %v1100, %v1107
        %v1110 = vunpack.c.l.s4 1983009808
        %v1111 = vunpack.c.0.s8 %v1110
        %v1112 = vlaneseq
        %v1113 = vshrl.u32 %v1112, 7
        %v1114 = vsub.s32 %v1111, %v1113
        %v1115 = vrot.slane %v1101, %v1114
        %v1116 = vcombine.low %v1060, %v1066
        %v1117 = vcombine.high %v1060, %v1066
        %v1119 = vunpack.c.l.s4 1983009808
        %v1120 = vunpack.c.0.s8 %v1119
        %v1121 = vlaneseq
        %v1122 = vshrl.u32 %v1121, 7
        %v1123 = vsub.s32 %v1120, %v1122
        %v1124 = vrot.slane %v1116, %v1123
        %v1126 = vunpack.c.l.s4 1983009808
        %v1127 = vunpack.c.0.s8 %v1126
        %v1128 = vlaneseq
        %v1129 = vshrl.u32 %v1128, 7
        %v1130 = vsub.s32 %v1127, %v1129
        %v1131 = vrot.slane %v1117, %v1130
        %v1132 = vcombine.low %v1076, %v1092
        %v1133 = vcombine.high %v1076, %v1092
        %v1135 = vunpack.c.l.s4 1934713408
        %v1136 = vunpack.c.0.s8 %v1135
        %v1137 = vlaneseq
        %v1138 = vshrl.u32 %v1137, 7
        %v1139 = vsub.s32 %v1136, %v1138
        %v1140 = vrot.slane %v1132, %v1139
        %v1142 = vunpack.c.l.s4 1934713408
        %v1143 = vunpack.c.0.s8 %v1142
        %v1144 = vlaneseq
        %v1145 = vshrl.u32 %v1144, 7
        %v1146 = vsub.s32 %v1143, %v1145
        %v1147 = vrot.slane %v1133, %v1146
        %v1148 = vcombine.low %v1083, %v1099
        %v1149 = vcombine.high %v1083, %v1099
        %v1151 = vunpack.c.l.s4 1934713408
        %v1152 = vunpack.c.0.s8 %v1151
        %v1153 = vlaneseq
        %v1154 = vshrl.u32 %v1153, 7
        %v1155 = vsub.s32 %v1152, %v1154
        %v1156 = vrot.slane %v1148, %v1155
        %v1158 = vunpack.c.l.s4 1934713408
        %v1159 = vunpack.c.0.s8 %v1158
        %v1160 = vlaneseq
        %v1161 = vshrl.u32 %v1160, 7
        %v1162 = vsub.s32 %v1159, %v1161
        %v1163 = vrot.slane %v1149, %v1162
        %v1164 = vcombine.low %v1108, %v1124
        %v1165 = vcombine.high %v1108, %v1124
        %v1167 = vunpack.c.l.s4 1934713408
        %v1168 = vunpack.c.0.s8 %v1167
        %v1169 = vlaneseq
        %v1170 = vshrl.u32 %v1169, 7
        %v1171 = vsub.s32 %v1168, %v1170
        %v1172 = vrot.slane %v1164, %v1171
        %v1174 = vunpack.c.l.s4 1934713408
        %v1175 = vunpack.c.0.s8 %v1174
        %v1176 = vlaneseq
        %v1177 = vshrl.u32 %v1176, 7
        %v1178 = vsub.s32 %v1175, %v1177
        %v1179 = vrot.slane %v1165, %v1178
        %v1180 = vcombine.low %v1115, %v1131
        %v1181 = vcombine.high %v1115, %v1131
        %v1183 = vunpack.c.l.s4 1934713408
        %v1184 = vunpack.c.0.s8 %v1183
        %v1185 = vlaneseq
        %v1186 = vshrl.u32 %v1185, 7
        %v1187 = vsub.s32 %v1184, %v1186
        %v1188 = vrot.slane %v1180, %v1187
        %v1190 = vunpack.c.l.s4 1934713408
        %v1191 = vunpack.c.0.s8 %v1190
        %v1192 = vlaneseq
        %v1193 = vshrl.u32 %v1192, 7
        %v1194 = vsub.s32 %v1191, %v1193
        %v1195 = vrot.slane %v1181, %v1194
        %v1196 = vcombine.low %v1140, %v1172
        %v1197 = vcombine.high %v1140, %v1172
        %v1198 = vcombine.low %v1147, %v1179
        %v1199 = vcombine.high %v1147, %v1179
        %v1200 = vcombine.low %v1156, %v1188
        %v1201 = vcombine.high %v1156, %v1188
        %v1202 = vcombine.low %v1163, %v1195
        %v1203 = vcombine.high %v1163, %v1195
        %1205 = vrot.lane.b32.xlu0 %v883, 112
        %v1206 = vpop.permute.xlu0 %1205
        %1208 = vrot.lane.b32.xlu0 %v883, 96
        %v1209 = vpop.permute.xlu0 %1208
        %1211 = vrot.lane.b32.xlu0 %v883, 80
        %v1212 = vpop.permute.xlu0 %1211
        %1214 = vrot.lane.b32.xlu0 %v883, 64
        %v1215 = vpop.permute.xlu0 %1214
        %1217 = vrot.lane.b32.xlu0 %v883, 48
        %v1218 = vpop.permute.xlu0 %1217
        %1220 = vrot.lane.b32.xlu0 %v883, 32
        %v1221 = vpop.permute.xlu0 %1220
        %1223 = vrot.lane.b32.xlu0 %v883, 16
        %v1224 = vpop.permute.xlu0 %1223
        %v1226 = vcombine.low %v883, %v1209
        %v1227 = vcombine.high %v883, %v1209
        %v1229 = vunpack.c.l.s4 1983009808
        %v1230 = vunpack.c.0.s8 %v1229
        %v1231 = vlaneseq
        %v1232 = vshrl.u32 %v1231, 7
        %v1233 = vsub.s32 %v1230, %v1232
        %v1234 = vrot.slane %v1226, %v1233
        %v1236 = vunpack.c.l.s4 1983009808
        %v1237 = vunpack.c.0.s8 %v1236
        %v1238 = vlaneseq
        %v1239 = vshrl.u32 %v1238, 7
        %v1240 = vsub.s32 %v1237, %v1239
        %v1241 = vrot.slane %v1227, %v1240
        %v1242 = vcombine.low %v1206, %v1212
        %v1243 = vcombine.high %v1206, %v1212
        %v1245 = vunpack.c.l.s4 1983009808
        %v1246 = vunpack.c.0.s8 %v1245
        %v1247 = vlaneseq
        %v1248 = vshrl.u32 %v1247, 7
        %v1249 = vsub.s32 %v1246, %v1248
        %v1250 = vrot.slane %v1242, %v1249
        %v1252 = vunpack.c.l.s4 1983009808
        %v1253 = vunpack.c.0.s8 %v1252
        %v1254 = vlaneseq
        %v1255 = vshrl.u32 %v1254, 7
        %v1256 = vsub.s32 %v1253, %v1255
        %v1257 = vrot.slane %v1243, %v1256
        %v1258 = vcombine.low %v1215, %v1221
        %v1259 = vcombine.high %v1215, %v1221
        %v1261 = vunpack.c.l.s4 1983009808
        %v1262 = vunpack.c.0.s8 %v1261
        %v1263 = vlaneseq
        %v1264 = vshrl.u32 %v1263, 7
        %v1265 = vsub.s32 %v1262, %v1264
        %v1266 = vrot.slane %v1258, %v1265
        %v1268 = vunpack.c.l.s4 1983009808
        %v1269 = vunpack.c.0.s8 %v1268
        %v1270 = vlaneseq
        %v1271 = vshrl.u32 %v1270, 7
        %v1272 = vsub.s32 %v1269, %v1271
        %v1273 = vrot.slane %v1259, %v1272
        %v1274 = vcombine.low %v1218, %v1224
        %v1275 = vcombine.high %v1218, %v1224
        %v1277 = vunpack.c.l.s4 1983009808
        %v1278 = vunpack.c.0.s8 %v1277
        %v1279 = vlaneseq
        %v1280 = vshrl.u32 %v1279, 7
        %v1281 = vsub.s32 %v1278, %v1280
        %v1282 = vrot.slane %v1274, %v1281
        %v1284 = vunpack.c.l.s4 1983009808
        %v1285 = vunpack.c.0.s8 %v1284
        %v1286 = vlaneseq
        %v1287 = vshrl.u32 %v1286, 7
        %v1288 = vsub.s32 %v1285, %v1287
        %v1289 = vrot.slane %v1275, %v1288
        %v1290 = vcombine.low %v1234, %v1250
        %v1291 = vcombine.high %v1234, %v1250
        %v1293 = vunpack.c.l.s4 1934713408
        %v1294 = vunpack.c.0.s8 %v1293
        %v1295 = vlaneseq
        %v1296 = vshrl.u32 %v1295, 7
        %v1297 = vsub.s32 %v1294, %v1296
        %v1298 = vrot.slane %v1290, %v1297
        %v1300 = vunpack.c.l.s4 1934713408
        %v1301 = vunpack.c.0.s8 %v1300
        %v1302 = vlaneseq
        %v1303 = vshrl.u32 %v1302, 7
        %v1304 = vsub.s32 %v1301, %v1303
        %v1305 = vrot.slane %v1291, %v1304
        %v1306 = vcombine.low %v1241, %v1257
        %v1307 = vcombine.high %v1241, %v1257
        %v1309 = vunpack.c.l.s4 1934713408
        %v1310 = vunpack.c.0.s8 %v1309
        %v1311 = vlaneseq
        %v1312 = vshrl.u32 %v1311, 7
        %v1313 = vsub.s32 %v1310, %v1312
        %v1314 = vrot.slane %v1306, %v1313
        %v1316 = vunpack.c.l.s4 1934713408
        %v1317 = vunpack.c.0.s8 %v1316
        %v1318 = vlaneseq
        %v1319 = vshrl.u32 %v1318, 7
        %v1320 = vsub.s32 %v1317, %v1319
        %v1321 = vrot.slane %v1307, %v1320
        %v1322 = vcombine.low %v1266, %v1282
        %v1323 = vcombine.high %v1266, %v1282
        %v1325 = vunpack.c.l.s4 1934713408
        %v1326 = vunpack.c.0.s8 %v1325
        %v1327 = vlaneseq
        %v1328 = vshrl.u32 %v1327, 7
        %v1329 = vsub.s32 %v1326, %v1328
        %v1330 = vrot.slane %v1322, %v1329
        %v1332 = vunpack.c.l.s4 1934713408
        %v1333 = vunpack.c.0.s8 %v1332
        %v1334 = vlaneseq
        %v1335 = vshrl.u32 %v1334, 7
        %v1336 = vsub.s32 %v1333, %v1335
        %v1337 = vrot.slane %v1323, %v1336
        %v1338 = vcombine.low %v1273, %v1289
        %v1339 = vcombine.high %v1273, %v1289
        %v1341 = vunpack.c.l.s4 1934713408
        %v1342 = vunpack.c.0.s8 %v1341
        %v1343 = vlaneseq
        %v1344 = vshrl.u32 %v1343, 7
        %v1345 = vsub.s32 %v1342, %v1344
        %v1346 = vrot.slane %v1338, %v1345
        %v1348 = vunpack.c.l.s4 1934713408
        %v1349 = vunpack.c.0.s8 %v1348
        %v1350 = vlaneseq
        %v1351 = vshrl.u32 %v1350, 7
        %v1352 = vsub.s32 %v1349, %v1351
        %v1353 = vrot.slane %v1339, %v1352
        %v1354 = vcombine.low %v1298, %v1330
        %v1355 = vcombine.high %v1298, %v1330
        %v1356 = vcombine.low %v1305, %v1337
        %v1357 = vcombine.high %v1305, %v1337
        %v1358 = vcombine.low %v1314, %v1346
        %v1359 = vcombine.high %v1314, %v1346
        %v1360 = vcombine.low %v1321, %v1353
        %v1361 = vcombine.high %v1321, %v1353
        %v1362 = vpack.c.bf16 %v1038, %v1038
        %v1363 = vpack.c.bf16 %v1039, %v1039
        %v1364 = vpack.c.bf16 %v1040, %v1040
        %v1365 = vpack.c.bf16 %v1041, %v1041
        %v1366 = vpack.c.bf16 %v1042, %v1042
        %v1367 = vpack.c.bf16 %v1043, %v1043
        %v1368 = vpack.c.bf16 %v1044, %v1044
        %v1369 = vpack.c.bf16 %v1045, %v1045
        %v1370 = vpack.c.bf16 %v1196, %v1196
        %v1371 = vpack.c.bf16 %v1197, %v1197
        %v1372 = vpack.c.bf16 %v1198, %v1198
        %v1373 = vpack.c.bf16 %v1199, %v1199
        %v1374 = vpack.c.bf16 %v1200, %v1200
        %v1375 = vpack.c.bf16 %v1201, %v1201
        %v1376 = vpack.c.bf16 %v1202, %v1202
        %v1377 = vpack.c.bf16 %v1203, %v1203
        %v1378 = vld [vmem:[%s2] sm:$0xff]
        %v1379 = vcombine.low %v1362, %v1366
        %v1381 = vunpack.c.l.s4 1983009808
        %v1382 = vunpack.c.0.s8 %v1381
        %v1383 = vlaneseq
        %v1384 = vshrl.u32 %v1383, 7
        %v1385 = vsub.s32 %v1382, %v1384
        %v1386 = vrot.slane %v1379, %v1385
        %v1387 = vcombine.low %v1364, %v1368
        %v1389 = vunpack.c.l.s4 1983009808
        %v1390 = vunpack.c.0.s8 %v1389
        %v1391 = vlaneseq
        %v1392 = vshrl.u32 %v1391, 7
        %v1393 = vsub.s32 %v1390, %v1392
        %v1394 = vrot.slane %v1387, %v1393
        %v1395 = vcombine.low %v1386, %v1394
        %v1396 = vcombine.high %v1386, %v1394
        %v1398 = vunpack.c.l.s4 1934713408
        %v1399 = vunpack.c.0.s8 %v1398
        %v1400 = vlaneseq
        %v1401 = vshrl.u32 %v1400, 7
        %v1402 = vsub.s32 %v1399, %v1401
        %v1403 = vrot.slane %v1395, %v1402
        %v1405 = vunpack.c.l.s4 1934713408
        %v1406 = vunpack.c.0.s8 %v1405
        %v1407 = vlaneseq
        %v1408 = vshrl.u32 %v1407, 7
        %v1409 = vsub.s32 %v1406, %v1408
        %v1410 = vrot.slane %v1396, %v1409
        %v1411 = vcombine.high %v1403, 0
        %v1412 = vcombine.high %v1410, 0
        %v1413 = vcombine.low %v1363, %v1367
        %v1415 = vunpack.c.l.s4 1983009808
        %v1416 = vunpack.c.0.s8 %v1415
        %v1417 = vlaneseq
        %v1418 = vshrl.u32 %v1417, 7
        %v1419 = vsub.s32 %v1416, %v1418
        %v1420 = vrot.slane %v1413, %v1419
        %v1421 = vcombine.low %v1365, %v1369
        %v1423 = vunpack.c.l.s4 1983009808
        %v1424 = vunpack.c.0.s8 %v1423
        %v1425 = vlaneseq
        %v1426 = vshrl.u32 %v1425, 7
        %v1427 = vsub.s32 %v1424, %v1426
        %v1428 = vrot.slane %v1421, %v1427
        %v1429 = vcombine.low %v1420, %v1428
        %v1430 = vcombine.high %v1420, %v1428
        %v1432 = vunpack.c.l.s4 1934713408
        %v1433 = vunpack.c.0.s8 %v1432
        %v1434 = vlaneseq
        %v1435 = vshrl.u32 %v1434, 7
        %v1436 = vsub.s32 %v1433, %v1435
        %v1437 = vrot.slane %v1429, %v1436
        %v1439 = vunpack.c.l.s4 1934713408
        %v1440 = vunpack.c.0.s8 %v1439
        %v1441 = vlaneseq
        %v1442 = vshrl.u32 %v1441, 7
        %v1443 = vsub.s32 %v1440, %v1442
        %v1444 = vrot.slane %v1430, %v1443
        %v1445 = vcombine.high %v1437, 0
        %v1446 = vcombine.high %v1444, 0
        %v1449 = vpack.i.b16 %v1437, %v1403
        %v1450 = vshrl.u32 %v1403, 16
        %v1451 = vshrl.u32 %v1437, 16
        %v1452 = vpack.i.b16 %v1451, %v1450
        %v1455 = vpack.i.b16 %v1445, %v1411
        %v1456 = vshrl.u32 %v1411, 16
        %v1457 = vshrl.u32 %v1445, 16
        %v1458 = vpack.i.b16 %v1457, %v1456
        %v1461 = vpack.i.b16 %v1444, %v1410
        %v1462 = vshrl.u32 %v1410, 16
        %v1463 = vshrl.u32 %v1444, 16
        %v1464 = vpack.i.b16 %v1463, %v1462
        %v1467 = vpack.i.b16 %v1446, %v1412
        %v1468 = vshrl.u32 %v1412, 16
        %v1469 = vshrl.u32 %v1446, 16
        %v1470 = vpack.i.b16 %v1469, %v1468
        %1471 = vxpose.xlu0.c.b16.start [1/8] %v1370, 128
        %1472 = vxpose.xlu0.c.b16.cont [2/8] 0, 128
        %1473 = vxpose.xlu0.c.b16.cont [3/8] 0, 128
        %1474 = vxpose.xlu0.c.b16.cont [4/8] 0, 128
        %1475 = vxpose.xlu0.c.b16.cont [5/8] 0, 128
        %1476 = vxpose.xlu0.c.b16.cont [6/8] 0, 128
        %1477 = vxpose.xlu0.c.b16.cont [7/8] 0, 128
        %1478 = vxpose.xlu0.c.b16.end [8/8] 0, 128
        %v1479 = vpop.trf.xlu0
        %v1480 = vpop.trf.xlu0
        %v1481 = vpop.trf.xlu0
        %v1482 = vpop.trf.xlu0
        %v1483 = vpop.trf.xlu0
        %v1484 = vpop.trf.xlu0
        %v1485 = vpop.trf.xlu0
        %v1486 = vpop.trf.xlu0
        %1487 = vxpose.xlu0.c.b16.start [1/8] %v1371, 128
        %1488 = vxpose.xlu0.c.b16.cont [2/8] 0, 128
        %1489 = vxpose.xlu0.c.b16.cont [3/8] 0, 128
        %1490 = vxpose.xlu0.c.b16.cont [4/8] 0, 128
        %1491 = vxpose.xlu0.c.b16.cont [5/8] 0, 128
        %1492 = vxpose.xlu0.c.b16.cont [6/8] 0, 128
        %1493 = vxpose.xlu0.c.b16.cont [7/8] 0, 128
        %1494 = vxpose.xlu0.c.b16.end [8/8] 0, 128
        %v1495 = vpop.trf.xlu0
        %v1496 = vpop.trf.xlu0
        %v1497 = vpop.trf.xlu0
        %v1498 = vpop.trf.xlu0
        %v1499 = vpop.trf.xlu0
        %v1500 = vpop.trf.xlu0
        %v1501 = vpop.trf.xlu0
        %v1502 = vpop.trf.xlu0
        %1503 = vxpose.xlu0.c.b16.start [1/8] %v1372, 128
        %1504 = vxpose.xlu0.c.b16.cont [2/8] 0, 128
        %1505 = vxpose.xlu0.c.b16.cont [3/8] 0, 128
        %1506 = vxpose.xlu0.c.b16.cont [4/8] 0, 128
        %1507 = vxpose.xlu0.c.b16.cont [5/8] 0, 128
        %1508 = vxpose.xlu0.c.b16.cont [6/8] 0, 128
        %1509 = vxpose.xlu0.c.b16.cont [7/8] 0, 128
        %1510 = vxpose.xlu0.c.b16.end [8/8] 0, 128
        %v1511 = vpop.trf.xlu0
        %v1512 = vpop.trf.xlu0
        %v1513 = vpop.trf.xlu0
        %v1514 = vpop.trf.xlu0
        %v1515 = vpop.trf.xlu0
        %v1516 = vpop.trf.xlu0
        %v1517 = vpop.trf.xlu0
        %v1518 = vpop.trf.xlu0
        %1519 = vxpose.xlu0.c.b16.start [1/8] %v1373, 128
        %1520 = vxpose.xlu0.c.b16.cont [2/8] 0, 128
        %1521 = vxpose.xlu0.c.b16.cont [3/8] 0, 128
        %1522 = vxpose.xlu0.c.b16.cont [4/8] 0, 128
        %1523 = vxpose.xlu0.c.b16.cont [5/8] 0, 128
        %1524 = vxpose.xlu0.c.b16.cont [6/8] 0, 128
        %1525 = vxpose.xlu0.c.b16.cont [7/8] 0, 128
        %1526 = vxpose.xlu0.c.b16.end [8/8] 0, 128
        %v1527 = vpop.trf.xlu0
        %v1528 = vpop.trf.xlu0
        %v1529 = vpop.trf.xlu0
        %v1530 = vpop.trf.xlu0
        %v1531 = vpop.trf.xlu0
        %v1532 = vpop.trf.xlu0
        %v1533 = vpop.trf.xlu0
        %v1534 = vpop.trf.xlu0
        %1535 = vxpose.xlu0.c.b16.start [1/8] %v1374, 128
        %1536 = vxpose.xlu0.c.b16.cont [2/8] 0, 128
        %1537 = vxpose.xlu0.c.b16.cont [3/8] 0, 128
        %1538 = vxpose.xlu0.c.b16.cont [4/8] 0, 128
        %1539 = vxpose.xlu0.c.b16.cont [5/8] 0, 128
        %1540 = vxpose.xlu0.c.b16.cont [6/8] 0, 128
        %1541 = vxpose.xlu0.c.b16.cont [7/8] 0, 128
        %1542 = vxpose.xlu0.c.b16.end [8/8] 0, 128
        %v1543 = vpop.trf.xlu0
        %v1544 = vpop.trf.xlu0
        %v1545 = vpop.trf.xlu0
        %v1546 = vpop.trf.xlu0
        %v1547 = vpop.trf.xlu0
        %v1548 = vpop.trf.xlu0
        %v1549 = vpop.trf.xlu0
        %v1550 = vpop.trf.xlu0
        %1551 = vxpose.xlu0.c.b16.start [1/8] %v1375, 128
        %1552 = vxpose.xlu0.c.b16.cont [2/8] 0, 128
        %1553 = vxpose.xlu0.c.b16.cont [3/8] 0, 128
        %1554 = vxpose.xlu0.c.b16.cont [4/8] 0, 128
        %1555 = vxpose.xlu0.c.b16.cont [5/8] 0, 128
        %1556 = vxpose.xlu0.c.b16.cont [6/8] 0, 128
        %1557 = vxpose.xlu0.c.b16.cont [7/8] 0, 128
        %1558 = vxpose.xlu0.c.b16.end [8/8] 0, 128
        %v1559 = vpop.trf.xlu0
        %v1560 = vpop.trf.xlu0
        %v1561 = vpop.trf.xlu0
        %v1562 = vpop.trf.xlu0
        %v1563 = vpop.trf.xlu0
        %v1564 = vpop.trf.xlu0
        %v1565 = vpop.trf.xlu0
        %v1566 = vpop.trf.xlu0
        %1567 = vxpose.xlu0.c.b16.start [1/8] %v1376, 128
        %1568 = vxpose.xlu0.c.b16.cont [2/8] 0, 128
        %1569 = vxpose.xlu0.c.b16.cont [3/8] 0, 128
        %1570 = vxpose.xlu0.c.b16.cont [4/8] 0, 128
        %1571 = vxpose.xlu0.c.b16.cont [5/8] 0, 128
        %1572 = vxpose.xlu0.c.b16.cont [6/8] 0, 128
        %1573 = vxpose.xlu0.c.b16.cont [7/8] 0, 128
        %1574 = vxpose.xlu0.c.b16.end [8/8] 0, 128
        %v1575 = vpop.trf.xlu0
        %v1576 = vpop.trf.xlu0
        %v1577 = vpop.trf.xlu0
        %v1578 = vpop.trf.xlu0
        %v1579 = vpop.trf.xlu0
        %v1580 = vpop.trf.xlu0
        %v1581 = vpop.trf.xlu0
        %v1582 = vpop.trf.xlu0
        %1583 = vxpose.xlu0.c.b16.start [1/8] %v1377, 128
        %1584 = vxpose.xlu0.c.b16.cont [2/8] 0, 128
        %1585 = vxpose.xlu0.c.b16.cont [3/8] 0, 128
        %1586 = vxpose.xlu0.c.b16.cont [4/8] 0, 128
        %1587 = vxpose.xlu0.c.b16.cont [5/8] 0, 128
        %1588 = vxpose.xlu0.c.b16.cont [6/8] 0, 128
        %1589 = vxpose.xlu0.c.b16.cont [7/8] 0, 128
        %1590 = vxpose.xlu0.c.b16.end [8/8] 0, 128
        %v1591 = vpop.trf.xlu0
        %v1592 = vpop.trf.xlu0
        %v1593 = vpop.trf.xlu0
        %v1594 = vpop.trf.xlu0
        %v1595 = vpop.trf.xlu0
        %v1596 = vpop.trf.xlu0
        %v1597 = vpop.trf.xlu0
        %v1598 = vpop.trf.xlu0
        %v1601 = vpack.i.b16 %v1495, %v1479
        %v1603 = vshrl.u32 %v1479, 16
        %v1604 = vshrl.u32 %v1495, 16
        %v1605 = vpack.i.b16 %v1604, %v1603
        %v1609 = vpack.i.b16 %v1527, %v1511
        %v1611 = vshrl.u32 %v1511, 16
        %v1612 = vshrl.u32 %v1527, 16
        %v1613 = vpack.i.b16 %v1612, %v1611
        %v1617 = vpack.i.b16 %v1559, %v1543
        %v1619 = vshrl.u32 %v1543, 16
        %v1620 = vshrl.u32 %v1559, 16
        %v1621 = vpack.i.b16 %v1620, %v1619
        %v1625 = vpack.i.b16 %v1591, %v1575
        %v1627 = vshrl.u32 %v1575, 16
        %v1628 = vshrl.u32 %v1591, 16
        %v1629 = vpack.i.b16 %v1628, %v1627
        %v1631 = vcombine.low %v1601, %v1617
        %v1632 = vcombine.high %v1601, %v1617
        %v1634 = vunpack.c.l.s4 1983009808
        %v1635 = vunpack.c.0.s8 %v1634
        %v1636 = vlaneseq
        %v1637 = vshrl.u32 %v1636, 7
        %v1638 = vsub.s32 %v1635, %v1637
        %v1639 = vrot.slane %v1631, %v1638
        %v1641 = vunpack.c.l.s4 1983009808
        %v1642 = vunpack.c.0.s8 %v1641
        %v1643 = vlaneseq
        %v1644 = vshrl.u32 %v1643, 7
        %v1645 = vsub.s32 %v1642, %v1644
        %v1646 = vrot.slane %v1632, %v1645
        %v1647 = vcombine.low %v1609, %v1625
        %v1648 = vcombine.high %v1609, %v1625
        %v1650 = vunpack.c.l.s4 1983009808
        %v1651 = vunpack.c.0.s8 %v1650
        %v1652 = vlaneseq
        %v1653 = vshrl.u32 %v1652, 7
        %v1654 = vsub.s32 %v1651, %v1653
        %v1655 = vrot.slane %v1647, %v1654
        %v1657 = vunpack.c.l.s4 1983009808
        %v1658 = vunpack.c.0.s8 %v1657
        %v1659 = vlaneseq
        %v1660 = vshrl.u32 %v1659, 7
        %v1661 = vsub.s32 %v1658, %v1660
        %v1662 = vrot.slane %v1648, %v1661
        %v1663 = vcombine.low %v1639, %v1655
        %v1664 = vcombine.high %v1639, %v1655
        %v1666 = vunpack.c.l.s4 1934713408
        %v1667 = vunpack.c.0.s8 %v1666
        %v1668 = vlaneseq
        %v1669 = vshrl.u32 %v1668, 7
        %v1670 = vsub.s32 %v1667, %v1669
        %v1671 = vrot.slane %v1663, %v1670
        %v1673 = vunpack.c.l.s4 1934713408
        %v1674 = vunpack.c.0.s8 %v1673
        %v1675 = vlaneseq
        %v1676 = vshrl.u32 %v1675, 7
        %v1677 = vsub.s32 %v1674, %v1676
        %v1678 = vrot.slane %v1664, %v1677
        %v1679 = vcombine.low %v1646, %v1662
        %v1680 = vcombine.high %v1646, %v1662
        %v1682 = vunpack.c.l.s4 1934713408
        %v1683 = vunpack.c.0.s8 %v1682
        %v1684 = vlaneseq
        %v1685 = vshrl.u32 %v1684, 7
        %v1686 = vsub.s32 %v1683, %v1685
        %v1687 = vrot.slane %v1679, %v1686
        %v1689 = vunpack.c.l.s4 1934713408
        %v1690 = vunpack.c.0.s8 %v1689
        %v1691 = vlaneseq
        %v1692 = vshrl.u32 %v1691, 7
        %v1693 = vsub.s32 %v1690, %v1692
        %v1694 = vrot.slane %v1680, %v1693
        %v1695 = vcombine.high %v1671, 0
        %v1696 = vcombine.high %v1678, 0
        %v1697 = vcombine.high %v1687, 0
        %v1698 = vcombine.high %v1694, 0
        %v1699 = vcombine.low %v1605, %v1621
        %v1700 = vcombine.high %v1605, %v1621
        %v1702 = vunpack.c.l.s4 1983009808
        %v1703 = vunpack.c.0.s8 %v1702
        %v1704 = vlaneseq
        %v1705 = vshrl.u32 %v1704, 7
        %v1706 = vsub.s32 %v1703, %v1705
        %v1707 = vrot.slane %v1699, %v1706
        %v1709 = vunpack.c.l.s4 1983009808
        %v1710 = vunpack.c.0.s8 %v1709
        %v1711 = vlaneseq
        %v1712 = vshrl.u32 %v1711, 7
        %v1713 = vsub.s32 %v1710, %v1712
        %v1714 = vrot.slane %v1700, %v1713
        %v1715 = vcombine.low %v1613, %v1629
        %v1716 = vcombine.high %v1613, %v1629
        %v1718 = vunpack.c.l.s4 1983009808
        %v1719 = vunpack.c.0.s8 %v1718
        %v1720 = vlaneseq
        %v1721 = vshrl.u32 %v1720, 7
        %v1722 = vsub.s32 %v1719, %v1721
        %v1723 = vrot.slane %v1715, %v1722
        %v1725 = vunpack.c.l.s4 1983009808
        %v1726 = vunpack.c.0.s8 %v1725
        %v1727 = vlaneseq
        %v1728 = vshrl.u32 %v1727, 7
        %v1729 = vsub.s32 %v1726, %v1728
        %v1730 = vrot.slane %v1716, %v1729
        %v1731 = vcombine.low %v1707, %v1723
        %v1732 = vcombine.high %v1707, %v1723
        %v1734 = vunpack.c.l.s4 1934713408
        %v1735 = vunpack.c.0.s8 %v1734
        %v1736 = vlaneseq
        %v1737 = vshrl.u32 %v1736, 7
        %v1738 = vsub.s32 %v1735, %v1737
        %v1739 = vrot.slane %v1731, %v1738
        %v1741 = vunpack.c.l.s4 1934713408
        %v1742 = vunpack.c.0.s8 %v1741
        %v1743 = vlaneseq
        %v1744 = vshrl.u32 %v1743, 7
        %v1745 = vsub.s32 %v1742, %v1744
        %v1746 = vrot.slane %v1732, %v1745
        %v1747 = vcombine.low %v1714, %v1730
        %v1748 = vcombine.high %v1714, %v1730
        %v1750 = vunpack.c.l.s4 1934713408
        %v1751 = vunpack.c.0.s8 %v1750
        %v1752 = vlaneseq
        %v1753 = vshrl.u32 %v1752, 7
        %v1754 = vsub.s32 %v1751, %v1753
        %v1755 = vrot.slane %v1747, %v1754
        %v1757 = vunpack.c.l.s4 1934713408
        %v1758 = vunpack.c.0.s8 %v1757
        %v1759 = vlaneseq
        %v1760 = vshrl.u32 %v1759, 7
        %v1761 = vsub.s32 %v1758, %v1760
        %v1762 = vrot.slane %v1748, %v1761
        %v1763 = vcombine.high %v1739, 0
        %v1764 = vcombine.high %v1746, 0
        %v1765 = vcombine.high %v1755, 0
        %v1766 = vcombine.high %v1762, 0
        %1767 = vxpose.xlu0.c.b16.start [1/8] %v1671, 128
        %1768 = vxpose.xlu0.c.b16.cont [2/8] 0, 128
        %1769 = vxpose.xlu0.c.b16.cont [3/8] 0, 128
        %1770 = vxpose.xlu0.c.b16.cont [4/8] 0, 128
        %1771 = vxpose.xlu0.c.b16.cont [5/8] 0, 128
        %1772 = vxpose.xlu0.c.b16.cont [6/8] 0, 128
        %1773 = vxpose.xlu0.c.b16.cont [7/8] 0, 128
        %1774 = vxpose.xlu0.c.b16.end [8/8] 0, 128
        %v1775 = vpop.trf.xlu0
        %v1776 = vpop.trf.xlu0
        %v1777 = vpop.trf.xlu0
        %v1778 = vpop.trf.xlu0
        %v1779 = vpop.trf.xlu0
        %v1780 = vpop.trf.xlu0
        %v1781 = vpop.trf.xlu0
        %v1782 = vpop.trf.xlu0
        %1783 = vxpose.xlu0.c.b16.start [1/8] %v1739, 128
        %1784 = vxpose.xlu0.c.b16.cont [2/8] 0, 128
        %1785 = vxpose.xlu0.c.b16.cont [3/8] 0, 128
        %1786 = vxpose.xlu0.c.b16.cont [4/8] 0, 128
        %1787 = vxpose.xlu0.c.b16.cont [5/8] 0, 128
        %1788 = vxpose.xlu0.c.b16.cont [6/8] 0, 128
        %1789 = vxpose.xlu0.c.b16.cont [7/8] 0, 128
        %1790 = vxpose.xlu0.c.b16.end [8/8] 0, 128
        %v1791 = vpop.trf.xlu0
        %v1792 = vpop.trf.xlu0
        %v1793 = vpop.trf.xlu0
        %v1794 = vpop.trf.xlu0
        %v1795 = vpop.trf.xlu0
        %v1796 = vpop.trf.xlu0
        %v1797 = vpop.trf.xlu0
        %v1798 = vpop.trf.xlu0
        %1799 = vxpose.xlu0.c.b16.start [1/8] %v1695, 128
        %1800 = vxpose.xlu0.c.b16.cont [2/8] 0, 128
        %1801 = vxpose.xlu0.c.b16.cont [3/8] 0, 128
        %1802 = vxpose.xlu0.c.b16.cont [4/8] 0, 128
        %1803 = vxpose.xlu0.c.b16.cont [5/8] 0, 128
        %1804 = vxpose.xlu0.c.b16.cont [6/8] 0, 128
        %1805 = vxpose.xlu0.c.b16.cont [7/8] 0, 128
        %1806 = vxpose.xlu0.c.b16.end [8/8] 0, 128
        %v1807 = vpop.trf.xlu0
        %v1808 = vpop.trf.xlu0
        %v1809 = vpop.trf.xlu0
        %v1810 = vpop.trf.xlu0
        %v1811 = vpop.trf.xlu0
        %v1812 = vpop.trf.xlu0
        %v1813 = vpop.trf.xlu0
        %v1814 = vpop.trf.xlu0
        %1815 = vxpose.xlu0.c.b16.start [1/8] %v1763, 128
        %1816 = vxpose.xlu0.c.b16.cont [2/8] 0, 128
        %1817 = vxpose.xlu0.c.b16.cont [3/8] 0, 128
        %1818 = vxpose.xlu0.c.b16.cont [4/8] 0, 128
        %1819 = vxpose.xlu0.c.b16.cont [5/8] 0, 128
        %1820 = vxpose.xlu0.c.b16.cont [6/8] 0, 128
        %1821 = vxpose.xlu0.c.b16.cont [7/8] 0, 128
        %1822 = vxpose.xlu0.c.b16.end [8/8] 0, 128
        %v1823 = vpop.trf.xlu0
        %v1824 = vpop.trf.xlu0
        %v1825 = vpop.trf.xlu0
        %v1826 = vpop.trf.xlu0
        %v1827 = vpop.trf.xlu0
        %v1828 = vpop.trf.xlu0
        %v1829 = vpop.trf.xlu0
        %v1830 = vpop.trf.xlu0
        %1831 = vxpose.xlu0.c.b16.start [1/8] %v1678, 128
        %1832 = vxpose.xlu0.c.b16.cont [2/8] 0, 128
        %1833 = vxpose.xlu0.c.b16.cont [3/8] 0, 128
        %1834 = vxpose.xlu0.c.b16.cont [4/8] 0, 128
        %1835 = vxpose.xlu0.c.b16.cont [5/8] 0, 128
        %1836 = vxpose.xlu0.c.b16.cont [6/8] 0, 128
        %1837 = vxpose.xlu0.c.b16.cont [7/8] 0, 128
        %1838 = vxpose.xlu0.c.b16.end [8/8] 0, 128
        %v1839 = vpop.trf.xlu0
        %v1840 = vpop.trf.xlu0
        %v1841 = vpop.trf.xlu0
        %v1842 = vpop.trf.xlu0
        %v1843 = vpop.trf.xlu0
        %v1844 = vpop.trf.xlu0
        %v1845 = vpop.trf.xlu0
        %v1846 = vpop.trf.xlu0
        %1847 = vxpose.xlu0.c.b16.start [1/8] %v1746, 128
        %1848 = vxpose.xlu0.c.b16.cont [2/8] 0, 128
        %1849 = vxpose.xlu0.c.b16.cont [3/8] 0, 128
        %1850 = vxpose.xlu0.c.b16.cont [4/8] 0, 128
        %1851 = vxpose.xlu0.c.b16.cont [5/8] 0, 128
        %1852 = vxpose.xlu0.c.b16.cont [6/8] 0, 128
        %1853 = vxpose.xlu0.c.b16.cont [7/8] 0, 128
        %1854 = vxpose.xlu0.c.b16.end [8/8] 0, 128
        %v1855 = vpop.trf.xlu0
        %v1856 = vpop.trf.xlu0
        %v1857 = vpop.trf.xlu0
        %v1858 = vpop.trf.xlu0
        %v1859 = vpop.trf.xlu0
        %v1860 = vpop.trf.xlu0
        %v1861 = vpop.trf.xlu0
        %v1862 = vpop.trf.xlu0
        %1863 = vxpose.xlu0.c.b16.start [1/8] %v1696, 128
        %1864 = vxpose.xlu0.c.b16.cont [2/8] 0, 128
        %1865 = vxpose.xlu0.c.b16.cont [3/8] 0, 128
        %1866 = vxpose.xlu0.c.b16.cont [4/8] 0, 128
        %1867 = vxpose.xlu0.c.b16.cont [5/8] 0, 128
        %1868 = vxpose.xlu0.c.b16.cont [6/8] 0, 128
        %1869 = vxpose.xlu0.c.b16.cont [7/8] 0, 128
        %1870 = vxpose.xlu0.c.b16.end [8/8] 0, 128
        %v1871 = vpop.trf.xlu0
        %v1872 = vpop.trf.xlu0
        %v1873 = vpop.trf.xlu0
        %v1874 = vpop.trf.xlu0
        %v1875 = vpop.trf.xlu0
        %v1876 = vpop.trf.xlu0
        %v1877 = vpop.trf.xlu0
        %v1878 = vpop.trf.xlu0
        %1879 = vxpose.xlu0.c.b16.start [1/8] %v1764, 128
        %1880 = vxpose.xlu0.c.b16.cont [2/8] 0, 128
        %1881 = vxpose.xlu0.c.b16.cont [3/8] 0, 128
        %1882 = vxpose.xlu0.c.b16.cont [4/8] 0, 128
        %1883 = vxpose.xlu0.c.b16.cont [5/8] 0, 128
        %1884 = vxpose.xlu0.c.b16.cont [6/8] 0, 128
        %1885 = vxpose.xlu0.c.b16.cont [7/8] 0, 128
        %1886 = vxpose.xlu0.c.b16.end [8/8] 0, 128
        %v1887 = vpop.trf.xlu0
        %v1888 = vpop.trf.xlu0
        %v1889 = vpop.trf.xlu0
        %v1890 = vpop.trf.xlu0
        %v1891 = vpop.trf.xlu0
        %v1892 = vpop.trf.xlu0
        %v1893 = vpop.trf.xlu0
        %v1894 = vpop.trf.xlu0
        %1895 = vxpose.xlu0.c.b16.start [1/8] %v1687, 128
        %1896 = vxpose.xlu0.c.b16.cont [2/8] 0, 128
        %1897 = vxpose.xlu0.c.b16.cont [3/8] 0, 128
        %1898 = vxpose.xlu0.c.b16.cont [4/8] 0, 128
        %1899 = vxpose.xlu0.c.b16.cont [5/8] 0, 128
        %1900 = vxpose.xlu0.c.b16.cont [6/8] 0, 128
        %1901 = vxpose.xlu0.c.b16.cont [7/8] 0, 128
        %1902 = vxpose.xlu0.c.b16.end [8/8] 0, 128
        %v1903 = vpop.trf.xlu0
        %v1904 = vpop.trf.xlu0
        %v1905 = vpop.trf.xlu0
        %v1906 = vpop.trf.xlu0
        %v1907 = vpop.trf.xlu0
        %v1908 = vpop.trf.xlu0
        %v1909 = vpop.trf.xlu0
        %v1910 = vpop.trf.xlu0
        %1911 = vxpose.xlu0.c.b16.start [1/8] %v1755, 128
        %1912 = vxpose.xlu0.c.b16.cont [2/8] 0, 128
        %1913 = vxpose.xlu0.c.b16.cont [3/8] 0, 128
        %1914 = vxpose.xlu0.c.b16.cont [4/8] 0, 128
        %1915 = vxpose.xlu0.c.b16.cont [5/8] 0, 128
        %1916 = vxpose.xlu0.c.b16.cont [6/8] 0, 128
        %1917 = vxpose.xlu0.c.b16.cont [7/8] 0, 128
        %1918 = vxpose.xlu0.c.b16.end [8/8] 0, 128
        %v1919 = vpop.trf.xlu0
        %v1920 = vpop.trf.xlu0
        %v1921 = vpop.trf.xlu0
        %v1922 = vpop.trf.xlu0
        %v1923 = vpop.trf.xlu0
        %v1924 = vpop.trf.xlu0
        %v1925 = vpop.trf.xlu0
        %v1926 = vpop.trf.xlu0
        %1927 = vxpose.xlu0.c.b16.start [1/8] %v1697, 128
        %1928 = vxpose.xlu0.c.b16.cont [2/8] 0, 128
        %1929 = vxpose.xlu0.c.b16.cont [3/8] 0, 128
        %1930 = vxpose.xlu0.c.b16.cont [4/8] 0, 128
        %1931 = vxpose.xlu0.c.b16.cont [5/8] 0, 128
        %1932 = vxpose.xlu0.c.b16.cont [6/8] 0, 128
        %1933 = vxpose.xlu0.c.b16.cont [7/8] 0, 128
        %1934 = vxpose.xlu0.c.b16.end [8/8] 0, 128
        %v1935 = vpop.trf.xlu0
        %v1936 = vpop.trf.xlu0
        %v1937 = vpop.trf.xlu0
        %v1938 = vpop.trf.xlu0
        %v1939 = vpop.trf.xlu0
        %v1940 = vpop.trf.xlu0
        %v1941 = vpop.trf.xlu0
        %v1942 = vpop.trf.xlu0
        %1943 = vxpose.xlu0.c.b16.start [1/8] %v1765, 128
        %1944 = vxpose.xlu0.c.b16.cont [2/8] 0, 128
        %1945 = vxpose.xlu0.c.b16.cont [3/8] 0, 128
        %1946 = vxpose.xlu0.c.b16.cont [4/8] 0, 128
        %1947 = vxpose.xlu0.c.b16.cont [5/8] 0, 128
        %1948 = vxpose.xlu0.c.b16.cont [6/8] 0, 128
        %1949 = vxpose.xlu0.c.b16.cont [7/8] 0, 128
        %1950 = vxpose.xlu0.c.b16.end [8/8] 0, 128
        %v1951 = vpop.trf.xlu0
        %v1952 = vpop.trf.xlu0
        %v1953 = vpop.trf.xlu0
        %v1954 = vpop.trf.xlu0
        %v1955 = vpop.trf.xlu0
        %v1956 = vpop.trf.xlu0
        %v1957 = vpop.trf.xlu0
        %v1958 = vpop.trf.xlu0
        %1959 = vxpose.xlu0.c.b16.start [1/8] %v1694, 128
        %1960 = vxpose.xlu0.c.b16.cont [2/8] 0, 128
        %1961 = vxpose.xlu0.c.b16.cont [3/8] 0, 128
        %1962 = vxpose.xlu0.c.b16.cont [4/8] 0, 128
        %1963 = vxpose.xlu0.c.b16.cont [5/8] 0, 128
        %1964 = vxpose.xlu0.c.b16.cont [6/8] 0, 128
        %1965 = vxpose.xlu0.c.b16.cont [7/8] 0, 128
        %1966 = vxpose.xlu0.c.b16.end [8/8] 0, 128
        %v1967 = vpop.trf.xlu0
        %v1968 = vpop.trf.xlu0
        %v1969 = vpop.trf.xlu0
        %v1970 = vpop.trf.xlu0
        %v1971 = vpop.trf.xlu0
        %v1972 = vpop.trf.xlu0
        %v1973 = vpop.trf.xlu0
        %v1974 = vpop.trf.xlu0
        %1975 = vxpose.xlu0.c.b16.start [1/8] %v1762, 128
        %1976 = vxpose.xlu0.c.b16.cont [2/8] 0, 128
        %1977 = vxpose.xlu0.c.b16.cont [3/8] 0, 128
        %1978 = vxpose.xlu0.c.b16.cont [4/8] 0, 128
        %1979 = vxpose.xlu0.c.b16.cont [5/8] 0, 128
        %1980 = vxpose.xlu0.c.b16.cont [6/8] 0, 128
        %1981 = vxpose.xlu0.c.b16.cont [7/8] 0, 128
        %1982 = vxpose.xlu0.c.b16.end [8/8] 0, 128
        %v1983 = vpop.trf.xlu0
        %v1984 = vpop.trf.xlu0
        %v1985 = vpop.trf.xlu0
        %v1986 = vpop.trf.xlu0
        %v1987 = vpop.trf.xlu0
        %v1988 = vpop.trf.xlu0
        %v1989 = vpop.trf.xlu0
        %v1990 = vpop.trf.xlu0
        %1991 = vxpose.xlu0.c.b16.start [1/8] %v1698, 128
        %1992 = vxpose.xlu0.c.b16.cont [2/8] 0, 128
        %1993 = vxpose.xlu0.c.b16.cont [3/8] 0, 128
        %1994 = vxpose.xlu0.c.b16.cont [4/8] 0, 128
        %1995 = vxpose.xlu0.c.b16.cont [5/8] 0, 128
        %1996 = vxpose.xlu0.c.b16.cont [6/8] 0, 128
        %1997 = vxpose.xlu0.c.b16.cont [7/8] 0, 128
        %1998 = vxpose.xlu0.c.b16.end [8/8] 0, 128
        %v1999 = vpop.trf.xlu0
        %v2000 = vpop.trf.xlu0
        %v2001 = vpop.trf.xlu0
        %v2002 = vpop.trf.xlu0
        %v2003 = vpop.trf.xlu0
        %v2004 = vpop.trf.xlu0
        %v2005 = vpop.trf.xlu0
        %v2006 = vpop.trf.xlu0
        %2007 = vxpose.xlu0.c.b16.start [1/8] %v1766, 128
        %2008 = vxpose.xlu0.c.b16.cont [2/8] 0, 128
        %2009 = vxpose.xlu0.c.b16.cont [3/8] 0, 128
        %2010 = vxpose.xlu0.c.b16.cont [4/8] 0, 128
        %2011 = vxpose.xlu0.c.b16.cont [5/8] 0, 128
        %2012 = vxpose.xlu0.c.b16.cont [6/8] 0, 128
        %2013 = vxpose.xlu0.c.b16.cont [7/8] 0, 128
        %2014 = vxpose.xlu0.c.b16.end [8/8] 0, 128
        %v2015 = vpop.trf.xlu0
        %v2016 = vpop.trf.xlu0
        %v2017 = vpop.trf.xlu0
        %v2018 = vpop.trf.xlu0
        %v2019 = vpop.trf.xlu0
        %v2020 = vpop.trf.xlu0
        %v2021 = vpop.trf.xlu0
        %v2022 = vpop.trf.xlu0
        %v2023 = vcombine.low %v1775, %v1839
        %v2025 = vunpack.c.l.s4 1983009808
        %v2026 = vunpack.c.0.s8 %v2025
        %v2027 = vlaneseq
        %v2028 = vshrl.u32 %v2027, 7
        %v2029 = vsub.s32 %v2026, %v2028
        %v2030 = vrot.slane %v2023, %v2029
        %v2031 = vcombine.low %v1807, %v1871
        %v2033 = vunpack.c.l.s4 1983009808
        %v2034 = vunpack.c.0.s8 %v2033
        %v2035 = vlaneseq
        %v2036 = vshrl.u32 %v2035, 7
        %v2037 = vsub.s32 %v2034, %v2036
        %v2038 = vrot.slane %v2031, %v2037
        %v2039 = vcombine.low %v1903, %v1967
        %v2041 = vunpack.c.l.s4 1983009808
        %v2042 = vunpack.c.0.s8 %v2041
        %v2043 = vlaneseq
        %v2044 = vshrl.u32 %v2043, 7
        %v2045 = vsub.s32 %v2042, %v2044
        %v2046 = vrot.slane %v2039, %v2045
        %v2047 = vcombine.low %v1935, %v1999
        %v2049 = vunpack.c.l.s4 1983009808
        %v2050 = vunpack.c.0.s8 %v2049
        %v2051 = vlaneseq
        %v2052 = vshrl.u32 %v2051, 7
        %v2053 = vsub.s32 %v2050, %v2052
        %v2054 = vrot.slane %v2047, %v2053
        %v2055 = vcombine.low %v2030, %v2038
        %v2056 = vcombine.high %v2030, %v2038
        %v2058 = vunpack.c.l.s4 1934713408
        %v2059 = vunpack.c.0.s8 %v2058
        %v2060 = vlaneseq
        %v2061 = vshrl.u32 %v2060, 7
        %v2062 = vsub.s32 %v2059, %v2061
        %v2063 = vrot.slane %v2055, %v2062
        %v2065 = vunpack.c.l.s4 1934713408
        %v2066 = vunpack.c.0.s8 %v2065
        %v2067 = vlaneseq
        %v2068 = vshrl.u32 %v2067, 7
        %v2069 = vsub.s32 %v2066, %v2068
        %v2070 = vrot.slane %v2056, %v2069
        %v2071 = vcombine.low %v2046, %v2054
        %v2072 = vcombine.high %v2046, %v2054
        %v2074 = vunpack.c.l.s4 1934713408
        %v2075 = vunpack.c.0.s8 %v2074
        %v2076 = vlaneseq
        %v2077 = vshrl.u32 %v2076, 7
        %v2078 = vsub.s32 %v2075, %v2077
        %v2079 = vrot.slane %v2071, %v2078
        %v2081 = vunpack.c.l.s4 1934713408
        %v2082 = vunpack.c.0.s8 %v2081
        %v2083 = vlaneseq
        %v2084 = vshrl.u32 %v2083, 7
        %v2085 = vsub.s32 %v2082, %v2084
        %v2086 = vrot.slane %v2072, %v2085
        %v2087 = vcombine.low %v2063, %v2079
        %v2088 = vcombine.high %v2063, %v2079
        %v2089 = vcombine.low %v2070, %v2086
        %v2090 = vcombine.high %v2070, %v2086
        %v2091 = vcombine.low %v1791, %v1855
        %v2093 = vunpack.c.l.s4 1983009808
        %v2094 = vunpack.c.0.s8 %v2093
        %v2095 = vlaneseq
        %v2096 = vshrl.u32 %v2095, 7
        %v2097 = vsub.s32 %v2094, %v2096
        %v2098 = vrot.slane %v2091, %v2097
        %v2099 = vcombine.low %v1823, %v1887
        %v2101 = vunpack.c.l.s4 1983009808
        %v2102 = vunpack.c.0.s8 %v2101
        %v2103 = vlaneseq
        %v2104 = vshrl.u32 %v2103, 7
        %v2105 = vsub.s32 %v2102, %v2104
        %v2106 = vrot.slane %v2099, %v2105
        %v2107 = vcombine.low %v1919, %v1983
        %v2109 = vunpack.c.l.s4 1983009808
        %v2110 = vunpack.c.0.s8 %v2109
        %v2111 = vlaneseq
        %v2112 = vshrl.u32 %v2111, 7
        %v2113 = vsub.s32 %v2110, %v2112
        %v2114 = vrot.slane %v2107, %v2113
        %v2115 = vcombine.low %v1951, %v2015
        %v2117 = vunpack.c.l.s4 1983009808
        %v2118 = vunpack.c.0.s8 %v2117
        %v2119 = vlaneseq
        %v2120 = vshrl.u32 %v2119, 7
        %v2121 = vsub.s32 %v2118, %v2120
        %v2122 = vrot.slane %v2115, %v2121
        %v2123 = vcombine.low %v2098, %v2106
        %v2124 = vcombine.high %v2098, %v2106
        %v2126 = vunpack.c.l.s4 1934713408
        %v2127 = vunpack.c.0.s8 %v2126
        %v2128 = vlaneseq
        %v2129 = vshrl.u32 %v2128, 7
        %v2130 = vsub.s32 %v2127, %v2129
        %v2131 = vrot.slane %v2123, %v2130
        %v2133 = vunpack.c.l.s4 1934713408
        %v2134 = vunpack.c.0.s8 %v2133
        %v2135 = vlaneseq
        %v2136 = vshrl.u32 %v2135, 7
        %v2137 = vsub.s32 %v2134, %v2136
        %v2138 = vrot.slane %v2124, %v2137
        %v2139 = vcombine.low %v2114, %v2122
        %v2140 = vcombine.high %v2114, %v2122
        %v2142 = vunpack.c.l.s4 1934713408
        %v2143 = vunpack.c.0.s8 %v2142
        %v2144 = vlaneseq
        %v2145 = vshrl.u32 %v2144, 7
        %v2146 = vsub.s32 %v2143, %v2145
        %v2147 = vrot.slane %v2139, %v2146
        %v2149 = vunpack.c.l.s4 1934713408
        %v2150 = vunpack.c.0.s8 %v2149
        %v2151 = vlaneseq
        %v2152 = vshrl.u32 %v2151, 7
        %v2153 = vsub.s32 %v2150, %v2152
        %v2154 = vrot.slane %v2140, %v2153
        %v2155 = vcombine.low %v2131, %v2147
        %v2156 = vcombine.high %v2131, %v2147
        %v2157 = vcombine.low %v2138, %v2154
        %v2158 = vcombine.high %v2138, %v2154
        %v2161 = vpack.i.b16 %v2155, %v2087
        %v2163 = vshrl.u32 %v2087, 16
        %v2164 = vshrl.u32 %v2155, 16
        %v2165 = vpack.i.b16 %v2164, %v2163
        %v2169 = vpack.i.b16 %v2156, %v2088
        %v2171 = vshrl.u32 %v2088, 16
        %v2172 = vshrl.u32 %v2156, 16
        %v2173 = vpack.i.b16 %v2172, %v2171
        %v2177 = vpack.i.b16 %v2157, %v2089
        %v2179 = vshrl.u32 %v2089, 16
        %v2180 = vshrl.u32 %v2157, 16
        %v2181 = vpack.i.b16 %v2180, %v2179
        %v2185 = vpack.i.b16 %v2158, %v2090
        %v2187 = vshrl.u32 %v2090, 16
        %v2188 = vshrl.u32 %v2158, 16
        %v2189 = vpack.i.b16 %v2188, %v2187
        %vm2191 = vcmask 130048
        %v2193 = vsel %vm2191, %v1449, 0
        %2195 = vmatprep.subr.bf16.mxu0 0
        %2196 = vmatpush1.bf16.msra.mxu0 %v2161
        %2197 = vmatprep.subr.bf16.mxu0 0
        %2198 = vmatpush1.bf16.msra.mxu0 0
        %2199 = vmatprep.subr.bf16.mxu0 0
        %2200 = vmatpush1.bf16.msra.mxu0 0
        %2201 = vmatprep.subr.bf16.mxu0 0
        %2202 = vmatpush1.bf16.msra.mxu0 0
        %2203 = vmatprep.subr.bf16.mxu0 0
        %2204 = vmatpush1.bf16.msra.mxu0 0
        %2205 = vmatprep.subr.bf16.mxu0 0
        %2206 = vmatpush1.bf16.msra.mxu0 0
        %2207 = vmatprep.subr.bf16.mxu0 0
        %2208 = vmatpush1.bf16.msra.mxu0 0
        %2209 = vmatprep.subr.bf16.mxu0 0
        %2210 = vmatpush1.bf16.msra.mxu0 0
        %2211 = vmatprep.subr.bf16.mxu0 0
        %2212 = vmatpush1.bf16.msra.mxu0 0
        %2213 = vmatprep.subr.bf16.mxu0 0
        %2214 = vmatpush1.bf16.msra.mxu0 0
        %2215 = vmatprep.subr.bf16.mxu0 0
        %2216 = vmatpush1.bf16.msra.mxu0 0
        %2217 = vmatprep.subr.bf16.mxu0 0
        %2218 = vmatpush1.bf16.msra.mxu0 0
        %2219 = vmatprep.subr.bf16.mxu0 0
        %2220 = vmatpush1.bf16.msra.mxu0 0
        %2221 = vmatprep.subr.bf16.mxu0 0
        %2222 = vmatpush1.bf16.msra.mxu0 0
        %2223 = vmatprep.subr.bf16.mxu0 0
        %2224 = vmatpush1.bf16.msra.mxu0 0
        %2225 = vmatprep.subr.bf16.mxu0 0
        %2226 = vmatpush1.bf16.msra.mxu0 0
        %2227 = vmatprep.mubr.bf16.mxu0 0
        %2228 = vmatmul.mubr.bf16.gmra.mrb[0].mxu0 %v2193
        %v2229 = vpop.f32.mrb[0].mxu0
        %v2230 = vadd.f32 %v1378, %v2229
        %v2231 = vpop.f32.mrb[0].mxu0
        %v2232 = vpop.f32.mrb[0].mxu0
        %v2233 = vpop.f32.mrb[0].mxu0
        %2234 = vdwg.mxu0
        %v2236 = vsel %vm2191, %v1452, 0
        %2238 = vmatprep.subr.bf16.mxu0 0
        %2239 = vmatpush1.bf16.msra.mxu0 %v2165
        %2240 = vmatprep.subr.bf16.mxu0 0
        %2241 = vmatpush1.bf16.msra.mxu0 0
        %2242 = vmatprep.subr.bf16.mxu0 0
        %2243 = vmatpush1.bf16.msra.mxu0 0
        %2244 = vmatprep.subr.bf16.mxu0 0
        %2245 = vmatpush1.bf16.msra.mxu0 0
        %2246 = vmatprep.subr.bf16.mxu0 0
        %2247 = vmatpush1.bf16.msra.mxu0 0
        %2248 = vmatprep.subr.bf16.mxu0 0
        %2249 = vmatpush1.bf16.msra.mxu0 0
        %2250 = vmatprep.subr.bf16.mxu0 0
        %2251 = vmatpush1.bf16.msra.mxu0 0
        %2252 = vmatprep.subr.bf16.mxu0 0
        %2253 = vmatpush1.bf16.msra.mxu0 0
        %2254 = vmatprep.subr.bf16.mxu0 0
        %2255 = vmatpush1.bf16.msra.mxu0 0
        %2256 = vmatprep.subr.bf16.mxu0 0
        %2257 = vmatpush1.bf16.msra.mxu0 0
        %2258 = vmatprep.subr.bf16.mxu0 0
        %2259 = vmatpush1.bf16.msra.mxu0 0
        %2260 = vmatprep.subr.bf16.mxu0 0
        %2261 = vmatpush1.bf16.msra.mxu0 0
        %2262 = vmatprep.subr.bf16.mxu0 0
        %2263 = vmatpush1.bf16.msra.mxu0 0
        %2264 = vmatprep.subr.bf16.mxu0 0
        %2265 = vmatpush1.bf16.msra.mxu0 0
        %2266 = vmatprep.subr.bf16.mxu0 0
        %2267 = vmatpush1.bf16.msra.mxu0 0
        %2268 = vmatprep.subr.bf16.mxu0 0
        %2269 = vmatpush1.bf16.msra.mxu0 0
        %2270 = vmatprep.mubr.bf16.mxu0 0
        %2271 = vmatmul.mubr.bf16.gmra.mrb[0].mxu0 %v2236
        %v2272 = vpop.f32.mrb[0].mxu0
        %v2273 = vadd.f32 %v1378, %v2272
        %v2274 = vpop.f32.mrb[0].mxu0
        %v2275 = vpop.f32.mrb[0].mxu0
        %v2276 = vpop.f32.mrb[0].mxu0
        %2277 = vdwg.mxu0
        %v2279 = vsel %vm2191, %v1455, 0
        %2281 = vmatprep.subr.bf16.mxu0 0
        %2282 = vmatpush1.bf16.msra.mxu0 %v2169
        %2283 = vmatprep.subr.bf16.mxu0 0
        %2284 = vmatpush1.bf16.msra.mxu0 0
        %2285 = vmatprep.subr.bf16.mxu0 0
        %2286 = vmatpush1.bf16.msra.mxu0 0
        %2287 = vmatprep.subr.bf16.mxu0 0
        %2288 = vmatpush1.bf16.msra.mxu0 0
        %2289 = vmatprep.subr.bf16.mxu0 0
        %2290 = vmatpush1.bf16.msra.mxu0 0
        %2291 = vmatprep.subr.bf16.mxu0 0
        %2292 = vmatpush1.bf16.msra.mxu0 0
        %2293 = vmatprep.subr.bf16.mxu0 0
        %2294 = vmatpush1.bf16.msra.mxu0 0
        %2295 = vmatprep.subr.bf16.mxu0 0
        %2296 = vmatpush1.bf16.msra.mxu0 0
        %2297 = vmatprep.subr.bf16.mxu0 0
        %2298 = vmatpush1.bf16.msra.mxu0 0
        %2299 = vmatprep.subr.bf16.mxu0 0
        %2300 = vmatpush1.bf16.msra.mxu0 0
        %2301 = vmatprep.subr.bf16.mxu0 0
        %2302 = vmatpush1.bf16.msra.mxu0 0
        %2303 = vmatprep.subr.bf16.mxu0 0
        %2304 = vmatpush1.bf16.msra.mxu0 0
        %2305 = vmatprep.subr.bf16.mxu0 0
        %2306 = vmatpush1.bf16.msra.mxu0 0
        %2307 = vmatprep.subr.bf16.mxu0 0
        %2308 = vmatpush1.bf16.msra.mxu0 0
        %2309 = vmatprep.subr.bf16.mxu0 0
        %2310 = vmatpush1.bf16.msra.mxu0 0
        %2311 = vmatprep.subr.bf16.mxu0 0
        %2312 = vmatpush1.bf16.msra.mxu0 0
        %2313 = vmatprep.mubr.bf16.mxu0 0
        %2314 = vmatmul.mubr.bf16.gmra.mrb[0].mxu0 %v2279
        %v2315 = vpop.f32.mrb[0].mxu0
        %v2316 = vadd.f32 %v1378, %v2315
        %v2317 = vpop.f32.mrb[0].mxu0
        %v2318 = vpop.f32.mrb[0].mxu0
        %v2319 = vpop.f32.mrb[0].mxu0
        %2320 = vdwg.mxu0
        %v2322 = vsel %vm2191, %v1458, 0
        %2324 = vmatprep.subr.bf16.mxu0 0
        %2325 = vmatpush1.bf16.msra.mxu0 %v2173
        %2326 = vmatprep.subr.bf16.mxu0 0
        %2327 = vmatpush1.bf16.msra.mxu0 0
        %2328 = vmatprep.subr.bf16.mxu0 0
        %2329 = vmatpush1.bf16.msra.mxu0 0
        %2330 = vmatprep.subr.bf16.mxu0 0
        %2331 = vmatpush1.bf16.msra.mxu0 0
        %2332 = vmatprep.subr.bf16.mxu0 0
        %2333 = vmatpush1.bf16.msra.mxu0 0
        %2334 = vmatprep.subr.bf16.mxu0 0
        %2335 = vmatpush1.bf16.msra.mxu0 0
        %2336 = vmatprep.subr.bf16.mxu0 0
        %2337 = vmatpush1.bf16.msra.mxu0 0
        %2338 = vmatprep.subr.bf16.mxu0 0
        %2339 = vmatpush1.bf16.msra.mxu0 0
        %2340 = vmatprep.subr.bf16.mxu0 0
        %2341 = vmatpush1.bf16.msra.mxu0 0
        %2342 = vmatprep.subr.bf16.mxu0 0
        %2343 = vmatpush1.bf16.msra.mxu0 0
        %2344 = vmatprep.subr.bf16.mxu0 0
        %2345 = vmatpush1.bf16.msra.mxu0 0
        %2346 = vmatprep.subr.bf16.mxu0 0
        %2347 = vmatpush1.bf16.msra.mxu0 0
        %2348 = vmatprep.subr.bf16.mxu0 0
        %2349 = vmatpush1.bf16.msra.mxu0 0
        %2350 = vmatprep.subr.bf16.mxu0 0
        %2351 = vmatpush1.bf16.msra.mxu0 0
        %2352 = vmatprep.subr.bf16.mxu0 0
        %2353 = vmatpush1.bf16.msra.mxu0 0
        %2354 = vmatprep.subr.bf16.mxu0 0
        %2355 = vmatpush1.bf16.msra.mxu0 0
        %2356 = vmatprep.mubr.bf16.mxu0 0
        %2357 = vmatmul.mubr.bf16.gmra.mrb[0].mxu0 %v2322
        %v2358 = vpop.f32.mrb[0].mxu0
        %v2359 = vadd.f32 %v1378, %v2358
        %v2360 = vpop.f32.mrb[0].mxu0
        %v2361 = vpop.f32.mrb[0].mxu0
        %v2362 = vpop.f32.mrb[0].mxu0
        %2363 = vdwg.mxu0
        %v2365 = vsel %vm2191, %v1461, 0
        %2367 = vmatprep.subr.bf16.mxu0 0
        %2368 = vmatpush1.bf16.msra.mxu0 %v2177
        %2369 = vmatprep.subr.bf16.mxu0 0
        %2370 = vmatpush1.bf16.msra.mxu0 0
        %2371 = vmatprep.subr.bf16.mxu0 0
        %2372 = vmatpush1.bf16.msra.mxu0 0
        %2373 = vmatprep.subr.bf16.mxu0 0
        %2374 = vmatpush1.bf16.msra.mxu0 0
        %2375 = vmatprep.subr.bf16.mxu0 0
        %2376 = vmatpush1.bf16.msra.mxu0 0
        %2377 = vmatprep.subr.bf16.mxu0 0
        %2378 = vmatpush1.bf16.msra.mxu0 0
        %2379 = vmatprep.subr.bf16.mxu0 0
        %2380 = vmatpush1.bf16.msra.mxu0 0
        %2381 = vmatprep.subr.bf16.mxu0 0
        %2382 = vmatpush1.bf16.msra.mxu0 0
        %2383 = vmatprep.subr.bf16.mxu0 0
        %2384 = vmatpush1.bf16.msra.mxu0 0
        %2385 = vmatprep.subr.bf16.mxu0 0
        %2386 = vmatpush1.bf16.msra.mxu0 0
        %2387 = vmatprep.subr.bf16.mxu0 0
        %2388 = vmatpush1.bf16.msra.mxu0 0
        %2389 = vmatprep.subr.bf16.mxu0 0
        %2390 = vmatpush1.bf16.msra.mxu0 0
        %2391 = vmatprep.subr.bf16.mxu0 0
        %2392 = vmatpush1.bf16.msra.mxu0 0
        %2393 = vmatprep.subr.bf16.mxu0 0
        %2394 = vmatpush1.bf16.msra.mxu0 0
        %2395 = vmatprep.subr.bf16.mxu0 0
        %2396 = vmatpush1.bf16.msra.mxu0 0
        %2397 = vmatprep.subr.bf16.mxu0 0
        %2398 = vmatpush1.bf16.msra.mxu0 0
        %2399 = vmatprep.mubr.bf16.mxu0 0
        %2400 = vmatmul.mubr.bf16.gmra.mrb[0].mxu0 %v2365
        %v2401 = vpop.f32.mrb[0].mxu0
        %v2402 = vadd.f32 %v1378, %v2401
        %v2403 = vpop.f32.mrb[0].mxu0
        %v2404 = vpop.f32.mrb[0].mxu0
        %v2405 = vpop.f32.mrb[0].mxu0
        %2406 = vdwg.mxu0
        %v2408 = vsel %vm2191, %v1464, 0
        %2410 = vmatprep.subr.bf16.mxu0 0
        %2411 = vmatpush1.bf16.msra.mxu0 %v2181
        %2412 = vmatprep.subr.bf16.mxu0 0
        %2413 = vmatpush1.bf16.msra.mxu0 0
        %2414 = vmatprep.subr.bf16.mxu0 0
        %2415 = vmatpush1.bf16.msra.mxu0 0
        %2416 = vmatprep.subr.bf16.mxu0 0
        %2417 = vmatpush1.bf16.msra.mxu0 0
        %2418 = vmatprep.subr.bf16.mxu0 0
        %2419 = vmatpush1.bf16.msra.mxu0 0
        %2420 = vmatprep.subr.bf16.mxu0 0
        %2421 = vmatpush1.bf16.msra.mxu0 0
        %2422 = vmatprep.subr.bf16.mxu0 0
        %2423 = vmatpush1.bf16.msra.mxu0 0
        %2424 = vmatprep.subr.bf16.mxu0 0
        %2425 = vmatpush1.bf16.msra.mxu0 0
        %2426 = vmatprep.subr.bf16.mxu0 0
        %2427 = vmatpush1.bf16.msra.mxu0 0
        %2428 = vmatprep.subr.bf16.mxu0 0
        %2429 = vmatpush1.bf16.msra.mxu0 0
        %2430 = vmatprep.subr.bf16.mxu0 0
        %2431 = vmatpush1.bf16.msra.mxu0 0
        %2432 = vmatprep.subr.bf16.mxu0 0
        %2433 = vmatpush1.bf16.msra.mxu0 0
        %2434 = vmatprep.subr.bf16.mxu0 0
        %2435 = vmatpush1.bf16.msra.mxu0 0
        %2436 = vmatprep.subr.bf16.mxu0 0
        %2437 = vmatpush1.bf16.msra.mxu0 0
        %2438 = vmatprep.subr.bf16.mxu0 0
        %2439 = vmatpush1.bf16.msra.mxu0 0
        %2440 = vmatprep.subr.bf16.mxu0 0
        %2441 = vmatpush1.bf16.msra.mxu0 0
        %2442 = vmatprep.mubr.bf16.mxu0 0
        %2443 = vmatmul.mubr.bf16.gmra.mrb[0].mxu0 %v2408
        %v2444 = vpop.f32.mrb[0].mxu0
        %v2445 = vadd.f32 %v1378, %v2444
        %v2446 = vpop.f32.mrb[0].mxu0
        %v2447 = vpop.f32.mrb[0].mxu0
        %v2448 = vpop.f32.mrb[0].mxu0
        %2449 = vdwg.mxu0
        %v2451 = vsel %vm2191, %v1467, 0
        %2453 = vmatprep.subr.bf16.mxu0 0
        %2454 = vmatpush1.bf16.msra.mxu0 %v2185
        %2455 = vmatprep.subr.bf16.mxu0 0
        %2456 = vmatpush1.bf16.msra.mxu0 0
        %2457 = vmatprep.subr.bf16.mxu0 0
        %2458 = vmatpush1.bf16.msra.mxu0 0
        %2459 = vmatprep.subr.bf16.mxu0 0
        %2460 = vmatpush1.bf16.msra.mxu0 0
        %2461 = vmatprep.subr.bf16.mxu0 0
        %2462 = vmatpush1.bf16.msra.mxu0 0
        %2463 = vmatprep.subr.bf16.mxu0 0
        %2464 = vmatpush1.bf16.msra.mxu0 0
        %2465 = vmatprep.subr.bf16.mxu0 0
        %2466 = vmatpush1.bf16.msra.mxu0 0
        %2467 = vmatprep.subr.bf16.mxu0 0
        %2468 = vmatpush1.bf16.msra.mxu0 0
        %2469 = vmatprep.subr.bf16.mxu0 0
        %2470 = vmatpush1.bf16.msra.mxu0 0
        %2471 = vmatprep.subr.bf16.mxu0 0
        %2472 = vmatpush1.bf16.msra.mxu0 0
        %2473 = vmatprep.subr.bf16.mxu0 0
        %2474 = vmatpush1.bf16.msra.mxu0 0
        %2475 = vmatprep.subr.bf16.mxu0 0
        %2476 = vmatpush1.bf16.msra.mxu0 0
        %2477 = vmatprep.subr.bf16.mxu0 0
        %2478 = vmatpush1.bf16.msra.mxu0 0
        %2479 = vmatprep.subr.bf16.mxu0 0
        %2480 = vmatpush1.bf16.msra.mxu0 0
        %2481 = vmatprep.subr.bf16.mxu0 0
        %2482 = vmatpush1.bf16.msra.mxu0 0
        %2483 = vmatprep.subr.bf16.mxu0 0
        %2484 = vmatpush1.bf16.msra.mxu0 0
        %2485 = vmatprep.mubr.bf16.mxu0 0
        %2486 = vmatmul.mubr.bf16.gmra.mrb[0].mxu0 %v2451
        %v2487 = vpop.f32.mrb[0].mxu0
        %v2488 = vadd.f32 %v1378, %v2487
        %v2489 = vpop.f32.mrb[0].mxu0
        %v2490 = vpop.f32.mrb[0].mxu0
        %v2491 = vpop.f32.mrb[0].mxu0
        %2492 = vdwg.mxu0
        %v2494 = vsel %vm2191, %v1470, 0
        %2496 = vmatprep.subr.bf16.mxu0 0
        %2497 = vmatpush1.bf16.msra.mxu0 %v2189
        %2498 = vmatprep.subr.bf16.mxu0 0
        %2499 = vmatpush1.bf16.msra.mxu0 0
        %2500 = vmatprep.subr.bf16.mxu0 0
        %2501 = vmatpush1.bf16.msra.mxu0 0
        %2502 = vmatprep.subr.bf16.mxu0 0
        %2503 = vmatpush1.bf16.msra.mxu0 0
        %2504 = vmatprep.subr.bf16.mxu0 0
        %2505 = vmatpush1.bf16.msra.mxu0 0
        %2506 = vmatprep.subr.bf16.mxu0 0
        %2507 = vmatpush1.bf16.msra.mxu0 0
        %2508 = vmatprep.subr.bf16.mxu0 0
        %2509 = vmatpush1.bf16.msra.mxu0 0
        %2510 = vmatprep.subr.bf16.mxu0 0
        %2511 = vmatpush1.bf16.msra.mxu0 0
        %2512 = vmatprep.subr.bf16.mxu0 0
        %2513 = vmatpush1.bf16.msra.mxu0 0
        %2514 = vmatprep.subr.bf16.mxu0 0
        %2515 = vmatpush1.bf16.msra.mxu0 0
        %2516 = vmatprep.subr.bf16.mxu0 0
        %2517 = vmatpush1.bf16.msra.mxu0 0
        %2518 = vmatprep.subr.bf16.mxu0 0
        %2519 = vmatpush1.bf16.msra.mxu0 0
        %2520 = vmatprep.subr.bf16.mxu0 0
        %2521 = vmatpush1.bf16.msra.mxu0 0
        %2522 = vmatprep.subr.bf16.mxu0 0
        %2523 = vmatpush1.bf16.msra.mxu0 0
        %2524 = vmatprep.subr.bf16.mxu0 0
        %2525 = vmatpush1.bf16.msra.mxu0 0
        %2526 = vmatprep.subr.bf16.mxu0 0
        %2527 = vmatpush1.bf16.msra.mxu0 0
        %2528 = vmatprep.mubr.bf16.mxu0 0
        %2529 = vmatmul.mubr.bf16.gmra.mrb[0].mxu0 %v2494
        %v2530 = vpop.f32.mrb[0].mxu0
        %v2531 = vadd.f32 %v1378, %v2530
        %v2532 = vpop.f32.mrb[0].mxu0
        %v2533 = vpop.f32.mrb[0].mxu0
        %v2534 = vpop.f32.mrb[0].mxu0
        %2535 = vdwg.mxu0
        %vm2536 = vcmask 64512
        %v2537 = vsel %vm2536, %v2230, -inf
        %2538 = vmax.xlane.f32.xlu0 %v2537
        %v2539 = vpop.xlane.xlu0 %2538
        %v2540 = vsel %vm2536, %v2273, -inf
        %2541 = vmax.xlane.f32.xlu0 %v2540
        %v2542 = vpop.xlane.xlu0 %2541
        %v2543 = vsel %vm2536, %v2316, -inf
        %2544 = vmax.xlane.f32.xlu0 %v2543
        %v2545 = vpop.xlane.xlu0 %2544
        %v2546 = vsel %vm2536, %v2359, -inf
        %2547 = vmax.xlane.f32.xlu0 %v2546
        %v2548 = vpop.xlane.xlu0 %2547
        %v2549 = vsel %vm2536, %v2402, -inf
        %2550 = vmax.xlane.f32.xlu0 %v2549
        %v2551 = vpop.xlane.xlu0 %2550
        %v2552 = vsel %vm2536, %v2445, -inf
        %2553 = vmax.xlane.f32.xlu0 %v2552
        %v2554 = vpop.xlane.xlu0 %2553
        %v2555 = vsel %vm2536, %v2488, -inf
        %2556 = vmax.xlane.f32.xlu0 %v2555
        %v2557 = vpop.xlane.xlu0 %2556
        %v2558 = vsel %vm2536, %v2531, -inf
        %2559 = vmax.xlane.f32.xlu0 %v2558
        %v2560 = vpop.xlane.xlu0 %2559
        %v2561 = vsub.f32 %v2230, %v2539
        %v2562 = vsub.f32 %v2273, %v2542
        %v2563 = vsub.f32 %v2316, %v2545
        %v2564 = vsub.f32 %v2359, %v2548
        %v2565 = vsub.f32 %v2402, %v2551
        %v2566 = vsub.f32 %v2445, %v2554
        %v2567 = vsub.f32 %v2488, %v2557
        %v2568 = vsub.f32 %v2531, %v2560
        %v2569 = vmul.f32 %v2561, 1.442695
        %v2570 = vpow.pop %v2569
        %v2571 = vmul.f32 %v2562, 1.442695
        %v2572 = vpow.pop %v2571
        %v2573 = vmul.f32 %v2563, 1.442695
        %v2574 = vpow.pop %v2573
        %v2575 = vmul.f32 %v2564, 1.442695
        %v2576 = vpow.pop %v2575
        %v2577 = vmul.f32 %v2565, 1.442695
        %v2578 = vpow.pop %v2577
        %v2579 = vmul.f32 %v2566, 1.442695
        %v2580 = vpow.pop %v2579
        %v2581 = vmul.f32 %v2567, 1.442695
        %v2582 = vpow.pop %v2581
        %v2583 = vmul.f32 %v2568, 1.442695
        %v2584 = vpow.pop %v2583
        %v2585 = vsel %vm2536, %v2570, 0.0
        %2586 = vadd.xlane.f32.xlu0 %v2585
        %v2587 = vpop.xlane.xlu0 %2586
        %v2588 = vsel %vm2536, %v2572, 0.0
        %2589 = vadd.xlane.f32.xlu0 %v2588
        %v2590 = vpop.xlane.xlu0 %2589
        %v2591 = vsel %vm2536, %v2574, 0.0
        %2592 = vadd.xlane.f32.xlu0 %v2591
        %v2593 = vpop.xlane.xlu0 %2592
        %v2594 = vsel %vm2536, %v2576, 0.0
        %2595 = vadd.xlane.f32.xlu0 %v2594
        %v2596 = vpop.xlane.xlu0 %2595
        %v2597 = vsel %vm2536, %v2578, 0.0
        %2598 = vadd.xlane.f32.xlu0 %v2597
        %v2599 = vpop.xlane.xlu0 %2598
        %v2600 = vsel %vm2536, %v2580, 0.0
        %2601 = vadd.xlane.f32.xlu0 %v2600
        %v2602 = vpop.xlane.xlu0 %2601
        %v2603 = vsel %vm2536, %v2582, 0.0
        %2604 = vadd.xlane.f32.xlu0 %v2603
        %v2605 = vpop.xlane.xlu0 %2604
        %v2606 = vsel %vm2536, %v2584, 0.0
        %2607 = vadd.xlane.f32.xlu0 %v2606
        %v2608 = vpop.xlane.xlu0 %2607
        %v2609 = vpack.c.bf16 %v2570, %v2570
        %v2610 = vpack.c.bf16 %v2572, %v2572
        %v2611 = vpack.c.bf16 %v2574, %v2574
        %v2612 = vpack.c.bf16 %v2576, %v2576
        %v2613 = vpack.c.bf16 %v2578, %v2578
        %v2614 = vpack.c.bf16 %v2580, %v2580
        %v2615 = vpack.c.bf16 %v2582, %v2582
        %v2616 = vpack.c.bf16 %v2584, %v2584
        %v2617 = vpack.c.bf16 %v1354, %v1354
        %v2618 = vpack.c.bf16 %v1355, %v1355
        %v2619 = vpack.c.bf16 %v1356, %v1356
        %v2620 = vpack.c.bf16 %v1357, %v1357
        %v2621 = vpack.c.bf16 %v1358, %v1358
        %v2622 = vpack.c.bf16 %v1359, %v1359
        %v2623 = vpack.c.bf16 %v1360, %v1360
        %v2624 = vpack.c.bf16 %v1361, %v1361
        %v2625 = vcombine.low %v2617, %v2621
        %v2627 = vunpack.c.l.s4 1983009808
        %v2628 = vunpack.c.0.s8 %v2627
        %v2629 = vlaneseq
        %v2630 = vshrl.u32 %v2629, 7
        %v2631 = vsub.s32 %v2628, %v2630
        %v2632 = vrot.slane %v2625, %v2631
        %v2633 = vcombine.low %v2619, %v2623
        %v2635 = vunpack.c.l.s4 1983009808
        %v2636 = vunpack.c.0.s8 %v2635
        %v2637 = vlaneseq
        %v2638 = vshrl.u32 %v2637, 7
        %v2639 = vsub.s32 %v2636, %v2638
        %v2640 = vrot.slane %v2633, %v2639
        %v2641 = vcombine.low %v2632, %v2640
        %v2642 = vcombine.high %v2632, %v2640
        %v2644 = vunpack.c.l.s4 1934713408
        %v2645 = vunpack.c.0.s8 %v2644
        %v2646 = vlaneseq
        %v2647 = vshrl.u32 %v2646, 7
        %v2648 = vsub.s32 %v2645, %v2647
        %v2649 = vrot.slane %v2641, %v2648
        %v2651 = vunpack.c.l.s4 1934713408
        %v2652 = vunpack.c.0.s8 %v2651
        %v2653 = vlaneseq
        %v2654 = vshrl.u32 %v2653, 7
        %v2655 = vsub.s32 %v2652, %v2654
        %v2656 = vrot.slane %v2642, %v2655
        %v2657 = vcombine.high %v2649, 0
        %v2658 = vcombine.high %v2656, 0
        %v2659 = vcombine.low %v2618, %v2622
        %v2661 = vunpack.c.l.s4 1983009808
        %v2662 = vunpack.c.0.s8 %v2661
        %v2663 = vlaneseq
        %v2664 = vshrl.u32 %v2663, 7
        %v2665 = vsub.s32 %v2662, %v2664
        %v2666 = vrot.slane %v2659, %v2665
        %v2667 = vcombine.low %v2620, %v2624
        %v2669 = vunpack.c.l.s4 1983009808
        %v2670 = vunpack.c.0.s8 %v2669
        %v2671 = vlaneseq
        %v2672 = vshrl.u32 %v2671, 7
        %v2673 = vsub.s32 %v2670, %v2672
        %v2674 = vrot.slane %v2667, %v2673
        %v2675 = vcombine.low %v2666, %v2674
        %v2676 = vcombine.high %v2666, %v2674
        %v2678 = vunpack.c.l.s4 1934713408
        %v2679 = vunpack.c.0.s8 %v2678
        %v2680 = vlaneseq
        %v2681 = vshrl.u32 %v2680, 7
        %v2682 = vsub.s32 %v2679, %v2681
        %v2683 = vrot.slane %v2675, %v2682
        %v2685 = vunpack.c.l.s4 1934713408
        %v2686 = vunpack.c.0.s8 %v2685
        %v2687 = vlaneseq
        %v2688 = vshrl.u32 %v2687, 7
        %v2689 = vsub.s32 %v2686, %v2688
        %v2690 = vrot.slane %v2676, %v2689
        %v2691 = vcombine.high %v2683, 0
        %v2692 = vcombine.high %v2690, 0
        %v2695 = vpack.i.b16 %v2683, %v2649
        %v2696 = vshrl.u32 %v2649, 16
        %v2697 = vshrl.u32 %v2683, 16
        %v2698 = vpack.i.b16 %v2697, %v2696
        %v2701 = vpack.i.b16 %v2691, %v2657
        %v2702 = vshrl.u32 %v2657, 16
        %v2703 = vshrl.u32 %v2691, 16
        %v2704 = vpack.i.b16 %v2703, %v2702
        %v2707 = vpack.i.b16 %v2690, %v2656
        %v2708 = vshrl.u32 %v2656, 16
        %v2709 = vshrl.u32 %v2690, 16
        %v2710 = vpack.i.b16 %v2709, %v2708
        %v2713 = vpack.i.b16 %v2692, %v2658
        %v2714 = vshrl.u32 %v2658, 16
        %v2715 = vshrl.u32 %v2692, 16
        %v2716 = vpack.i.b16 %v2715, %v2714
        %v2718 = vsel %vm2536, %v2609, 0
        %vm2720 = vcmask 1043456
        %v2722 = vsel %vm2720, %v2695, 0
        %2724 = vmatprep.subr.bf16.mxu0 0
        %2725 = vmatpush1.bf16.msra.mxu0 %v2722
        %2726 = vmatprep.subr.bf16.mxu0 0
        %2727 = vmatpush1.bf16.msra.mxu0 0
        %2728 = vmatprep.subr.bf16.mxu0 0
        %2729 = vmatpush1.bf16.msra.mxu0 0
        %2730 = vmatprep.subr.bf16.mxu0 0
        %2731 = vmatpush1.bf16.msra.mxu0 0
        %2732 = vmatprep.subr.bf16.mxu0 0
        %2733 = vmatpush1.bf16.msra.mxu0 0
        %2734 = vmatprep.subr.bf16.mxu0 0
        %2735 = vmatpush1.bf16.msra.mxu0 0
        %2736 = vmatprep.subr.bf16.mxu0 0
        %2737 = vmatpush1.bf16.msra.mxu0 0
        %2738 = vmatprep.subr.bf16.mxu0 0
        %2739 = vmatpush1.bf16.msra.mxu0 0
        %2740 = vmatprep.subr.bf16.mxu0 0
        %2741 = vmatpush1.bf16.msra.mxu0 0
        %2742 = vmatprep.subr.bf16.mxu0 0
        %2743 = vmatpush1.bf16.msra.mxu0 0
        %2744 = vmatprep.subr.bf16.mxu0 0
        %2745 = vmatpush1.bf16.msra.mxu0 0
        %2746 = vmatprep.subr.bf16.mxu0 0
        %2747 = vmatpush1.bf16.msra.mxu0 0
        %2748 = vmatprep.subr.bf16.mxu0 0
        %2749 = vmatpush1.bf16.msra.mxu0 0
        %2750 = vmatprep.subr.bf16.mxu0 0
        %2751 = vmatpush1.bf16.msra.mxu0 0
        %2752 = vmatprep.subr.bf16.mxu0 0
        %2753 = vmatpush1.bf16.msra.mxu0 0
        %2754 = vmatprep.subr.bf16.mxu0 0
        %2755 = vmatpush1.bf16.msra.mxu0 0
        %2756 = vmatprep.mubr.bf16.mxu0 0
        %2757 = vmatmul.mubr.bf16.gmra.mrb[0].mxu0 %v2718
        %v2758 = vpop.f32.mrb[0].mxu0
        %v2759 = vadd.f32 0.0, %v2758
        %v2760 = vpop.f32.mrb[0].mxu0
        %v2761 = vpop.f32.mrb[0].mxu0
        %v2762 = vpop.f32.mrb[0].mxu0
        %2763 = vdwg.mxu0
        %v2765 = vsel %vm2536, %v2610, 0
        %v2768 = vsel %vm2720, %v2698, 0
        %2770 = vmatprep.subr.bf16.mxu0 0
        %2771 = vmatpush1.bf16.msra.mxu0 %v2768
        %2772 = vmatprep.subr.bf16.mxu0 0
        %2773 = vmatpush1.bf16.msra.mxu0 0
        %2774 = vmatprep.subr.bf16.mxu0 0
        %2775 = vmatpush1.bf16.msra.mxu0 0
        %2776 = vmatprep.subr.bf16.mxu0 0
        %2777 = vmatpush1.bf16.msra.mxu0 0
        %2778 = vmatprep.subr.bf16.mxu0 0
        %2779 = vmatpush1.bf16.msra.mxu0 0
        %2780 = vmatprep.subr.bf16.mxu0 0
        %2781 = vmatpush1.bf16.msra.mxu0 0
        %2782 = vmatprep.subr.bf16.mxu0 0
        %2783 = vmatpush1.bf16.msra.mxu0 0
        %2784 = vmatprep.subr.bf16.mxu0 0
        %2785 = vmatpush1.bf16.msra.mxu0 0
        %2786 = vmatprep.subr.bf16.mxu0 0
        %2787 = vmatpush1.bf16.msra.mxu0 0
        %2788 = vmatprep.subr.bf16.mxu0 0
        %2789 = vmatpush1.bf16.msra.mxu0 0
        %2790 = vmatprep.subr.bf16.mxu0 0
        %2791 = vmatpush1.bf16.msra.mxu0 0
        %2792 = vmatprep.subr.bf16.mxu0 0
        %2793 = vmatpush1.bf16.msra.mxu0 0
        %2794 = vmatprep.subr.bf16.mxu0 0
        %2795 = vmatpush1.bf16.msra.mxu0 0
        %2796 = vmatprep.subr.bf16.mxu0 0
        %2797 = vmatpush1.bf16.msra.mxu0 0
        %2798 = vmatprep.subr.bf16.mxu0 0
        %2799 = vmatpush1.bf16.msra.mxu0 0
        %2800 = vmatprep.subr.bf16.mxu0 0
        %2801 = vmatpush1.bf16.msra.mxu0 0
        %2802 = vmatprep.mubr.bf16.mxu0 0
        %2803 = vmatmul.mubr.bf16.gmra.mrb[0].mxu0 %v2765
        %v2804 = vpop.f32.mrb[0].mxu0
        %v2805 = vadd.f32 0.0, %v2804
        %v2806 = vpop.f32.mrb[0].mxu0
        %v2807 = vpop.f32.mrb[0].mxu0
        %v2808 = vpop.f32.mrb[0].mxu0
        %2809 = vdwg.mxu0
        %v2811 = vsel %vm2536, %v2611, 0
        %v2814 = vsel %vm2720, %v2701, 0
        %2816 = vmatprep.subr.bf16.mxu0 0
        %2817 = vmatpush1.bf16.msra.mxu0 %v2814
        %2818 = vmatprep.subr.bf16.mxu0 0
        %2819 = vmatpush1.bf16.msra.mxu0 0
        %2820 = vmatprep.subr.bf16.mxu0 0
        %2821 = vmatpush1.bf16.msra.mxu0 0
        %2822 = vmatprep.subr.bf16.mxu0 0
        %2823 = vmatpush1.bf16.msra.mxu0 0
        %2824 = vmatprep.subr.bf16.mxu0 0
        %2825 = vmatpush1.bf16.msra.mxu0 0
        %2826 = vmatprep.subr.bf16.mxu0 0
        %2827 = vmatpush1.bf16.msra.mxu0 0
        %2828 = vmatprep.subr.bf16.mxu0 0
        %2829 = vmatpush1.bf16.msra.mxu0 0
        %2830 = vmatprep.subr.bf16.mxu0 0
        %2831 = vmatpush1.bf16.msra.mxu0 0
        %2832 = vmatprep.subr.bf16.mxu0 0
        %2833 = vmatpush1.bf16.msra.mxu0 0
        %2834 = vmatprep.subr.bf16.mxu0 0
        %2835 = vmatpush1.bf16.msra.mxu0 0
        %2836 = vmatprep.subr.bf16.mxu0 0
        %2837 = vmatpush1.bf16.msra.mxu0 0
        %2838 = vmatprep.subr.bf16.mxu0 0
        %2839 = vmatpush1.bf16.msra.mxu0 0
        %2840 = vmatprep.subr.bf16.mxu0 0
        %2841 = vmatpush1.bf16.msra.mxu0 0
        %2842 = vmatprep.subr.bf16.mxu0 0
        %2843 = vmatpush1.bf16.msra.mxu0 0
        %2844 = vmatprep.subr.bf16.mxu0 0
        %2845 = vmatpush1.bf16.msra.mxu0 0
        %2846 = vmatprep.subr.bf16.mxu0 0
        %2847 = vmatpush1.bf16.msra.mxu0 0
        %2848 = vmatprep.mubr.bf16.mxu0 0
        %2849 = vmatmul.mubr.bf16.gmra.mrb[0].mxu0 %v2811
        %v2850 = vpop.f32.mrb[0].mxu0
        %v2851 = vadd.f32 0.0, %v2850
        %v2852 = vpop.f32.mrb[0].mxu0
        %v2853 = vpop.f32.mrb[0].mxu0
        %v2854 = vpop.f32.mrb[0].mxu0
        %2855 = vdwg.mxu0
        %v2857 = vsel %vm2536, %v2612, 0
        %v2860 = vsel %vm2720, %v2704, 0
        %2862 = vmatprep.subr.bf16.mxu0 0
        %2863 = vmatpush1.bf16.msra.mxu0 %v2860
        %2864 = vmatprep.subr.bf16.mxu0 0
        %2865 = vmatpush1.bf16.msra.mxu0 0
        %2866 = vmatprep.subr.bf16.mxu0 0
        %2867 = vmatpush1.bf16.msra.mxu0 0
        %2868 = vmatprep.subr.bf16.mxu0 0
        %2869 = vmatpush1.bf16.msra.mxu0 0
        %2870 = vmatprep.subr.bf16.mxu0 0
        %2871 = vmatpush1.bf16.msra.mxu0 0
        %2872 = vmatprep.subr.bf16.mxu0 0
        %2873 = vmatpush1.bf16.msra.mxu0 0
        %2874 = vmatprep.subr.bf16.mxu0 0
        %2875 = vmatpush1.bf16.msra.mxu0 0
        %2876 = vmatprep.subr.bf16.mxu0 0
        %2877 = vmatpush1.bf16.msra.mxu0 0
        %2878 = vmatprep.subr.bf16.mxu0 0
        %2879 = vmatpush1.bf16.msra.mxu0 0
        %2880 = vmatprep.subr.bf16.mxu0 0
        %2881 = vmatpush1.bf16.msra.mxu0 0
        %2882 = vmatprep.subr.bf16.mxu0 0
        %2883 = vmatpush1.bf16.msra.mxu0 0
        %2884 = vmatprep.subr.bf16.mxu0 0
        %2885 = vmatpush1.bf16.msra.mxu0 0
        %2886 = vmatprep.subr.bf16.mxu0 0
        %2887 = vmatpush1.bf16.msra.mxu0 0
        %2888 = vmatprep.subr.bf16.mxu0 0
        %2889 = vmatpush1.bf16.msra.mxu0 0
        %2890 = vmatprep.subr.bf16.mxu0 0
        %2891 = vmatpush1.bf16.msra.mxu0 0
        %2892 = vmatprep.subr.bf16.mxu0 0
        %2893 = vmatpush1.bf16.msra.mxu0 0
        %2894 = vmatprep.mubr.bf16.mxu0 0
        %2895 = vmatmul.mubr.bf16.gmra.mrb[0].mxu0 %v2857
        %v2896 = vpop.f32.mrb[0].mxu0
        %v2897 = vadd.f32 0.0, %v2896
        %v2898 = vpop.f32.mrb[0].mxu0
        %v2899 = vpop.f32.mrb[0].mxu0
        %v2900 = vpop.f32.mrb[0].mxu0
        %2901 = vdwg.mxu0
        %v2903 = vsel %vm2536, %v2613, 0
        %v2906 = vsel %vm2720, %v2707, 0
        %2908 = vmatprep.subr.bf16.mxu0 0
        %2909 = vmatpush1.bf16.msra.mxu0 %v2906
        %2910 = vmatprep.subr.bf16.mxu0 0
        %2911 = vmatpush1.bf16.msra.mxu0 0
        %2912 = vmatprep.subr.bf16.mxu0 0
        %2913 = vmatpush1.bf16.msra.mxu0 0
        %2914 = vmatprep.subr.bf16.mxu0 0
        %2915 = vmatpush1.bf16.msra.mxu0 0
        %2916 = vmatprep.subr.bf16.mxu0 0
        %2917 = vmatpush1.bf16.msra.mxu0 0
        %2918 = vmatprep.subr.bf16.mxu0 0
        %2919 = vmatpush1.bf16.msra.mxu0 0
        %2920 = vmatprep.subr.bf16.mxu0 0
        %2921 = vmatpush1.bf16.msra.mxu0 0
        %2922 = vmatprep.subr.bf16.mxu0 0
        %2923 = vmatpush1.bf16.msra.mxu0 0
        %2924 = vmatprep.subr.bf16.mxu0 0
        %2925 = vmatpush1.bf16.msra.mxu0 0
        %2926 = vmatprep.subr.bf16.mxu0 0
        %2927 = vmatpush1.bf16.msra.mxu0 0
        %2928 = vmatprep.subr.bf16.mxu0 0
        %2929 = vmatpush1.bf16.msra.mxu0 0
        %2930 = vmatprep.subr.bf16.mxu0 0
        %2931 = vmatpush1.bf16.msra.mxu0 0
        %2932 = vmatprep.subr.bf16.mxu0 0
        %2933 = vmatpush1.bf16.msra.mxu0 0
        %2934 = vmatprep.subr.bf16.mxu0 0
        %2935 = vmatpush1.bf16.msra.mxu0 0
        %2936 = vmatprep.subr.bf16.mxu0 0
        %2937 = vmatpush1.bf16.msra.mxu0 0
        %2938 = vmatprep.subr.bf16.mxu0 0
        %2939 = vmatpush1.bf16.msra.mxu0 0
        %2940 = vmatprep.mubr.bf16.mxu0 0
        %2941 = vmatmul.mubr.bf16.gmra.mrb[0].mxu0 %v2903
        %v2942 = vpop.f32.mrb[0].mxu0
        %v2943 = vadd.f32 0.0, %v2942
        %v2944 = vpop.f32.mrb[0].mxu0
        %v2945 = vpop.f32.mrb[0].mxu0
        %v2946 = vpop.f32.mrb[0].mxu0
        %2947 = vdwg.mxu0
        %v2949 = vsel %vm2536, %v2614, 0
        %v2952 = vsel %vm2720, %v2710, 0
        %2954 = vmatprep.subr.bf16.mxu0 0
        %2955 = vmatpush1.bf16.msra.mxu0 %v2952
        %2956 = vmatprep.subr.bf16.mxu0 0
        %2957 = vmatpush1.bf16.msra.mxu0 0
        %2958 = vmatprep.subr.bf16.mxu0 0
        %2959 = vmatpush1.bf16.msra.mxu0 0
        %2960 = vmatprep.subr.bf16.mxu0 0
        %2961 = vmatpush1.bf16.msra.mxu0 0
        %2962 = vmatprep.subr.bf16.mxu0 0
        %2963 = vmatpush1.bf16.msra.mxu0 0
        %2964 = vmatprep.subr.bf16.mxu0 0
        %2965 = vmatpush1.bf16.msra.mxu0 0
        %2966 = vmatprep.subr.bf16.mxu0 0
        %2967 = vmatpush1.bf16.msra.mxu0 0
        %2968 = vmatprep.subr.bf16.mxu0 0
        %2969 = vmatpush1.bf16.msra.mxu0 0
        %2970 = vmatprep.subr.bf16.mxu0 0
        %2971 = vmatpush1.bf16.msra.mxu0 0
        %2972 = vmatprep.subr.bf16.mxu0 0
        %2973 = vmatpush1.bf16.msra.mxu0 0
        %2974 = vmatprep.subr.bf16.mxu0 0
        %2975 = vmatpush1.bf16.msra.mxu0 0
        %2976 = vmatprep.subr.bf16.mxu0 0
        %2977 = vmatpush1.bf16.msra.mxu0 0
        %2978 = vmatprep.subr.bf16.mxu0 0
        %2979 = vmatpush1.bf16.msra.mxu0 0
        %2980 = vmatprep.subr.bf16.mxu0 0
        %2981 = vmatpush1.bf16.msra.mxu0 0
        %2982 = vmatprep.subr.bf16.mxu0 0
        %2983 = vmatpush1.bf16.msra.mxu0 0
        %2984 = vmatprep.subr.bf16.mxu0 0
        %2985 = vmatpush1.bf16.msra.mxu0 0
        %2986 = vmatprep.mubr.bf16.mxu0 0
        %2987 = vmatmul.mubr.bf16.gmra.mrb[0].mxu0 %v2949
        %v2988 = vpop.f32.mrb[0].mxu0
        %v2989 = vadd.f32 0.0, %v2988
        %v2990 = vpop.f32.mrb[0].mxu0
        %v2991 = vpop.f32.mrb[0].mxu0
        %v2992 = vpop.f32.mrb[0].mxu0
        %2993 = vdwg.mxu0
        %v2995 = vsel %vm2536, %v2615, 0
        %v2998 = vsel %vm2720, %v2713, 0
        %3000 = vmatprep.subr.bf16.mxu0 0
        %3001 = vmatpush1.bf16.msra.mxu0 %v2998
        %3002 = vmatprep.subr.bf16.mxu0 0
        %3003 = vmatpush1.bf16.msra.mxu0 0
        %3004 = vmatprep.subr.bf16.mxu0 0
        %3005 = vmatpush1.bf16.msra.mxu0 0
        %3006 = vmatprep.subr.bf16.mxu0 0
        %3007 = vmatpush1.bf16.msra.mxu0 0
        %3008 = vmatprep.subr.bf16.mxu0 0
        %3009 = vmatpush1.bf16.msra.mxu0 0
        %3010 = vmatprep.subr.bf16.mxu0 0
        %3011 = vmatpush1.bf16.msra.mxu0 0
        %3012 = vmatprep.subr.bf16.mxu0 0
        %3013 = vmatpush1.bf16.msra.mxu0 0
        %3014 = vmatprep.subr.bf16.mxu0 0
        %3015 = vmatpush1.bf16.msra.mxu0 0
        %3016 = vmatprep.subr.bf16.mxu0 0
        %3017 = vmatpush1.bf16.msra.mxu0 0
        %3018 = vmatprep.subr.bf16.mxu0 0
        %3019 = vmatpush1.bf16.msra.mxu0 0
        %3020 = vmatprep.subr.bf16.mxu0 0
        %3021 = vmatpush1.bf16.msra.mxu0 0
        %3022 = vmatprep.subr.bf16.mxu0 0
        %3023 = vmatpush1.bf16.msra.mxu0 0
        %3024 = vmatprep.subr.bf16.mxu0 0
        %3025 = vmatpush1.bf16.msra.mxu0 0
        %3026 = vmatprep.subr.bf16.mxu0 0
        %3027 = vmatpush1.bf16.msra.mxu0 0
        %3028 = vmatprep.subr.bf16.mxu0 0
        %3029 = vmatpush1.bf16.msra.mxu0 0
        %3030 = vmatprep.subr.bf16.mxu0 0
        %3031 = vmatpush1.bf16.msra.mxu0 0
        %3032 = vmatprep.mubr.bf16.mxu0 0
        %3033 = vmatmul.mubr.bf16.gmra.mrb[0].mxu0 %v2995
        %v3034 = vpop.f32.mrb[0].mxu0
        %v3035 = vadd.f32 0.0, %v3034
        %v3036 = vpop.f32.mrb[0].mxu0
        %v3037 = vpop.f32.mrb[0].mxu0
        %v3038 = vpop.f32.mrb[0].mxu0
        %3039 = vdwg.mxu0
        %v3041 = vsel %vm2536, %v2616, 0
        %v3044 = vsel %vm2720, %v2716, 0
        %3046 = vmatprep.subr.bf16.mxu0 0
        %3047 = vmatpush1.bf16.msra.mxu0 %v3044
        %3048 = vmatprep.subr.bf16.mxu0 0
        %3049 = vmatpush1.bf16.msra.mxu0 0
        %3050 = vmatprep.subr.bf16.mxu0 0
        %3051 = vmatpush1.bf16.msra.mxu0 0
        %3052 = vmatprep.subr.bf16.mxu0 0
        %3053 = vmatpush1.bf16.msra.mxu0 0
        %3054 = vmatprep.subr.bf16.mxu0 0
        %3055 = vmatpush1.bf16.msra.mxu0 0
        %3056 = vmatprep.subr.bf16.mxu0 0
        %3057 = vmatpush1.bf16.msra.mxu0 0
        %3058 = vmatprep.subr.bf16.mxu0 0
        %3059 = vmatpush1.bf16.msra.mxu0 0
        %3060 = vmatprep.subr.bf16.mxu0 0
        %3061 = vmatpush1.bf16.msra.mxu0 0
        %3062 = vmatprep.subr.bf16.mxu0 0
        %3063 = vmatpush1.bf16.msra.mxu0 0
        %3064 = vmatprep.subr.bf16.mxu0 0
        %3065 = vmatpush1.bf16.msra.mxu0 0
        %3066 = vmatprep.subr.bf16.mxu0 0
        %3067 = vmatpush1.bf16.msra.mxu0 0
        %3068 = vmatprep.subr.bf16.mxu0 0
        %3069 = vmatpush1.bf16.msra.mxu0 0
        %3070 = vmatprep.subr.bf16.mxu0 0
        %3071 = vmatpush1.bf16.msra.mxu0 0
        %3072 = vmatprep.subr.bf16.mxu0 0
        %3073 = vmatpush1.bf16.msra.mxu0 0
        %3074 = vmatprep.subr.bf16.mxu0 0
        %3075 = vmatpush1.bf16.msra.mxu0 0
        %3076 = vmatprep.subr.bf16.mxu0 0
        %3077 = vmatpush1.bf16.msra.mxu0 0
        %3078 = vmatprep.mubr.bf16.mxu0 0
        %3079 = vmatmul.mubr.bf16.gmra.mrb[0].mxu0 %v3041
        %v3080 = vpop.f32.mrb[0].mxu0
        %v3081 = vadd.f32 0.0, %v3080
        %v3082 = vpop.f32.mrb[0].mxu0
        %v3083 = vpop.f32.mrb[0].mxu0
        %v3084 = vpop.f32.mrb[0].mxu0
        %3085 = vdwg.mxu0
        %v3086 = vrcp.pop %v2587
        %v3087 = vrcp.pop %v2590
        %v3088 = vrcp.pop %v2593
        %v3089 = vrcp.pop %v2596
        %v3090 = vrcp.pop %v2599
        %v3091 = vrcp.pop %v2602
        %v3092 = vrcp.pop %v2605
        %v3093 = vrcp.pop %v2608
        %v3094 = vmul.f32 %v2759, %v3086
        %v3095 = vmul.f32 %v2805, %v3087
        %v3096 = vmul.f32 %v2851, %v3088
        %v3097 = vmul.f32 %v2897, %v3089
        %v3098 = vmul.f32 %v2943, %v3090
        %v3099 = vmul.f32 %v2989, %v3091
        %v3100 = vmul.f32 %v3035, %v3092
        %v3101 = vmul.f32 %v3081, %v3093
        %v3102 = vcombine.low %v3094, %v3096
        %v3103 = vcombine.high %v3094, %v3096
        %v3105 = vunpack.c.l.s4 1983009808
        %v3106 = vunpack.c.0.s8 %v3105
        %v3107 = vlaneseq
        %v3108 = vshrl.u32 %v3107, 7
        %v3109 = vsub.s32 %v3106, %v3108
        %v3110 = vrot.slane %v3102, %v3109
        %v3112 = vunpack.c.l.s4 1983009808
        %v3113 = vunpack.c.0.s8 %v3112
        %v3114 = vlaneseq
        %v3115 = vshrl.u32 %v3114, 7
        %v3116 = vsub.s32 %v3113, %v3115
        %v3117 = vrot.slane %v3103, %v3116
        %v3118 = vcombine.low %v3095, %v3097
        %v3119 = vcombine.high %v3095, %v3097
        %v3121 = vunpack.c.l.s4 1983009808
        %v3122 = vunpack.c.0.s8 %v3121
        %v3123 = vlaneseq
        %v3124 = vshrl.u32 %v3123, 7
        %v3125 = vsub.s32 %v3122, %v3124
        %v3126 = vrot.slane %v3118, %v3125
        %v3128 = vunpack.c.l.s4 1983009808
        %v3129 = vunpack.c.0.s8 %v3128
        %v3130 = vlaneseq
        %v3131 = vshrl.u32 %v3130, 7
        %v3132 = vsub.s32 %v3129, %v3131
        %v3133 = vrot.slane %v3119, %v3132
        %v3134 = vcombine.low %v3098, %v3100
        %v3135 = vcombine.high %v3098, %v3100
        %v3137 = vunpack.c.l.s4 1983009808
        %v3138 = vunpack.c.0.s8 %v3137
        %v3139 = vlaneseq
        %v3140 = vshrl.u32 %v3139, 7
        %v3141 = vsub.s32 %v3138, %v3140
        %v3142 = vrot.slane %v3134, %v3141
        %v3144 = vunpack.c.l.s4 1983009808
        %v3145 = vunpack.c.0.s8 %v3144
        %v3146 = vlaneseq
        %v3147 = vshrl.u32 %v3146, 7
        %v3148 = vsub.s32 %v3145, %v3147
        %v3149 = vrot.slane %v3135, %v3148
        %v3150 = vcombine.low %v3099, %v3101
        %v3151 = vcombine.high %v3099, %v3101
        %v3153 = vunpack.c.l.s4 1983009808
        %v3154 = vunpack.c.0.s8 %v3153
        %v3155 = vlaneseq
        %v3156 = vshrl.u32 %v3155, 7
        %v3157 = vsub.s32 %v3154, %v3156
        %v3158 = vrot.slane %v3150, %v3157
        %v3160 = vunpack.c.l.s4 1983009808
        %v3161 = vunpack.c.0.s8 %v3160
        %v3162 = vlaneseq
        %v3163 = vshrl.u32 %v3162, 7
        %v3164 = vsub.s32 %v3161, %v3163
        %v3165 = vrot.slane %v3151, %v3164
        %v3166 = vcombine.low %v3110, %v3126
        %v3167 = vcombine.high %v3110, %v3126
        %v3169 = vunpack.c.l.s4 1934713408
        %v3170 = vunpack.c.0.s8 %v3169
        %v3171 = vlaneseq
        %v3172 = vshrl.u32 %v3171, 7
        %v3173 = vsub.s32 %v3170, %v3172
        %v3174 = vrot.slane %v3166, %v3173
        %v3176 = vunpack.c.l.s4 1934713408
        %v3177 = vunpack.c.0.s8 %v3176
        %v3178 = vlaneseq
        %v3179 = vshrl.u32 %v3178, 7
        %v3180 = vsub.s32 %v3177, %v3179
        %v3181 = vrot.slane %v3167, %v3180
        %v3182 = vcombine.low %v3117, %v3133
        %v3183 = vcombine.high %v3117, %v3133
        %v3185 = vunpack.c.l.s4 1934713408
        %v3186 = vunpack.c.0.s8 %v3185
        %v3187 = vlaneseq
        %v3188 = vshrl.u32 %v3187, 7
        %v3189 = vsub.s32 %v3186, %v3188
        %v3190 = vrot.slane %v3182, %v3189
        %v3192 = vunpack.c.l.s4 1934713408
        %v3193 = vunpack.c.0.s8 %v3192
        %v3194 = vlaneseq
        %v3195 = vshrl.u32 %v3194, 7
        %v3196 = vsub.s32 %v3193, %v3195
        %v3197 = vrot.slane %v3183, %v3196
        %v3198 = vcombine.low %v3142, %v3158
        %v3199 = vcombine.high %v3142, %v3158
        %v3201 = vunpack.c.l.s4 1934713408
        %v3202 = vunpack.c.0.s8 %v3201
        %v3203 = vlaneseq
        %v3204 = vshrl.u32 %v3203, 7
        %v3205 = vsub.s32 %v3202, %v3204
        %v3206 = vrot.slane %v3198, %v3205
        %v3208 = vunpack.c.l.s4 1934713408
        %v3209 = vunpack.c.0.s8 %v3208
        %v3210 = vlaneseq
        %v3211 = vshrl.u32 %v3210, 7
        %v3212 = vsub.s32 %v3209, %v3211
        %v3213 = vrot.slane %v3199, %v3212
        %v3214 = vcombine.low %v3149, %v3165
        %v3215 = vcombine.high %v3149, %v3165
        %v3217 = vunpack.c.l.s4 1934713408
        %v3218 = vunpack.c.0.s8 %v3217
        %v3219 = vlaneseq
        %v3220 = vshrl.u32 %v3219, 7
        %v3221 = vsub.s32 %v3218, %v3220
        %v3222 = vrot.slane %v3214, %v3221
        %v3224 = vunpack.c.l.s4 1934713408
        %v3225 = vunpack.c.0.s8 %v3224
        %v3226 = vlaneseq
        %v3227 = vshrl.u32 %v3226, 7
        %v3228 = vsub.s32 %v3225, %v3227
        %v3229 = vrot.slane %v3215, %v3228
        %v3230 = vcombine.low %v3174, %v3206
        %v3231 = vcombine.high %v3174, %v3206
        %v3232 = vcombine.low %v3181, %v3213
        %v3233 = vcombine.high %v3181, %v3213
        %v3234 = vcombine.low %v3190, %v3222
        %v3235 = vcombine.high %v3190, %v3222
        %v3236 = vcombine.low %v3197, %v3229
        %v3237 = vcombine.high %v3197, %v3229
        %v3238 = vcombine.low %v3230, %v3232
        %v3239 = vcombine.high %v3230, %v3232
        %v3241 = vunpack.c.l.s4 1983009808
        %v3242 = vunpack.c.0.s8 %v3241
        %v3243 = vlaneseq
        %v3244 = vshrl.u32 %v3243, 7
        %v3245 = vsub.s32 %v3242, %v3244
        %v3246 = vrot.slane %v3238, %v3245
        %v3248 = vunpack.c.l.s4 1983009808
        %v3249 = vunpack.c.0.s8 %v3248
        %v3250 = vlaneseq
        %v3251 = vshrl.u32 %v3250, 7
        %v3252 = vsub.s32 %v3249, %v3251
        %v3253 = vrot.slane %v3239, %v3252
        %v3254 = vcombine.low %v3231, %v3233
        %v3255 = vcombine.high %v3231, %v3233
        %v3257 = vunpack.c.l.s4 1983009808
        %v3258 = vunpack.c.0.s8 %v3257
        %v3259 = vlaneseq
        %v3260 = vshrl.u32 %v3259, 7
        %v3261 = vsub.s32 %v3258, %v3260
        %v3262 = vrot.slane %v3254, %v3261
        %v3264 = vunpack.c.l.s4 1983009808
        %v3265 = vunpack.c.0.s8 %v3264
        %v3266 = vlaneseq
        %v3267 = vshrl.u32 %v3266, 7
        %v3268 = vsub.s32 %v3265, %v3267
        %v3269 = vrot.slane %v3255, %v3268
        %v3270 = vcombine.low %v3234, %v3236
        %v3271 = vcombine.high %v3234, %v3236
        %v3273 = vunpack.c.l.s4 1983009808
        %v3274 = vunpack.c.0.s8 %v3273
        %v3275 = vlaneseq
        %v3276 = vshrl.u32 %v3275, 7
        %v3277 = vsub.s32 %v3274, %v3276
        %v3278 = vrot.slane %v3270, %v3277
        %v3280 = vunpack.c.l.s4 1983009808
        %v3281 = vunpack.c.0.s8 %v3280
        %v3282 = vlaneseq
        %v3283 = vshrl.u32 %v3282, 7
        %v3284 = vsub.s32 %v3281, %v3283
        %v3285 = vrot.slane %v3271, %v3284
        %v3286 = vcombine.low %v3235, %v3237
        %v3287 = vcombine.high %v3235, %v3237
        %v3289 = vunpack.c.l.s4 1983009808
        %v3290 = vunpack.c.0.s8 %v3289
        %v3291 = vlaneseq
        %v3292 = vshrl.u32 %v3291, 7
        %v3293 = vsub.s32 %v3290, %v3292
        %v3294 = vrot.slane %v3286, %v3293
        %v3296 = vunpack.c.l.s4 1983009808
        %v3297 = vunpack.c.0.s8 %v3296
        %v3298 = vlaneseq
        %v3299 = vshrl.u32 %v3298, 7
        %v3300 = vsub.s32 %v3297, %v3299
        %v3301 = vrot.slane %v3287, %v3300
        %v3302 = vcombine.low %v3246, %v3262
        %v3303 = vcombine.high %v3246, %v3262
        %v3305 = vunpack.c.l.s4 1934713408
        %v3306 = vunpack.c.0.s8 %v3305
        %v3307 = vlaneseq
        %v3308 = vshrl.u32 %v3307, 7
        %v3309 = vsub.s32 %v3306, %v3308
        %v3310 = vrot.slane %v3302, %v3309
        %v3312 = vunpack.c.l.s4 1934713408
        %v3313 = vunpack.c.0.s8 %v3312
        %v3314 = vlaneseq
        %v3315 = vshrl.u32 %v3314, 7
        %v3316 = vsub.s32 %v3313, %v3315
        %v3317 = vrot.slane %v3303, %v3316
        %v3318 = vcombine.low %v3253, %v3269
        %v3319 = vcombine.high %v3253, %v3269
        %v3321 = vunpack.c.l.s4 1934713408
        %v3322 = vunpack.c.0.s8 %v3321
        %v3323 = vlaneseq
        %v3324 = vshrl.u32 %v3323, 7
        %v3325 = vsub.s32 %v3322, %v3324
        %v3326 = vrot.slane %v3318, %v3325
        %v3328 = vunpack.c.l.s4 1934713408
        %v3329 = vunpack.c.0.s8 %v3328
        %v3330 = vlaneseq
        %v3331 = vshrl.u32 %v3330, 7
        %v3332 = vsub.s32 %v3329, %v3331
        %v3333 = vrot.slane %v3319, %v3332
        %v3334 = vcombine.low %v3278, %v3294
        %v3335 = vcombine.high %v3278, %v3294
        %v3337 = vunpack.c.l.s4 1934713408
        %v3338 = vunpack.c.0.s8 %v3337
        %v3339 = vlaneseq
        %v3340 = vshrl.u32 %v3339, 7
        %v3341 = vsub.s32 %v3338, %v3340
        %v3342 = vrot.slane %v3334, %v3341
        %v3344 = vunpack.c.l.s4 1934713408
        %v3345 = vunpack.c.0.s8 %v3344
        %v3346 = vlaneseq
        %v3347 = vshrl.u32 %v3346, 7
        %v3348 = vsub.s32 %v3345, %v3347
        %v3349 = vrot.slane %v3335, %v3348
        %v3350 = vcombine.low %v3285, %v3301
        %v3351 = vcombine.high %v3285, %v3301
        %v3353 = vunpack.c.l.s4 1934713408
        %v3354 = vunpack.c.0.s8 %v3353
        %v3355 = vlaneseq
        %v3356 = vshrl.u32 %v3355, 7
        %v3357 = vsub.s32 %v3354, %v3356
        %v3358 = vrot.slane %v3350, %v3357
        %v3360 = vunpack.c.l.s4 1934713408
        %v3361 = vunpack.c.0.s8 %v3360
        %v3362 = vlaneseq
        %v3363 = vshrl.u32 %v3362, 7
        %v3364 = vsub.s32 %v3361, %v3363
        %v3365 = vrot.slane %v3351, %v3364
        %v3366 = vcombine.low %v3310, %v3342
        %v3367 = vcombine.high %v3310, %v3342
        %v3368 = vcombine.low %v3317, %v3349
        %v3369 = vcombine.high %v3317, %v3349
        %v3370 = vcombine.low %v3326, %v3358
        %v3371 = vcombine.high %v3326, %v3358
        %v3372 = vcombine.low %v3333, %v3365
        %v3373 = vcombine.high %v3333, %v3365
        %3375 = vrot.lane.b32.xlu0 %v3367, 16
        %v3376 = vpop.permute.xlu0 %3375
        %3379 = vrot.lane.b32.xlu0 %v3368, 32
        %v3380 = vpop.permute.xlu0 %3379
        %3383 = vrot.lane.b32.xlu0 %v3369, 48
        %v3384 = vpop.permute.xlu0 %3383
        %3387 = vrot.lane.b32.xlu0 %v3370, 64
        %v3388 = vpop.permute.xlu0 %3387
        %3391 = vrot.lane.b32.xlu0 %v3371, 80
        %v3392 = vpop.permute.xlu0 %3391
        %3395 = vrot.lane.b32.xlu0 %v3372, 96
        %v3396 = vpop.permute.xlu0 %3395
        %3399 = vrot.lane.b32.xlu0 %v3373, 112
        %v3400 = vpop.permute.xlu0 %3399
        %v3402 = vsel %vm2191, %v3366, %v3376
        %vm3403 = vcmask 261120
        %v3404 = vsel %vm3403, %v3402, %v3380
        %vm3405 = vcmask 392192
        %v3406 = vsel %vm3405, %v3404, %v3384
        %vm3407 = vcmask 523264
        %v3408 = vsel %vm3407, %v3406, %v3388
        %vm3409 = vcmask 654336
        %v3410 = vsel %vm3409, %v3408, %v3392
        %vm3411 = vcmask 785408
        %v3412 = vsel %vm3411, %v3410, %v3396
        %vm3413 = vcmask 916480
        %v3414 = vsel %vm3413, %v3412, %v3400
        %v3415 = vpack.c.bf16 %v3414, %v3414
        %v3416 = vld [vmem:[%s599] sm:$0xf]
        %v3417 = vld [vmem:[%s599 + $0x4] sm:$0xf]
        %v3418 = vld [vmem:[%s599 + $0x8] sm:$0xf]
        %v3419 = vld [vmem:[%s599 + $0xc] sm:$0xf]
        %v3420 = vld [vmem:[%s599 + $0x10] sm:$0xf]
        %v3421 = vld [vmem:[%s599 + $0x14] sm:$0xf]
        %v3422 = vld [vmem:[%s599 + $0x18] sm:$0xf]
        %v3423 = vld [vmem:[%s599 + $0x1c] sm:$0xf]
        %v3424 = vld [vmem:[%s599 + $0x20] sm:$0xf]
        %v3425 = vld [vmem:[%s599 + $0x24] sm:$0xf]
        %v3426 = vld [vmem:[%s599 + $0x28] sm:$0xf]
        %v3427 = vld [vmem:[%s599 + $0x2c] sm:$0xf]
        %v3428 = vld [vmem:[%s599 + $0x30] sm:$0xf]
        %v3429 = vld [vmem:[%s599 + $0x34] sm:$0xf]
        %v3430 = vld [vmem:[%s599 + $0x38] sm:$0xf]
        %v3431 = vld [vmem:[%s599 + $0x3c] sm:$0xf]
        %v3448 = vunpack.c.l.b16 %v3416
        %v3449 = vunpack.c.l.b16 %v3417
        %v3450 = vunpack.c.l.b16 %v3418
        %v3451 = vunpack.c.l.b16 %v3419
        %v3452 = vunpack.c.l.b16 %v3420
        %v3453 = vunpack.c.l.b16 %v3421
        %v3454 = vunpack.c.l.b16 %v3422
        %v3455 = vunpack.c.l.b16 %v3423
        %v3456 = vunpack.c.l.b16 %v3424
        %v3457 = vunpack.c.l.b16 %v3425
        %v3458 = vunpack.c.l.b16 %v3426
        %v3459 = vunpack.c.l.b16 %v3427
        %v3460 = vunpack.c.l.b16 %v3428
        %v3461 = vunpack.c.l.b16 %v3429
        %v3462 = vunpack.c.l.b16 %v3430
        %v3463 = vunpack.c.l.b16 %v3431
        %v3464 = vpack.c.b16 %v3449, %v3448
        %v3465 = vpack.c.b16 %v3451, %v3450
        %v3466 = vpack.c.b16 %v3453, %v3452
        %v3467 = vpack.c.b16 %v3455, %v3454
        %v3468 = vpack.c.b16 %v3457, %v3456
        %v3469 = vpack.c.b16 %v3459, %v3458
        %v3470 = vpack.c.b16 %v3461, %v3460
        %v3471 = vpack.c.b16 %v3463, %v3462
        %3480 = vmatprep.subr.bf16.mxu0 0
        %3481 = vmatpush1.bf16.msra.mxu0 %v3464
        %3482 = vmatprep.subr.bf16.mxu0 0
        %3483 = vmatpush1.bf16.msra.mxu0 %v3465
        %3484 = vmatprep.subr.bf16.mxu0 0
        %3485 = vmatpush1.bf16.msra.mxu0 %v3466
        %3486 = vmatprep.subr.bf16.mxu0 0
        %3487 = vmatpush1.bf16.msra.mxu0 %v3467
        %3488 = vmatprep.subr.bf16.mxu0 0
        %3489 = vmatpush1.bf16.msra.mxu0 %v3468
        %3490 = vmatprep.subr.bf16.mxu0 0
        %3491 = vmatpush1.bf16.msra.mxu0 %v3469
        %3492 = vmatprep.subr.bf16.mxu0 0
        %3493 = vmatpush1.bf16.msra.mxu0 %v3470
        %3494 = vmatprep.subr.bf16.mxu0 0
        %3495 = vmatpush1.bf16.msra.mxu0 %v3471
        %3496 = vmatprep.subr.bf16.mxu0 0
        %3497 = vmatpush1.bf16.msra.mxu0 0
        %3498 = vmatprep.subr.bf16.mxu0 0
        %3499 = vmatpush1.bf16.msra.mxu0 0
        %3500 = vmatprep.subr.bf16.mxu0 0
        %3501 = vmatpush1.bf16.msra.mxu0 0
        %3502 = vmatprep.subr.bf16.mxu0 0
        %3503 = vmatpush1.bf16.msra.mxu0 0
        %3504 = vmatprep.subr.bf16.mxu0 0
        %3505 = vmatpush1.bf16.msra.mxu0 0
        %3506 = vmatprep.subr.bf16.mxu0 0
        %3507 = vmatpush1.bf16.msra.mxu0 0
        %3508 = vmatprep.subr.bf16.mxu0 0
        %3509 = vmatpush1.bf16.msra.mxu0 0
        %3510 = vmatprep.subr.bf16.mxu0 0
        %3511 = vmatpush1.bf16.msra.mxu0 0
        %3512 = vmatprep.mubr.bf16.mxu0 0
        %3513 = vmatmul.mubr.bf16.gmra.mrb[0].mxu0 %v3415
        %v3514 = vpop.f32.mrb[0].mxu0
        %v3515 = vadd.f32 %v645, %v3514
        %v3516 = vpop.f32.mrb[0].mxu0
        %v3517 = vpop.f32.mrb[0].mxu0
        %v3518 = vpop.f32.mrb[0].mxu0
        %3519 = vdwg.mxu0
        %v3520 = vld [vmem:[%s602] sm:$0x1]
        %v3521 = vld [vmem:[%s605] sm:$0x1]
        %3522 = vadd.xlane.f32.xlu0 %v3515
        %v3523 = vpop.xlane.xlu0 %3522
        %v3524 = vrcp.pop 128.0
        %v3525 = vmul.f32 %v3523, %v3524
        %v3526 = vsub.f32 %v3515, %v3525
        %v3527 = vmul.f32 %v3526, %v3526
        %3528 = vadd.xlane.f32.xlu0 %v3527
        %v3529 = vpop.xlane.xlu0 %3528
        %v3530 = vmul.f32 %v3529, %v3524
        %v3531 = vadd.f32 %v3530, 1e-05
        %v3532 = vrsqrt.pop %v3531
        %v3533 = vmul.f32 %v3526, %v3532
        %v3535 = vlaneseq
        %v3536 = vshrl.u32 %v3535, 7
        %v3537 = vsub.s32 0, %v3536
        %v3538 = vrot.slane %v3520, %v3537
        %v3540 = vmul.f32 %v3533, %v3538
        %v3542 = vlaneseq
        %v3543 = vshrl.u32 %v3542, 7
        %v3544 = vsub.s32 0, %v3543
        %v3545 = vrot.slane %v3521, %v3544
        %v3547 = vadd.f32 %v3540, %v3545
        %v3548 = vpack.c.bf16 %v3547, %v3547
        %v3549 = vld [vmem:[%s610] sm:$0xff]
        %v3550 = vld [vmem:[%s610 + $0x8] sm:$0xff]
        %v3551 = vld [vmem:[%s610 + $0x10] sm:$0xff]
        %v3552 = vld [vmem:[%s610 + $0x18] sm:$0xff]
        %v3553 = vld [vmem:[%s610 + $0x20] sm:$0xff]
        %v3554 = vld [vmem:[%s610 + $0x28] sm:$0xff]
        %v3555 = vld [vmem:[%s610 + $0x30] sm:$0xff]
        %v3556 = vld [vmem:[%s610 + $0x38] sm:$0xff]
        %v3557 = vld [vmem:[%s610 + $0x40] sm:$0xff]
        %v3558 = vld [vmem:[%s610 + $0x48] sm:$0xff]
        %v3559 = vld [vmem:[%s610 + $0x50] sm:$0xff]
        %v3560 = vld [vmem:[%s610 + $0x58] sm:$0xff]
        %v3561 = vld [vmem:[%s610 + $0x60] sm:$0xff]
        %v3562 = vld [vmem:[%s610 + $0x68] sm:$0xff]
        %v3563 = vld [vmem:[%s610 + $0x70] sm:$0xff]
        %v3564 = vld [vmem:[%s610 + $0x78] sm:$0xff]
        %v3565 = vld [vmem:[%s610 + $0x80] sm:$0xff]
        %v3566 = vld [vmem:[%s610 + $0x88] sm:$0xff]
        %v3567 = vld [vmem:[%s610 + $0x90] sm:$0xff]
        %v3568 = vld [vmem:[%s610 + $0x98] sm:$0xff]
        %v3569 = vld [vmem:[%s610 + $0xa0] sm:$0xff]
        %v3570 = vld [vmem:[%s610 + $0xa8] sm:$0xff]
        %v3571 = vld [vmem:[%s610 + $0xb0] sm:$0xff]
        %v3572 = vld [vmem:[%s610 + $0xb8] sm:$0xff]
        %v3573 = vld [vmem:[%s610 + $0xc0] sm:$0xff]
        %v3574 = vld [vmem:[%s610 + $0xc8] sm:$0xff]
        %v3575 = vld [vmem:[%s610 + $0xd0] sm:$0xff]
        %v3576 = vld [vmem:[%s610 + $0xd8] sm:$0xff]
        %v3577 = vld [vmem:[%s610 + $0xe0] sm:$0xff]
        %v3578 = vld [vmem:[%s610 + $0xe8] sm:$0xff]
        %v3579 = vld [vmem:[%s610 + $0xf0] sm:$0xff]
        %v3580 = vld [vmem:[%s610 + $0xf8] sm:$0xff]
        %v3581 = vld [vmem:[%s610 + $0x100] sm:$0xff]
        %v3582 = vld [vmem:[%s610 + $0x108] sm:$0xff]
        %v3583 = vld [vmem:[%s610 + $0x110] sm:$0xff]
        %v3584 = vld [vmem:[%s610 + $0x118] sm:$0xff]
        %v3585 = vld [vmem:[%s610 + $0x120] sm:$0xff]
        %v3586 = vld [vmem:[%s610 + $0x128] sm:$0xff]
        %v3587 = vld [vmem:[%s610 + $0x130] sm:$0xff]
        %v3588 = vld [vmem:[%s610 + $0x138] sm:$0xff]
        %v3589 = vld [vmem:[%s610 + $0x140] sm:$0xff]
        %v3590 = vld [vmem:[%s610 + $0x148] sm:$0xff]
        %v3591 = vld [vmem:[%s610 + $0x150] sm:$0xff]
        %v3592 = vld [vmem:[%s610 + $0x158] sm:$0xff]
        %v3593 = vld [vmem:[%s610 + $0x160] sm:$0xff]
        %v3594 = vld [vmem:[%s610 + $0x168] sm:$0xff]
        %v3595 = vld [vmem:[%s610 + $0x170] sm:$0xff]
        %v3596 = vld [vmem:[%s610 + $0x178] sm:$0xff]
        %v3597 = vld [vmem:[%s610 + $0x180] sm:$0xff]
        %v3598 = vld [vmem:[%s610 + $0x188] sm:$0xff]
        %v3599 = vld [vmem:[%s610 + $0x190] sm:$0xff]
        %v3600 = vld [vmem:[%s610 + $0x198] sm:$0xff]
        %v3601 = vld [vmem:[%s610 + $0x1a0] sm:$0xff]
        %v3602 = vld [vmem:[%s610 + $0x1a8] sm:$0xff]
        %v3603 = vld [vmem:[%s610 + $0x1b0] sm:$0xff]
        %v3604 = vld [vmem:[%s610 + $0x1b8] sm:$0xff]
        %v3605 = vld [vmem:[%s610 + $0x1c0] sm:$0xff]
        %v3606 = vld [vmem:[%s610 + $0x1c8] sm:$0xff]
        %v3607 = vld [vmem:[%s610 + $0x1d0] sm:$0xff]
        %v3608 = vld [vmem:[%s610 + $0x1d8] sm:$0xff]
        %v3609 = vld [vmem:[%s610 + $0x1e0] sm:$0xff]
        %v3610 = vld [vmem:[%s610 + $0x1e8] sm:$0xff]
        %v3611 = vld [vmem:[%s610 + $0x1f0] sm:$0xff]
        %v3612 = vld [vmem:[%s610 + $0x1f8] sm:$0xff]
        %v3613 = vld [vmem:[%s614] sm:$0xff]
        %v3615 = vlaneseq
        %v3616 = vshrl.u32 %v3615, 7
        %v3617 = vsub.s32 0, %v3616
        %v3618 = vrot.slane %v3613, %v3617
        %v3619 = vlaneseq
        %v3620 = vshrl.u32 %v3619, 7
        %v3621 = vsub.s32 1, %v3620
        %v3622 = vrot.slane %v3613, %v3621
        %v3623 = vlaneseq
        %v3624 = vshrl.u32 %v3623, 7
        %v3625 = vsub.s32 2, %v3624
        %v3626 = vrot.slane %v3613, %v3625
        %v3627 = vlaneseq
        %v3628 = vshrl.u32 %v3627, 7
        %v3629 = vsub.s32 3, %v3628
        %v3630 = vrot.slane %v3613, %v3629
        %v3631 = vlaneseq
        %v3632 = vshrl.u32 %v3631, 7
        %v3633 = vsub.s32 4, %v3632
        %v3634 = vrot.slane %v3613, %v3633
        %v3635 = vlaneseq
        %v3636 = vshrl.u32 %v3635, 7
        %v3637 = vsub.s32 5, %v3636
        %v3638 = vrot.slane %v3613, %v3637
        %v3639 = vlaneseq
        %v3640 = vshrl.u32 %v3639, 7
        %v3641 = vsub.s32 6, %v3640
        %v3642 = vrot.slane %v3613, %v3641
        %v3643 = vlaneseq
        %v3644 = vshrl.u32 %v3643, 7
        %v3645 = vsub.s32 7, %v3644
        %v3646 = vrot.slane %v3613, %v3645
        %v3719 = vunpack.c.l.b16 %v3549
        %v3720 = vunpack.c.h.b16 %v3549
        %v3721 = vunpack.c.l.b16 %v3550
        %v3722 = vunpack.c.h.b16 %v3550
        %v3723 = vunpack.c.l.b16 %v3551
        %v3724 = vunpack.c.h.b16 %v3551
        %v3725 = vunpack.c.l.b16 %v3552
        %v3726 = vunpack.c.h.b16 %v3552
        %v3727 = vunpack.c.l.b16 %v3553
        %v3728 = vunpack.c.h.b16 %v3553
        %v3729 = vunpack.c.l.b16 %v3554
        %v3730 = vunpack.c.h.b16 %v3554
        %v3731 = vunpack.c.l.b16 %v3555
        %v3732 = vunpack.c.h.b16 %v3555
        %v3733 = vunpack.c.l.b16 %v3556
        %v3734 = vunpack.c.h.b16 %v3556
        %v3735 = vunpack.c.l.b16 %v3557
        %v3736 = vunpack.c.h.b16 %v3557
        %v3737 = vunpack.c.l.b16 %v3558
        %v3738 = vunpack.c.h.b16 %v3558
        %v3739 = vunpack.c.l.b16 %v3559
        %v3740 = vunpack.c.h.b16 %v3559
        %v3741 = vunpack.c.l.b16 %v3560
        %v3742 = vunpack.c.h.b16 %v3560
        %v3743 = vunpack.c.l.b16 %v3561
        %v3744 = vunpack.c.h.b16 %v3561
        %v3745 = vunpack.c.l.b16 %v3562
        %v3746 = vunpack.c.h.b16 %v3562
        %v3747 = vunpack.c.l.b16 %v3563
        %v3748 = vunpack.c.h.b16 %v3563
        %v3749 = vunpack.c.l.b16 %v3564
        %v3750 = vunpack.c.h.b16 %v3564
        %v3751 = vunpack.c.l.b16 %v3565
        %v3752 = vunpack.c.h.b16 %v3565
        %v3753 = vunpack.c.l.b16 %v3566
        %v3754 = vunpack.c.h.b16 %v3566
        %v3755 = vunpack.c.l.b16 %v3567
        %v3756 = vunpack.c.h.b16 %v3567
        %v3757 = vunpack.c.l.b16 %v3568
        %v3758 = vunpack.c.h.b16 %v3568
        %v3759 = vunpack.c.l.b16 %v3569
        %v3760 = vunpack.c.h.b16 %v3569
        %v3761 = vunpack.c.l.b16 %v3570
        %v3762 = vunpack.c.h.b16 %v3570
        %v3763 = vunpack.c.l.b16 %v3571
        %v3764 = vunpack.c.h.b16 %v3571
        %v3765 = vunpack.c.l.b16 %v3572
        %v3766 = vunpack.c.h.b16 %v3572
        %v3767 = vunpack.c.l.b16 %v3573
        %v3768 = vunpack.c.h.b16 %v3573
        %v3769 = vunpack.c.l.b16 %v3574
        %v3770 = vunpack.c.h.b16 %v3574
        %v3771 = vunpack.c.l.b16 %v3575
        %v3772 = vunpack.c.h.b16 %v3575
        %v3773 = vunpack.c.l.b16 %v3576
        %v3774 = vunpack.c.h.b16 %v3576
        %v3775 = vunpack.c.l.b16 %v3577
        %v3776 = vunpack.c.h.b16 %v3577
        %v3777 = vunpack.c.l.b16 %v3578
        %v3778 = vunpack.c.h.b16 %v3578
        %v3779 = vunpack.c.l.b16 %v3579
        %v3780 = vunpack.c.h.b16 %v3579
        %v3781 = vunpack.c.l.b16 %v3580
        %v3782 = vunpack.c.h.b16 %v3580
        %v3783 = vunpack.c.l.b16 %v3581
        %v3784 = vunpack.c.h.b16 %v3581
        %v3785 = vunpack.c.l.b16 %v3582
        %v3786 = vunpack.c.h.b16 %v3582
        %v3787 = vunpack.c.l.b16 %v3583
        %v3788 = vunpack.c.h.b16 %v3583
        %v3789 = vunpack.c.l.b16 %v3584
        %v3790 = vunpack.c.h.b16 %v3584
        %v3791 = vunpack.c.l.b16 %v3585
        %v3792 = vunpack.c.h.b16 %v3585
        %v3793 = vunpack.c.l.b16 %v3586
        %v3794 = vunpack.c.h.b16 %v3586
        %v3795 = vunpack.c.l.b16 %v3587
        %v3796 = vunpack.c.h.b16 %v3587
        %v3797 = vunpack.c.l.b16 %v3588
        %v3798 = vunpack.c.h.b16 %v3588
        %v3799 = vunpack.c.l.b16 %v3589
        %v3800 = vunpack.c.h.b16 %v3589
        %v3801 = vunpack.c.l.b16 %v3590
        %v3802 = vunpack.c.h.b16 %v3590
        %v3803 = vunpack.c.l.b16 %v3591
        %v3804 = vunpack.c.h.b16 %v3591
        %v3805 = vunpack.c.l.b16 %v3592
        %v3806 = vunpack.c.h.b16 %v3592
        %v3807 = vunpack.c.l.b16 %v3593
        %v3808 = vunpack.c.h.b16 %v3593
        %v3809 = vunpack.c.l.b16 %v3594
        %v3810 = vunpack.c.h.b16 %v3594
        %v3811 = vunpack.c.l.b16 %v3595
        %v3812 = vunpack.c.h.b16 %v3595
        %v3813 = vunpack.c.l.b16 %v3596
        %v3814 = vunpack.c.h.b16 %v3596
        %v3815 = vunpack.c.l.b16 %v3597
        %v3816 = vunpack.c.h.b16 %v3597
        %v3817 = vunpack.c.l.b16 %v3598
        %v3818 = vunpack.c.h.b16 %v3598
        %v3819 = vunpack.c.l.b16 %v3599
        %v3820 = vunpack.c.h.b16 %v3599
        %v3821 = vunpack.c.l.b16 %v3600
        %v3822 = vunpack.c.h.b16 %v3600
        %v3823 = vunpack.c.l.b16 %v3601
        %v3824 = vunpack.c.h.b16 %v3601
        %v3825 = vunpack.c.l.b16 %v3602
        %v3826 = vunpack.c.h.b16 %v3602
        %v3827 = vunpack.c.l.b16 %v3603
        %v3828 = vunpack.c.h.b16 %v3603
        %v3829 = vunpack.c.l.b16 %v3604
        %v3830 = vunpack.c.h.b16 %v3604
        %v3831 = vunpack.c.l.b16 %v3605
        %v3832 = vunpack.c.h.b16 %v3605
        %v3833 = vunpack.c.l.b16 %v3606
        %v3834 = vunpack.c.h.b16 %v3606
        %v3835 = vunpack.c.l.b16 %v3607
        %v3836 = vunpack.c.h.b16 %v3607
        %v3837 = vunpack.c.l.b16 %v3608
        %v3838 = vunpack.c.h.b16 %v3608
        %v3839 = vunpack.c.l.b16 %v3609
        %v3840 = vunpack.c.h.b16 %v3609
        %v3841 = vunpack.c.l.b16 %v3610
        %v3842 = vunpack.c.h.b16 %v3610
        %v3843 = vunpack.c.l.b16 %v3611
        %v3844 = vunpack.c.h.b16 %v3611
        %v3845 = vunpack.c.l.b16 %v3612
        %v3846 = vunpack.c.h.b16 %v3612
        %v3847 = vpack.c.b16 %v3727, %v3719
        %v3848 = vpack.c.b16 %v3728, %v3720
        %v3849 = vpack.c.b16 %v3729, %v3721
        %v3850 = vpack.c.b16 %v3730, %v3722
        %v3851 = vpack.c.b16 %v3731, %v3723
        %v3852 = vpack.c.b16 %v3732, %v3724
        %v3853 = vpack.c.b16 %v3733, %v3725
        %v3854 = vpack.c.b16 %v3734, %v3726
        %v3855 = vpack.c.b16 %v3743, %v3735
        %v3856 = vpack.c.b16 %v3744, %v3736
        %v3857 = vpack.c.b16 %v3745, %v3737
        %v3858 = vpack.c.b16 %v3746, %v3738
        %v3859 = vpack.c.b16 %v3747, %v3739
        %v3860 = vpack.c.b16 %v3748, %v3740
        %v3861 = vpack.c.b16 %v3749, %v3741
        %v3862 = vpack.c.b16 %v3750, %v3742
        %v3863 = vpack.c.b16 %v3759, %v3751
        %v3864 = vpack.c.b16 %v3760, %v3752
        %v3865 = vpack.c.b16 %v3761, %v3753
        %v3866 = vpack.c.b16 %v3762, %v3754
        %v3867 = vpack.c.b16 %v3763, %v3755
        %v3868 = vpack.c.b16 %v3764, %v3756
        %v3869 = vpack.c.b16 %v3765, %v3757
        %v3870 = vpack.c.b16 %v3766, %v3758
        %v3871 = vpack.c.b16 %v3775, %v3767
        %v3872 = vpack.c.b16 %v3776, %v3768
        %v3873 = vpack.c.b16 %v3777, %v3769
        %v3874 = vpack.c.b16 %v3778, %v3770
        %v3875 = vpack.c.b16 %v3779, %v3771
        %v3876 = vpack.c.b16 %v3780, %v3772
        %v3877 = vpack.c.b16 %v3781, %v3773
        %v3878 = vpack.c.b16 %v3782, %v3774
        %v3879 = vpack.c.b16 %v3791, %v3783
        %v3880 = vpack.c.b16 %v3792, %v3784
        %v3881 = vpack.c.b16 %v3793, %v3785
        %v3882 = vpack.c.b16 %v3794, %v3786
        %v3883 = vpack.c.b16 %v3795, %v3787
        %v3884 = vpack.c.b16 %v3796, %v3788
        %v3885 = vpack.c.b16 %v3797, %v3789
        %v3886 = vpack.c.b16 %v3798, %v3790
        %v3887 = vpack.c.b16 %v3807, %v3799
        %v3888 = vpack.c.b16 %v3808, %v3800
        %v3889 = vpack.c.b16 %v3809, %v3801
        %v3890 = vpack.c.b16 %v3810, %v3802
        %v3891 = vpack.c.b16 %v3811, %v3803
        %v3892 = vpack.c.b16 %v3812, %v3804
        %v3893 = vpack.c.b16 %v3813, %v3805
        %v3894 = vpack.c.b16 %v3814, %v3806
        %v3895 = vpack.c.b16 %v3823, %v3815
        %v3896 = vpack.c.b16 %v3824, %v3816
        %v3897 = vpack.c.b16 %v3825, %v3817
        %v3898 = vpack.c.b16 %v3826, %v3818
        %v3899 = vpack.c.b16 %v3827, %v3819
        %v3900 = vpack.c.b16 %v3828, %v3820
        %v3901 = vpack.c.b16 %v3829, %v3821
        %v3902 = vpack.c.b16 %v3830, %v3822
        %v3903 = vpack.c.b16 %v3839, %v3831
        %v3904 = vpack.c.b16 %v3840, %v3832
        %v3905 = vpack.c.b16 %v3841, %v3833
        %v3906 = vpack.c.b16 %v3842, %v3834
        %v3907 = vpack.c.b16 %v3843, %v3835
        %v3908 = vpack.c.b16 %v3844, %v3836
        %v3909 = vpack.c.b16 %v3845, %v3837
        %v3910 = vpack.c.b16 %v3846, %v3838
        %3975 = vmatprep.subr.bf16.mxu0 %v3848
        %3976 = vmatpush1.bf16.msra.mxu0 %v3847
        %3977 = vmatprep.subr.bf16.mxu0 %v3856
        %3978 = vmatpush1.bf16.msra.mxu0 %v3855
        %3979 = vmatprep.subr.bf16.mxu0 %v3864
        %3980 = vmatpush1.bf16.msra.mxu0 %v3863
        %3981 = vmatprep.subr.bf16.mxu0 %v3872
        %3982 = vmatpush1.bf16.msra.mxu0 %v3871
        %3983 = vmatprep.subr.bf16.mxu0 %v3880
        %3984 = vmatpush1.bf16.msra.mxu0 %v3879
        %3985 = vmatprep.subr.bf16.mxu0 %v3888
        %3986 = vmatpush1.bf16.msra.mxu0 %v3887
        %3987 = vmatprep.subr.bf16.mxu0 %v3896
        %3988 = vmatpush1.bf16.msra.mxu0 %v3895
        %3989 = vmatprep.subr.bf16.mxu0 %v3904
        %3990 = vmatpush1.bf16.msra.mxu0 %v3903
        %3991 = vmatprep.subr.bf16.mxu0 0
        %3992 = vmatpush1.bf16.msra.mxu0 0
        %3993 = vmatprep.subr.bf16.mxu0 0
        %3994 = vmatpush1.bf16.msra.mxu0 0
        %3995 = vmatprep.subr.bf16.mxu0 0
        %3996 = vmatpush1.bf16.msra.mxu0 0
        %3997 = vmatprep.subr.bf16.mxu0 0
        %3998 = vmatpush1.bf16.msra.mxu0 0
        %3999 = vmatprep.subr.bf16.mxu0 0
        %4000 = vmatpush1.bf16.msra.mxu0 0
        %4001 = vmatprep.subr.bf16.mxu0 0
        %4002 = vmatpush1.bf16.msra.mxu0 0
        %4003 = vmatprep.subr.bf16.mxu0 0
        %4004 = vmatpush1.bf16.msra.mxu0 0
        %4005 = vmatprep.subr.bf16.mxu0 0
        %4006 = vmatpush1.bf16.msra.mxu0 0
        %4007 = vmatprep.mubr.bf16.mxu0 0
        %4008 = vmatmul.mubr.bf16.gmra.mrb[0].mxu0 %v3548
        %v4009 = vpop.f32.mrb[0].mxu0
        %v4010 = vadd.f32 %v3618, %v4009
        %v4011 = vpop.f32.mrb[0].mxu0
        %v4012 = vadd.f32 %v3622, %v4011
        %v4013 = vpop.f32.mrb[0].mxu0
        %v4014 = vpop.f32.mrb[0].mxu0
        %4015 = vdwg.mxu0
        %4016 = vmatprep.subr.bf16.mxu0 %v3850
        %4017 = vmatpush1.bf16.msra.mxu0 %v3849
        %4018 = vmatprep.subr.bf16.mxu0 %v3858
        %4019 = vmatpush1.bf16.msra.mxu0 %v3857
        %4020 = vmatprep.subr.bf16.mxu0 %v3866
        %4021 = vmatpush1.bf16.msra.mxu0 %v3865
        %4022 = vmatprep.subr.bf16.mxu0 %v3874
        %4023 = vmatpush1.bf16.msra.mxu0 %v3873
        %4024 = vmatprep.subr.bf16.mxu0 %v3882
        %4025 = vmatpush1.bf16.msra.mxu0 %v3881
        %4026 = vmatprep.subr.bf16.mxu0 %v3890
        %4027 = vmatpush1.bf16.msra.mxu0 %v3889
        %4028 = vmatprep.subr.bf16.mxu0 %v3898
        %4029 = vmatpush1.bf16.msra.mxu0 %v3897
        %4030 = vmatprep.subr.bf16.mxu0 %v3906
        %4031 = vmatpush1.bf16.msra.mxu0 %v3905
        %4032 = vmatprep.subr.bf16.mxu0 0
        %4033 = vmatpush1.bf16.msra.mxu0 0
        %4034 = vmatprep.subr.bf16.mxu0 0
        %4035 = vmatpush1.bf16.msra.mxu0 0
        %4036 = vmatprep.subr.bf16.mxu0 0
        %4037 = vmatpush1.bf16.msra.mxu0 0
        %4038 = vmatprep.subr.bf16.mxu0 0
        %4039 = vmatpush1.bf16.msra.mxu0 0
        %4040 = vmatprep.subr.bf16.mxu0 0
        %4041 = vmatpush1.bf16.msra.mxu0 0
        %4042 = vmatprep.subr.bf16.mxu0 0
        %4043 = vmatpush1.bf16.msra.mxu0 0
        %4044 = vmatprep.subr.bf16.mxu0 0
        %4045 = vmatpush1.bf16.msra.mxu0 0
        %4046 = vmatprep.subr.bf16.mxu0 0
        %4047 = vmatpush1.bf16.msra.mxu0 0
        %4048 = vmatprep.mubr.bf16.mxu0 0
        %4049 = vmatmul.mubr.bf16.gmra.mrb[0].mxu0 %v3548
        %v4050 = vpop.f32.mrb[0].mxu0
        %v4051 = vadd.f32 %v3626, %v4050
        %v4052 = vpop.f32.mrb[0].mxu0
        %v4053 = vadd.f32 %v3630, %v4052
        %v4054 = vpop.f32.mrb[0].mxu0
        %v4055 = vpop.f32.mrb[0].mxu0
        %4056 = vdwg.mxu0
        %4057 = vmatprep.subr.bf16.mxu0 %v3852
        %4058 = vmatpush1.bf16.msra.mxu0 %v3851
        %4059 = vmatprep.subr.bf16.mxu0 %v3860
        %4060 = vmatpush1.bf16.msra.mxu0 %v3859
        %4061 = vmatprep.subr.bf16.mxu0 %v3868
        %4062 = vmatpush1.bf16.msra.mxu0 %v3867
        %4063 = vmatprep.subr.bf16.mxu0 %v3876
        %4064 = vmatpush1.bf16.msra.mxu0 %v3875
        %4065 = vmatprep.subr.bf16.mxu0 %v3884
        %4066 = vmatpush1.bf16.msra.mxu0 %v3883
        %4067 = vmatprep.subr.bf16.mxu0 %v3892
        %4068 = vmatpush1.bf16.msra.mxu0 %v3891
        %4069 = vmatprep.subr.bf16.mxu0 %v3900
        %4070 = vmatpush1.bf16.msra.mxu0 %v3899
        %4071 = vmatprep.subr.bf16.mxu0 %v3908
        %4072 = vmatpush1.bf16.msra.mxu0 %v3907
        %4073 = vmatprep.subr.bf16.mxu0 0
        %4074 = vmatpush1.bf16.msra.mxu0 0
        %4075 = vmatprep.subr.bf16.mxu0 0
        %4076 = vmatpush1.bf16.msra.mxu0 0
        %4077 = vmatprep.subr.bf16.mxu0 0
        %4078 = vmatpush1.bf16.msra.mxu0 0
        %4079 = vmatprep.subr.bf16.mxu0 0
        %4080 = vmatpush1.bf16.msra.mxu0 0
        %4081 = vmatprep.subr.bf16.mxu0 0
        %4082 = vmatpush1.bf16.msra.mxu0 0
        %4083 = vmatprep.subr.bf16.mxu0 0
        %4084 = vmatpush1.bf16.msra.mxu0 0
        %4085 = vmatprep.subr.bf16.mxu0 0
        %4086 = vmatpush1.bf16.msra.mxu0 0
        %4087 = vmatprep.subr.bf16.mxu0 0
        %4088 = vmatpush1.bf16.msra.mxu0 0
        %4089 = vmatprep.mubr.bf16.mxu0 0
        %4090 = vmatmul.mubr.bf16.gmra.mrb[0].mxu0 %v3548
        %v4091 = vpop.f32.mrb[0].mxu0
        %v4092 = vadd.f32 %v3634, %v4091
        %v4093 = vpop.f32.mrb[0].mxu0
        %v4094 = vadd.f32 %v3638, %v4093
        %v4095 = vpop.f32.mrb[0].mxu0
        %v4096 = vpop.f32.mrb[0].mxu0
        %4097 = vdwg.mxu0
        %4098 = vmatprep.subr.bf16.mxu0 %v3854
        %4099 = vmatpush1.bf16.msra.mxu0 %v3853
        %4100 = vmatprep.subr.bf16.mxu0 %v3862
        %4101 = vmatpush1.bf16.msra.mxu0 %v3861
        %4102 = vmatprep.subr.bf16.mxu0 %v3870
        %4103 = vmatpush1.bf16.msra.mxu0 %v3869
        %4104 = vmatprep.subr.bf16.mxu0 %v3878
        %4105 = vmatpush1.bf16.msra.mxu0 %v3877
        %4106 = vmatprep.subr.bf16.mxu0 %v3886
        %4107 = vmatpush1.bf16.msra.mxu0 %v3885
        %4108 = vmatprep.subr.bf16.mxu0 %v3894
        %4109 = vmatpush1.bf16.msra.mxu0 %v3893
        %4110 = vmatprep.subr.bf16.mxu0 %v3902
        %4111 = vmatpush1.bf16.msra.mxu0 %v3901
        %4112 = vmatprep.subr.bf16.mxu0 %v3910
        %4113 = vmatpush1.bf16.msra.mxu0 %v3909
        %4114 = vmatprep.subr.bf16.mxu0 0
        %4115 = vmatpush1.bf16.msra.mxu0 0
        %4116 = vmatprep.subr.bf16.mxu0 0
        %4117 = vmatpush1.bf16.msra.mxu0 0
        %4118 = vmatprep.subr.bf16.mxu0 0
        %4119 = vmatpush1.bf16.msra.mxu0 0
        %4120 = vmatprep.subr.bf16.mxu0 0
        %4121 = vmatpush1.bf16.msra.mxu0 0
        %4122 = vmatprep.subr.bf16.mxu0 0
        %4123 = vmatpush1.bf16.msra.mxu0 0
        %4124 = vmatprep.subr.bf16.mxu0 0
        %4125 = vmatpush1.bf16.msra.mxu0 0
        %4126 = vmatprep.subr.bf16.mxu0 0
        %4127 = vmatpush1.bf16.msra.mxu0 0
        %4128 = vmatprep.subr.bf16.mxu0 0
        %4129 = vmatpush1.bf16.msra.mxu0 0
        %4130 = vmatprep.mubr.bf16.mxu0 0
        %4131 = vmatmul.mubr.bf16.gmra.mrb[0].mxu0 %v3548
        %v4132 = vpop.f32.mrb[0].mxu0
        %v4133 = vadd.f32 %v3642, %v4132
        %v4134 = vpop.f32.mrb[0].mxu0
        %v4135 = vadd.f32 %v3646, %v4134
        %v4136 = vpop.f32.mrb[0].mxu0
        %v4137 = vpop.f32.mrb[0].mxu0
        %4138 = vdwg.mxu0
        %v4139 = vmax.f32 %v4010, 0.0
        %v4140 = vmax.f32 %v4012, 0.0
        %v4141 = vmax.f32 %v4051, 0.0
        %v4142 = vmax.f32 %v4053, 0.0
        %v4143 = vmax.f32 %v4092, 0.0
        %v4144 = vmax.f32 %v4094, 0.0
        %v4145 = vmax.f32 %v4133, 0.0
        %v4146 = vmax.f32 %v4135, 0.0
        %v4147 = vpack.c.bf16 %v4139, %v4139
        %v4148 = vpack.c.bf16 %v4140, %v4140
        %v4149 = vpack.c.bf16 %v4141, %v4141
        %v4150 = vpack.c.bf16 %v4142, %v4142
        %v4151 = vpack.c.bf16 %v4143, %v4143
        %v4152 = vpack.c.bf16 %v4144, %v4144
        %v4153 = vpack.c.bf16 %v4145, %v4145
        %v4154 = vpack.c.bf16 %v4146, %v4146
        %v4155 = vld [vmem:[%s619] sm:$0xf]
        %v4156 = vld [vmem:[%s619 + $0x4] sm:$0xf]
        %v4157 = vld [vmem:[%s619 + $0x8] sm:$0xf]
        %v4158 = vld [vmem:[%s619 + $0xc] sm:$0xf]
        %v4159 = vld [vmem:[%s619 + $0x10] sm:$0xf]
        %v4160 = vld [vmem:[%s619 + $0x14] sm:$0xf]
        %v4161 = vld [vmem:[%s619 + $0x18] sm:$0xf]
        %v4162 = vld [vmem:[%s619 + $0x1c] sm:$0xf]
        %v4163 = vld [vmem:[%s619 + $0x20] sm:$0xf]
        %v4164 = vld [vmem:[%s619 + $0x24] sm:$0xf]
        %v4165 = vld [vmem:[%s619 + $0x28] sm:$0xf]
        %v4166 = vld [vmem:[%s619 + $0x2c] sm:$0xf]
        %v4167 = vld [vmem:[%s619 + $0x30] sm:$0xf]
        %v4168 = vld [vmem:[%s619 + $0x34] sm:$0xf]
        %v4169 = vld [vmem:[%s619 + $0x38] sm:$0xf]
        %v4170 = vld [vmem:[%s619 + $0x3c] sm:$0xf]
        %v4171 = vld [vmem:[%s619 + $0x40] sm:$0xf]
        %v4172 = vld [vmem:[%s619 + $0x44] sm:$0xf]
        %v4173 = vld [vmem:[%s619 + $0x48] sm:$0xf]
        %v4174 = vld [vmem:[%s619 + $0x4c] sm:$0xf]
        %v4175 = vld [vmem:[%s619 + $0x50] sm:$0xf]
        %v4176 = vld [vmem:[%s619 + $0x54] sm:$0xf]
        %v4177 = vld [vmem:[%s619 + $0x58] sm:$0xf]
        %v4178 = vld [vmem:[%s619 + $0x5c] sm:$0xf]
        %v4179 = vld [vmem:[%s619 + $0x60] sm:$0xf]
        %v4180 = vld [vmem:[%s619 + $0x64] sm:$0xf]
        %v4181 = vld [vmem:[%s619 + $0x68] sm:$0xf]
        %v4182 = vld [vmem:[%s619 + $0x6c] sm:$0xf]
        %v4183 = vld [vmem:[%s619 + $0x70] sm:$0xf]
        %v4184 = vld [vmem:[%s619 + $0x74] sm:$0xf]
        %v4185 = vld [vmem:[%s619 + $0x78] sm:$0xf]
        %v4186 = vld [vmem:[%s619 + $0x7c] sm:$0xf]
        %v4187 = vld [vmem:[%s619 + $0x80] sm:$0xf]
        %v4188 = vld [vmem:[%s619 + $0x84] sm:$0xf]
        %v4189 = vld [vmem:[%s619 + $0x88] sm:$0xf]
        %v4190 = vld [vmem:[%s619 + $0x8c] sm:$0xf]
        %v4191 = vld [vmem:[%s619 + $0x90] sm:$0xf]
        %v4192 = vld [vmem:[%s619 + $0x94] sm:$0xf]
        %v4193 = vld [vmem:[%s619 + $0x98] sm:$0xf]
        %v4194 = vld [vmem:[%s619 + $0x9c] sm:$0xf]
        %v4195 = vld [vmem:[%s619 + $0xa0] sm:$0xf]
        %v4196 = vld [vmem:[%s619 + $0xa4] sm:$0xf]
        %v4197 = vld [vmem:[%s619 + $0xa8] sm:$0xf]
        %v4198 = vld [vmem:[%s619 + $0xac] sm:$0xf]
        %v4199 = vld [vmem:[%s619 + $0xb0] sm:$0xf]
        %v4200 = vld [vmem:[%s619 + $0xb4] sm:$0xf]
        %v4201 = vld [vmem:[%s619 + $0xb8] sm:$0xf]
        %v4202 = vld [vmem:[%s619 + $0xbc] sm:$0xf]
        %v4203 = vld [vmem:[%s619 + $0xc0] sm:$0xf]
        %v4204 = vld [vmem:[%s619 + $0xc4] sm:$0xf]
        %v4205 = vld [vmem:[%s619 + $0xc8] sm:$0xf]
        %v4206 = vld [vmem:[%s619 + $0xcc] sm:$0xf]
        %v4207 = vld [vmem:[%s619 + $0xd0] sm:$0xf]
        %v4208 = vld [vmem:[%s619 + $0xd4] sm:$0xf]
        %v4209 = vld [vmem:[%s619 + $0xd8] sm:$0xf]
        %v4210 = vld [vmem:[%s619 + $0xdc] sm:$0xf]
        %v4211 = vld [vmem:[%s619 + $0xe0] sm:$0xf]
        %v4212 = vld [vmem:[%s619 + $0xe4] sm:$0xf]
        %v4213 = vld [vmem:[%s619 + $0xe8] sm:$0xf]
        %v4214 = vld [vmem:[%s619 + $0xec] sm:$0xf]
        %v4215 = vld [vmem:[%s619 + $0xf0] sm:$0xf]
        %v4216 = vld [vmem:[%s619 + $0xf4] sm:$0xf]
        %v4217 = vld [vmem:[%s619 + $0xf8] sm:$0xf]
        %v4218 = vld [vmem:[%s619 + $0xfc] sm:$0xf]
        %v4219 = vld [vmem:[%s619 + $0x100] sm:$0xf]
        %v4220 = vld [vmem:[%s619 + $0x104] sm:$0xf]
        %v4221 = vld [vmem:[%s619 + $0x108] sm:$0xf]
        %v4222 = vld [vmem:[%s619 + $0x10c] sm:$0xf]
        %v4223 = vld [vmem:[%s619 + $0x110] sm:$0xf]
        %v4224 = vld [vmem:[%s619 + $0x114] sm:$0xf]
        %v4225 = vld [vmem:[%s619 + $0x118] sm:$0xf]
        %v4226 = vld [vmem:[%s619 + $0x11c] sm:$0xf]
        %v4227 = vld [vmem:[%s619 + $0x120] sm:$0xf]
        %v4228 = vld [vmem:[%s619 + $0x124] sm:$0xf]
        %v4229 = vld [vmem:[%s619 + $0x128] sm:$0xf]
        %v4230 = vld [vmem:[%s619 + $0x12c] sm:$0xf]
        %v4231 = vld [vmem:[%s619 + $0x130] sm:$0xf]
        %v4232 = vld [vmem:[%s619 + $0x134] sm:$0xf]
        %v4233 = vld [vmem:[%s619 + $0x138] sm:$0xf]
        %v4234 = vld [vmem:[%s619 + $0x13c] sm:$0xf]
        %v4235 = vld [vmem:[%s619 + $0x140] sm:$0xf]
        %v4236 = vld [vmem:[%s619 + $0x144] sm:$0xf]
        %v4237 = vld [vmem:[%s619 + $0x148] sm:$0xf]
        %v4238 = vld [vmem:[%s619 + $0x14c] sm:$0xf]
        %v4239 = vld [vmem:[%s619 + $0x150] sm:$0xf]
        %v4240 = vld [vmem:[%s619 + $0x154] sm:$0xf]
        %v4241 = vld [vmem:[%s619 + $0x158] sm:$0xf]
        %v4242 = vld [vmem:[%s619 + $0x15c] sm:$0xf]
        %v4243 = vld [vmem:[%s619 + $0x160] sm:$0xf]
        %v4244 = vld [vmem:[%s619 + $0x164] sm:$0xf]
        %v4245 = vld [vmem:[%s619 + $0x168] sm:$0xf]
        %v4246 = vld [vmem:[%s619 + $0x16c] sm:$0xf]
        %v4247 = vld [vmem:[%s619 + $0x170] sm:$0xf]
        %v4248 = vld [vmem:[%s619 + $0x174] sm:$0xf]
        %v4249 = vld [vmem:[%s619 + $0x178] sm:$0xf]
        %v4250 = vld [vmem:[%s619 + $0x17c] sm:$0xf]
        %v4251 = vld [vmem:[%s619 + $0x180] sm:$0xf]
        %v4252 = vld [vmem:[%s619 + $0x184] sm:$0xf]
        %v4253 = vld [vmem:[%s619 + $0x188] sm:$0xf]
        %v4254 = vld [vmem:[%s619 + $0x18c] sm:$0xf]
        %v4255 = vld [vmem:[%s619 + $0x190] sm:$0xf]
        %v4256 = vld [vmem:[%s619 + $0x194] sm:$0xf]
        %v4257 = vld [vmem:[%s619 + $0x198] sm:$0xf]
        %v4258 = vld [vmem:[%s619 + $0x19c] sm:$0xf]
        %v4259 = vld [vmem:[%s619 + $0x1a0] sm:$0xf]
        %v4260 = vld [vmem:[%s619 + $0x1a4] sm:$0xf]
        %v4261 = vld [vmem:[%s619 + $0x1a8] sm:$0xf]
        %v4262 = vld [vmem:[%s619 + $0x1ac] sm:$0xf]
        %v4263 = vld [vmem:[%s619 + $0x1b0] sm:$0xf]
        %v4264 = vld [vmem:[%s619 + $0x1b4] sm:$0xf]
        %v4265 = vld [vmem:[%s619 + $0x1b8] sm:$0xf]
        %v4266 = vld [vmem:[%s619 + $0x1bc] sm:$0xf]
        %v4267 = vld [vmem:[%s619 + $0x1c0] sm:$0xf]
        %v4268 = vld [vmem:[%s619 + $0x1c4] sm:$0xf]
        %v4269 = vld [vmem:[%s619 + $0x1c8] sm:$0xf]
        %v4270 = vld [vmem:[%s619 + $0x1cc] sm:$0xf]
        %v4271 = vld [vmem:[%s619 + $0x1d0] sm:$0xf]
        %v4272 = vld [vmem:[%s619 + $0x1d4] sm:$0xf]
        %v4273 = vld [vmem:[%s619 + $0x1d8] sm:$0xf]
        %v4274 = vld [vmem:[%s619 + $0x1dc] sm:$0xf]
        %v4275 = vld [vmem:[%s619 + $0x1e0] sm:$0xf]
        %v4276 = vld [vmem:[%s619 + $0x1e4] sm:$0xf]
        %v4277 = vld [vmem:[%s619 + $0x1e8] sm:$0xf]
        %v4278 = vld [vmem:[%s619 + $0x1ec] sm:$0xf]
        %v4279 = vld [vmem:[%s619 + $0x1f0] sm:$0xf]
        %v4280 = vld [vmem:[%s619 + $0x1f4] sm:$0xf]
        %v4281 = vld [vmem:[%s619 + $0x1f8] sm:$0xf]
        %v4282 = vld [vmem:[%s619 + $0x1fc] sm:$0xf]
        %v4283 = vld [vmem:[%s622] sm:$0x1]
        %v4285 = vlaneseq
        %v4286 = vshrl.u32 %v4285, 7
        %v4287 = vsub.s32 0, %v4286
        %v4288 = vrot.slane %v4283, %v4287
        %v4418 = vunpack.c.l.b16 %v4155
        %v4419 = vunpack.c.l.b16 %v4156
        %v4420 = vunpack.c.l.b16 %v4157
        %v4421 = vunpack.c.l.b16 %v4158
        %v4422 = vunpack.c.l.b16 %v4159
        %v4423 = vunpack.c.l.b16 %v4160
        %v4424 = vunpack.c.l.b16 %v4161
        %v4425 = vunpack.c.l.b16 %v4162
        %v4426 = vunpack.c.l.b16 %v4163
        %v4427 = vunpack.c.l.b16 %v4164
        %v4428 = vunpack.c.l.b16 %v4165
        %v4429 = vunpack.c.l.b16 %v4166
        %v4430 = vunpack.c.l.b16 %v4167
        %v4431 = vunpack.c.l.b16 %v4168
        %v4432 = vunpack.c.l.b16 %v4169
        %v4433 = vunpack.c.l.b16 %v4170
        %v4434 = vunpack.c.l.b16 %v4171
        %v4435 = vunpack.c.l.b16 %v4172
        %v4436 = vunpack.c.l.b16 %v4173
        %v4437 = vunpack.c.l.b16 %v4174
        %v4438 = vunpack.c.l.b16 %v4175
        %v4439 = vunpack.c.l.b16 %v4176
        %v4440 = vunpack.c.l.b16 %v4177
        %v4441 = vunpack.c.l.b16 %v4178
        %v4442 = vunpack.c.l.b16 %v4179
        %v4443 = vunpack.c.l.b16 %v4180
        %v4444 = vunpack.c.l.b16 %v4181
        %v4445 = vunpack.c.l.b16 %v4182
        %v4446 = vunpack.c.l.b16 %v4183
        %v4447 = vunpack.c.l.b16 %v4184
        %v4448 = vunpack.c.l.b16 %v4185
        %v4449 = vunpack.c.l.b16 %v4186
        %v4450 = vunpack.c.l.b16 %v4187
        %v4451 = vunpack.c.l.b16 %v4188
        %v4452 = vunpack.c.l.b16 %v4189
        %v4453 = vunpack.c.l.b16 %v4190
        %v4454 = vunpack.c.l.b16 %v4191
        %v4455 = vunpack.c.l.b16 %v4192
        %v4456 = vunpack.c.l.b16 %v4193
        %v4457 = vunpack.c.l.b16 %v4194
        %v4458 = vunpack.c.l.b16 %v4195
        %v4459 = vunpack.c.l.b16 %v4196
        %v4460 = vunpack.c.l.b16 %v4197
        %v4461 = vunpack.c.l.b16 %v4198
        %v4462 = vunpack.c.l.b16 %v4199
        %v4463 = vunpack.c.l.b16 %v4200
        %v4464 = vunpack.c.l.b16 %v4201
        %v4465 = vunpack.c.l.b16 %v4202
        %v4466 = vunpack.c.l.b16 %v4203
        %v4467 = vunpack.c.l.b16 %v4204
        %v4468 = vunpack.c.l.b16 %v4205
        %v4469 = vunpack.c.l.b16 %v4206
        %v4470 = vunpack.c.l.b16 %v4207
        %v4471 = vunpack.c.l.b16 %v4208
        %v4472 = vunpack.c.l.b16 %v4209
        %v4473 = vunpack.c.l.b16 %v4210
        %v4474 = vunpack.c.l.b16 %v4211
        %v4475 = vunpack.c.l.b16 %v4212
        %v4476 = vunpack.c.l.b16 %v4213
        %v4477 = vunpack.c.l.b16 %v4214
        %v4478 = vunpack.c.l.b16 %v4215
        %v4479 = vunpack.c.l.b16 %v4216
        %v4480 = vunpack.c.l.b16 %v4217
        %v4481 = vunpack.c.l.b16 %v4218
        %v4482 = vunpack.c.l.b16 %v4219
        %v4483 = vunpack.c.l.b16 %v4220
        %v4484 = vunpack.c.l.b16 %v4221
        %v4485 = vunpack.c.l.b16 %v4222
        %v4486 = vunpack.c.l.b16 %v4223
        %v4487 = vunpack.c.l.b16 %v4224
        %v4488 = vunpack.c.l.b16 %v4225
        %v4489 = vunpack.c.l.b16 %v4226
        %v4490 = vunpack.c.l.b16 %v4227
        %v4491 = vunpack.c.l.b16 %v4228
        %v4492 = vunpack.c.l.b16 %v4229
        %v4493 = vunpack.c.l.b16 %v4230
        %v4494 = vunpack.c.l.b16 %v4231
        %v4495 = vunpack.c.l.b16 %v4232
        %v4496 = vunpack.c.l.b16 %v4233
        %v4497 = vunpack.c.l.b16 %v4234
        %v4498 = vunpack.c.l.b16 %v4235
        %v4499 = vunpack.c.l.b16 %v4236
        %v4500 = vunpack.c.l.b16 %v4237
        %v4501 = vunpack.c.l.b16 %v4238
        %v4502 = vunpack.c.l.b16 %v4239
        %v4503 = vunpack.c.l.b16 %v4240
        %v4504 = vunpack.c.l.b16 %v4241
        %v4505 = vunpack.c.l.b16 %v4242
        %v4506 = vunpack.c.l.b16 %v4243
        %v4507 = vunpack.c.l.b16 %v4244
        %v4508 = vunpack.c.l.b16 %v4245
        %v4509 = vunpack.c.l.b16 %v4246
        %v4510 = vunpack.c.l.b16 %v4247
        %v4511 = vunpack.c.l.b16 %v4248
        %v4512 = vunpack.c.l.b16 %v4249
        %v4513 = vunpack.c.l.b16 %v4250
        %v4514 = vunpack.c.l.b16 %v4251
        %v4515 = vunpack.c.l.b16 %v4252
        %v4516 = vunpack.c.l.b16 %v4253
        %v4517 = vunpack.c.l.b16 %v4254
        %v4518 = vunpack.c.l.b16 %v4255
        %v4519 = vunpack.c.l.b16 %v4256
        %v4520 = vunpack.c.l.b16 %v4257
        %v4521 = vunpack.c.l.b16 %v4258
        %v4522 = vunpack.c.l.b16 %v4259
        %v4523 = vunpack.c.l.b16 %v4260
        %v4524 = vunpack.c.l.b16 %v4261
        %v4525 = vunpack.c.l.b16 %v4262
        %v4526 = vunpack.c.l.b16 %v4263
        %v4527 = vunpack.c.l.b16 %v4264
        %v4528 = vunpack.c.l.b16 %v4265
        %v4529 = vunpack.c.l.b16 %v4266
        %v4530 = vunpack.c.l.b16 %v4267
        %v4531 = vunpack.c.l.b16 %v4268
        %v4532 = vunpack.c.l.b16 %v4269
        %v4533 = vunpack.c.l.b16 %v4270
        %v4534 = vunpack.c.l.b16 %v4271
        %v4535 = vunpack.c.l.b16 %v4272
        %v4536 = vunpack.c.l.b16 %v4273
        %v4537 = vunpack.c.l.b16 %v4274
        %v4538 = vunpack.c.l.b16 %v4275
        %v4539 = vunpack.c.l.b16 %v4276
        %v4540 = vunpack.c.l.b16 %v4277
        %v4541 = vunpack.c.l.b16 %v4278
        %v4542 = vunpack.c.l.b16 %v4279
        %v4543 = vunpack.c.l.b16 %v4280
        %v4544 = vunpack.c.l.b16 %v4281
        %v4545 = vunpack.c.l.b16 %v4282
        %v4546 = vpack.c.b16 %v4419, %v4418
        %v4547 = vpack.c.b16 %v4421, %v4420
        %v4548 = vpack.c.b16 %v4423, %v4422
        %v4549 = vpack.c.b16 %v4425, %v4424
        %v4550 = vpack.c.b16 %v4427, %v4426
        %v4551 = vpack.c.b16 %v4429, %v4428
        %v4552 = vpack.c.b16 %v4431, %v4430
        %v4553 = vpack.c.b16 %v4433, %v4432
        %v4554 = vpack.c.b16 %v4435, %v4434
        %v4555 = vpack.c.b16 %v4437, %v4436
        %v4556 = vpack.c.b16 %v4439, %v4438
        %v4557 = vpack.c.b16 %v4441, %v4440
        %v4558 = vpack.c.b16 %v4443, %v4442
        %v4559 = vpack.c.b16 %v4445, %v4444
        %v4560 = vpack.c.b16 %v4447, %v4446
        %v4561 = vpack.c.b16 %v4449, %v4448
        %v4562 = vpack.c.b16 %v4451, %v4450
        %v4563 = vpack.c.b16 %v4453, %v4452
        %v4564 = vpack.c.b16 %v4455, %v4454
        %v4565 = vpack.c.b16 %v4457, %v4456
        %v4566 = vpack.c.b16 %v4459, %v4458
        %v4567 = vpack.c.b16 %v4461, %v4460
        %v4568 = vpack.c.b16 %v4463, %v4462
        %v4569 = vpack.c.b16 %v4465, %v4464
        %v4570 = vpack.c.b16 %v4467, %v4466
        %v4571 = vpack.c.b16 %v4469, %v4468
        %v4572 = vpack.c.b16 %v4471, %v4470
        %v4573 = vpack.c.b16 %v4473, %v4472
        %v4574 = vpack.c.b16 %v4475, %v4474
        %v4575 = vpack.c.b16 %v4477, %v4476
        %v4576 = vpack.c.b16 %v4479, %v4478
        %v4577 = vpack.c.b16 %v4481, %v4480
        %v4578 = vpack.c.b16 %v4483, %v4482
        %v4579 = vpack.c.b16 %v4485, %v4484
        %v4580 = vpack.c.b16 %v4487, %v4486
        %v4581 = vpack.c.b16 %v4489, %v4488
        %v4582 = vpack.c.b16 %v4491, %v4490
        %v4583 = vpack.c.b16 %v4493, %v4492
        %v4584 = vpack.c.b16 %v4495, %v4494
        %v4585 = vpack.c.b16 %v4497, %v4496
        %v4586 = vpack.c.b16 %v4499, %v4498
        %v4587 = vpack.c.b16 %v4501, %v4500
        %v4588 = vpack.c.b16 %v4503, %v4502
        %v4589 = vpack.c.b16 %v4505, %v4504
        %v4590 = vpack.c.b16 %v4507, %v4506
        %v4591 = vpack.c.b16 %v4509, %v4508
        %v4592 = vpack.c.b16 %v4511, %v4510
        %v4593 = vpack.c.b16 %v4513, %v4512
        %v4594 = vpack.c.b16 %v4515, %v4514
        %v4595 = vpack.c.b16 %v4517, %v4516
        %v4596 = vpack.c.b16 %v4519, %v4518
        %v4597 = vpack.c.b16 %v4521, %v4520
        %v4598 = vpack.c.b16 %v4523, %v4522
        %v4599 = vpack.c.b16 %v4525, %v4524
        %v4600 = vpack.c.b16 %v4527, %v4526
        %v4601 = vpack.c.b16 %v4529, %v4528
        %v4602 = vpack.c.b16 %v4531, %v4530
        %v4603 = vpack.c.b16 %v4533, %v4532
        %v4604 = vpack.c.b16 %v4535, %v4534
        %v4605 = vpack.c.b16 %v4537, %v4536
        %v4606 = vpack.c.b16 %v4539, %v4538
        %v4607 = vpack.c.b16 %v4541, %v4540
        %v4608 = vpack.c.b16 %v4543, %v4542
        %v4609 = vpack.c.b16 %v4545, %v4544
        %4674 = vmatprep.subr.bf16.mxu0 0
        %4675 = vmatpush1.bf16.msra.mxu0 %v4546
        %4676 = vmatprep.subr.bf16.mxu0 0
        %4677 = vmatpush1.bf16.msra.mxu0 %v4547
        %4678 = vmatprep.subr.bf16.mxu0 0
        %4679 = vmatpush1.bf16.msra.mxu0 %v4548
        %4680 = vmatprep.subr.bf16.mxu0 0
        %4681 = vmatpush1.bf16.msra.mxu0 %v4549
        %4682 = vmatprep.subr.bf16.mxu0 0
        %4683 = vmatpush1.bf16.msra.mxu0 %v4550
        %4684 = vmatprep.subr.bf16.mxu0 0
        %4685 = vmatpush1.bf16.msra.mxu0 %v4551
        %4686 = vmatprep.subr.bf16.mxu0 0
        %4687 = vmatpush1.bf16.msra.mxu0 %v4552
        %4688 = vmatprep.subr.bf16.mxu0 0
        %4689 = vmatpush1.bf16.msra.mxu0 %v4553
        %4690 = vmatprep.subr.bf16.mxu0 0
        %4691 = vmatpush1.bf16.msra.mxu0 %v4554
        %4692 = vmatprep.subr.bf16.mxu0 0
        %4693 = vmatpush1.bf16.msra.mxu0 %v4555
        %4694 = vmatprep.subr.bf16.mxu0 0
        %4695 = vmatpush1.bf16.msra.mxu0 %v4556
        %4696 = vmatprep.subr.bf16.mxu0 0
        %4697 = vmatpush1.bf16.msra.mxu0 %v4557
        %4698 = vmatprep.subr.bf16.mxu0 0
        %4699 = vmatpush1.bf16.msra.mxu0 %v4558
        %4700 = vmatprep.subr.bf16.mxu0 0
        %4701 = vmatpush1.bf16.msra.mxu0 %v4559
        %4702 = vmatprep.subr.bf16.mxu0 0
        %4703 = vmatpush1.bf16.msra.mxu0 %v4560
        %4704 = vmatprep.subr.bf16.mxu0 0
        %4705 = vmatpush1.bf16.msra.mxu0 %v4561
        %4706 = vmatprep.mubr.bf16.mxu0 %v4148
        %4707 = vmatmul.mubr.bf16.gmra.mrb[0].mxu0 %v4147
        %v4708 = vpop.f32.mrb[0].mxu0
        %v4709 = vadd.f32 %v4288, %v4708
        %v4710 = vpop.f32.mrb[0].mxu0
        %v4711 = vpop.f32.mrb[0].mxu0
        %v4712 = vpop.f32.mrb[0].mxu0
        %4713 = vdwg.mxu0
        %4714 = vmatprep.subr.bf16.mxu0 0
        %4715 = vmatpush1.bf16.msra.mxu0 %v4562
        %4716 = vmatprep.subr.bf16.mxu0 0
        %4717 = vmatpush1.bf16.msra.mxu0 %v4563
        %4718 = vmatprep.subr.bf16.mxu0 0
        %4719 = vmatpush1.bf16.msra.mxu0 %v4564
        %4720 = vmatprep.subr.bf16.mxu0 0
        %4721 = vmatpush1.bf16.msra.mxu0 %v4565
        %4722 = vmatprep.subr.bf16.mxu0 0
        %4723 = vmatpush1.bf16.msra.mxu0 %v4566
        %4724 = vmatprep.subr.bf16.mxu0 0
        %4725 = vmatpush1.bf16.msra.mxu0 %v4567
        %4726 = vmatprep.subr.bf16.mxu0 0
        %4727 = vmatpush1.bf16.msra.mxu0 %v4568
        %4728 = vmatprep.subr.bf16.mxu0 0
        %4729 = vmatpush1.bf16.msra.mxu0 %v4569
        %4730 = vmatprep.subr.bf16.mxu0 0
        %4731 = vmatpush1.bf16.msra.mxu0 %v4570
        %4732 = vmatprep.subr.bf16.mxu0 0
        %4733 = vmatpush1.bf16.msra.mxu0 %v4571
        %4734 = vmatprep.subr.bf16.mxu0 0
        %4735 = vmatpush1.bf16.msra.mxu0 %v4572
        %4736 = vmatprep.subr.bf16.mxu0 0
        %4737 = vmatpush1.bf16.msra.mxu0 %v4573
        %4738 = vmatprep.subr.bf16.mxu0 0
        %4739 = vmatpush1.bf16.msra.mxu0 %v4574
        %4740 = vmatprep.subr.bf16.mxu0 0
        %4741 = vmatpush1.bf16.msra.mxu0 %v4575
        %4742 = vmatprep.subr.bf16.mxu0 0
        %4743 = vmatpush1.bf16.msra.mxu0 %v4576
        %4744 = vmatprep.subr.bf16.mxu0 0
        %4745 = vmatpush1.bf16.msra.mxu0 %v4577
        %4746 = vmatprep.mubr.bf16.mxu0 %v4150
        %4747 = vmatmul.mubr.bf16.gmra.mrb[0].mxu0 %v4149
        %v4748 = vpop.f32.mrb[0].mxu0
        %v4749 = vadd.f32 %v4709, %v4748
        %v4750 = vpop.f32.mrb[0].mxu0
        %v4751 = vpop.f32.mrb[0].mxu0
        %v4752 = vpop.f32.mrb[0].mxu0
        %4753 = vdwg.mxu0
        %4754 = vmatprep.subr.bf16.mxu0 0
        %4755 = vmatpush1.bf16.msra.mxu0 %v4578
        %4756 = vmatprep.subr.bf16.mxu0 0
        %4757 = vmatpush1.bf16.msra.mxu0 %v4579
        %4758 = vmatprep.subr.bf16.mxu0 0
        %4759 = vmatpush1.bf16.msra.mxu0 %v4580
        %4760 = vmatprep.subr.bf16.mxu0 0
        %4761 = vmatpush1.bf16.msra.mxu0 %v4581
        %4762 = vmatprep.subr.bf16.mxu0 0
        %4763 = vmatpush1.bf16.msra.mxu0 %v4582
        %4764 = vmatprep.subr.bf16.mxu0 0
        %4765 = vmatpush1.bf16.msra.mxu0 %v4583
        %4766 = vmatprep.subr.bf16.mxu0 0
        %4767 = vmatpush1.bf16.msra.mxu0 %v4584
        %4768 = vmatprep.subr.bf16.mxu0 0
        %4769 = vmatpush1.bf16.msra.mxu0 %v4585
        %4770 = vmatprep.subr.bf16.mxu0 0
        %4771 = vmatpush1.bf16.msra.mxu0 %v4586
        %4772 = vmatprep.subr.bf16.mxu0 0
        %4773 = vmatpush1.bf16.msra.mxu0 %v4587
        %4774 = vmatprep.subr.bf16.mxu0 0
        %4775 = vmatpush1.bf16.msra.mxu0 %v4588
        %4776 = vmatprep.subr.bf16.mxu0 0
        %4777 = vmatpush1.bf16.msra.mxu0 %v4589
        %4778 = vmatprep.subr.bf16.mxu0 0
        %4779 = vmatpush1.bf16.msra.mxu0 %v4590
        %4780 = vmatprep.subr.bf16.mxu0 0
        %4781 = vmatpush1.bf16.msra.mxu0 %v4591
        %4782 = vmatprep.subr.bf16.mxu0 0
        %4783 = vmatpush1.bf16.msra.mxu0 %v4592
        %4784 = vmatprep.subr.bf16.mxu0 0
        %4785 = vmatpush1.bf16.msra.mxu0 %v4593
        %4786 = vmatprep.mubr.bf16.mxu0 %v4152
        %4787 = vmatmul.mubr.bf16.gmra.mrb[0].mxu0 %v4151
        %v4788 = vpop.f32.mrb[0].mxu0
        %v4789 = vadd.f32 %v4749, %v4788
        %v4790 = vpop.f32.mrb[0].mxu0
        %v4791 = vpop.f32.mrb[0].mxu0
        %v4792 = vpop.f32.mrb[0].mxu0
        %4793 = vdwg.mxu0
        %4794 = vmatprep.subr.bf16.mxu0 0
        %4795 = vmatpush1.bf16.msra.mxu0 %v4594
        %4796 = vmatprep.subr.bf16.mxu0 0
        %4797 = vmatpush1.bf16.msra.mxu0 %v4595
        %4798 = vmatprep.subr.bf16.mxu0 0
        %4799 = vmatpush1.bf16.msra.mxu0 %v4596
        %4800 = vmatprep.subr.bf16.mxu0 0
        %4801 = vmatpush1.bf16.msra.mxu0 %v4597
        %4802 = vmatprep.subr.bf16.mxu0 0
        %4803 = vmatpush1.bf16.msra.mxu0 %v4598
        %4804 = vmatprep.subr.bf16.mxu0 0
        %4805 = vmatpush1.bf16.msra.mxu0 %v4599
        %4806 = vmatprep.subr.bf16.mxu0 0
        %4807 = vmatpush1.bf16.msra.mxu0 %v4600
        %4808 = vmatprep.subr.bf16.mxu0 0
        %4809 = vmatpush1.bf16.msra.mxu0 %v4601
        %4810 = vmatprep.subr.bf16.mxu0 0
        %4811 = vmatpush1.bf16.msra.mxu0 %v4602
        %4812 = vmatprep.subr.bf16.mxu0 0
        %4813 = vmatpush1.bf16.msra.mxu0 %v4603
        %4814 = vmatprep.subr.bf16.mxu0 0
        %4815 = vmatpush1.bf16.msra.mxu0 %v4604
        %4816 = vmatprep.subr.bf16.mxu0 0
        %4817 = vmatpush1.bf16.msra.mxu0 %v4605
        %4818 = vmatprep.subr.bf16.mxu0 0
        %4819 = vmatpush1.bf16.msra.mxu0 %v4606
        %4820 = vmatprep.subr.bf16.mxu0 0
        %4821 = vmatpush1.bf16.msra.mxu0 %v4607
        %4822 = vmatprep.subr.bf16.mxu0 0
        %4823 = vmatpush1.bf16.msra.mxu0 %v4608
        %4824 = vmatprep.subr.bf16.mxu0 0
        %4825 = vmatpush1.bf16.msra.mxu0 %v4609
        %4826 = vmatprep.mubr.bf16.mxu0 %v4154
        %4827 = vmatmul.mubr.bf16.gmra.mrb[0].mxu0 %v4153
        %v4828 = vpop.f32.mrb[0].mxu0
        %v4829 = vadd.f32 %v4789, %v4828
        %v4830 = vpop.f32.mrb[0].mxu0
        %v4831 = vpop.f32.mrb[0].mxu0
        %v4832 = vpop.f32.mrb[0].mxu0
        %4833 = vdwg.mxu0
        %v4834 = vadd.f32 %v4829, %v3547
        %v4835 = vld [vmem:[%s625] sm:$0x1]
        %v4836 = vld [vmem:[%s628] sm:$0x1]
        %4837 = vadd.xlane.f32.xlu0 %v4834
        %v4838 = vpop.xlane.xlu0 %4837
        %v4839 = vmul.f32 %v4838, %v3524
        %v4840 = vsub.f32 %v4834, %v4839
        %v4841 = vmul.f32 %v4840, %v4840
        %4842 = vadd.xlane.f32.xlu0 %v4841
        %v4843 = vpop.xlane.xlu0 %4842
        %v4844 = vmul.f32 %v4843, %v3524
        %v4845 = vadd.f32 %v4844, 1e-05
        %v4846 = vrsqrt.pop %v4845
        %v4847 = vmul.f32 %v4840, %v4846
        %v4849 = vlaneseq
        %v4850 = vshrl.u32 %v4849, 7
        %v4851 = vsub.s32 0, %v4850
        %v4852 = vrot.slane %v4835, %v4851
        %v4854 = vmul.f32 %v4847, %v4852
        %v4856 = vlaneseq
        %v4857 = vshrl.u32 %v4856, 7
        %v4858 = vsub.s32 0, %v4857
        %v4859 = vrot.slane %v4836, %v4858
        %v4861 = vadd.f32 %v4854, %v4859
        %4862 = vst [vmem:[#allocation2] sm:$0xff] %v4861
        %p4863 = scmp.eq.s32.totalorder %s32, 1
        // Predicated region
        $region77: #{transformer_forward.1} parent=71 // pred_check
          %p4864 = pneg %p4863
        $region78: #{transformer_forward.1} parent=71 // pred_check_branch
          %4866 = sbr.rel (%p4864) target = $region80
        $region79: #{transformer_forward.1} parent=71 // pred_region
          %4867 = vst [vmem:[%s582] sm:$0xff] %v4861
        $region80: #{transformer_forward.1} parent=71 // pred_fallthru
          _
        %s4868 = sand.u32 %s380, 1
        %s4869 = scalar_lea.sflag [#allocation4], %s4868
        %s4870 = sand.u32 %s380, 1
        %s4871 = smul.addr %s4870, 8
        %s4872 = scalar_lea.vmem [#allocation3], %s4871
        // Predicated region
        $region81: #{transformer_forward.1} parent=71 // pred_check
          %p4873 = pneg %p390
        $region82: #{transformer_forward.1} parent=71 // pred_check_branch
          %4875 = sbr.rel (%p4873) target = $region84
        $region83: #{transformer_forward.1} parent=71 // pred_region
          %s4877 = ssub.s32 128, 128
          %4878 = vsyncadd %s4869, %s4877
          %s4879 = smul.addr %s31, 128
          %s4880 = scalar_lea.hbm %s13, %s4879
          %s4882 = sshll.u32 %s4872, 4
          %s4883 = int_to_ptr.vmem [resolvable:$true] %s4882
          %4885 = dma.vmem_to_hbm [thread:$0]  %s4883, 128, %s4880, %s4869
        $region84: #{transformer_forward.1} parent=71 // pred_fallthru
          _
      $region72: #{transformer_forward.1} parent=5 // pred_fallthru
        _
      %p4886 = scmp.le.s32.totalorder 2, %s22
      // Predicated region
      $region85: #{transformer_forward.1} parent=5 // pred_check
        %p4887 = pneg %p4886
      $region86: #{transformer_forward.1} parent=5 // pred_check_branch
        %4889 = sbr.rel (%p4887) target = $region88
      $region87: #{transformer_forward.1} parent=5 // pred_region
        %s4890 = ssub.s32 %s22, 2
        // Predicated region
        $region89: #{transformer_forward.1} parent=87 // pred_check
          %p4891 = pneg %p396
        $region90: #{transformer_forward.1} parent=87 // pred_check_branch
          %4893 = sbr.rel (%p4891) target = $region92
        $region91: #{transformer_forward.1} parent=87 // pred_region
          %s4894 = sand.u32 %s381, 1
          %s4895 = scalar_lea.sflag [#allocation4], %s4894
          %s4896 = sand.u32 %s381, 1
          %s4897 = smul.addr %s4896, 8
          %s4898 = scalar_lea.vmem [#allocation3], %s4897
          %4899 = dma.done %s4895, 128
        $region92: #{transformer_forward.1} parent=87 // pred_fallthru
          _
      $region88: #{transformer_forward.1} parent=5 // pred_fallthru
        _
    $region6: #{transformer_forward.1} parent=1 // loop_footer
      %s26 = sadd.s32 1, %s22
    $region7: #{transformer_forward.1} parent=1 // loop_footer_branch
      %21 = sbr.rel target = $region3
    $region8: #{transformer_forward.1} parent=1 // loop_exit
      _
    %4900 = vsyncpa [#allocation4], 1
    %s4901 = scalar_lea.sflag [#allocation4], 1
    %4902 = vsyncpa %s4901, 1

</llo_original>
